<compile_context>
chip_gen: v6e
topology: v6e:2x2x1
jax: 0.10.0
libtpu: 0.0.40
codegen_flags: <defaults>
</compile_context>

<pallas_src>
import math
import functools

import jax
import jax.numpy as jnp
from jax import lax
from jax.experimental import pallas as pl
from jax.experimental.pallas import tpu as pltpu


_MAX_UNROLLED_HEADS = 16


def mha_kernel(xq_ref, xk_ref, xv_ref,
               wq_ref, bq_ref, wk_ref, bk_ref, wv_ref, bv_ref,
               wo_ref, bo_ref, o_ref,
               *, head_num, hidden_dim):
    """One grid step == Bt batch elements. QKV projections, per-head scaled
    dot-product attention with softmax, and the output projection (folded
    head-by-head into an f32 accumulator) all run inside the kernel."""
    Bt, S, D = xq_ref.shape
    M = Bt * S

    # bf16 MXU operands when the model dtype is bf16; f32 otherwise.
    mxu_dtype = jnp.bfloat16 if xq_ref.dtype == jnp.bfloat16 else jnp.float32

    # Flatten the batch block into the matmul M dimension (cheap leading-dim
    # collapse, no lane-layout change).
    xq = xq_ref[...].reshape(M, D)
    xk = xk_ref[...].reshape(M, D)
    xv = xv_ref[...].reshape(M, D)

    scale = 1.0 / math.sqrt(hidden_dim)

    # Projections over Bt*S rows, f32 accumulation.  Bias add / score scale in
    # f32 (VPU); fold the 1/sqrt(Dh) scale into q once.
    q = (jnp.dot(xq, wq_ref[...], preferred_element_type=jnp.float32)
         + bq_ref[...]) * scale
    k = jnp.dot(xk, wk_ref[...], preferred_element_type=jnp.float32) + bk_ref[...]
    v = jnp.dot(xv, wv_ref[...], preferred_element_type=jnp.float32) + bv_ref[...]

    # Cast once to the MXU operand dtype for the attention matmuls.
    q3 = q.reshape(Bt, S, D).astype(mxu_dtype)
    k3 = k.reshape(Bt, S, D).astype(mxu_dtype)
    v3 = v.reshape(Bt, S, D).astype(mxu_dtype)

    def attend_one_head(qh, kh, vh, woh):
        # scores: contract last dims, batch over Bt (== einsum 'bqd,bkd->bqk'),
        # so no explicit K transpose is materialized.
        s = lax.dot_general(qh, kh, (((2,), (2,)), ((0,), (0,))),
                            preferred_element_type=jnp.float32)      # [Bt,S,S]
        m = jnp.max(s, axis=-1, keepdims=True)
        e = jnp.exp(s - m)
        l = jnp.sum(e, axis=-1, keepdims=True)                        # [Bt,S,1]
        # PV with unnormalized probabilities; normalize afterwards with an EUP
        # approximate reciprocal (Dh-wide multiply per row instead of S-wide).
        ctx = lax.dot_general(e.astype(mxu_dtype), vh,
                              (((2,), (1,)), ((0,), (0,))),
                              preferred_element_type=jnp.float32)     # [Bt,S,Dh]
        ctx = ctx * pl.reciprocal(l, approx=True)
        # Fold this head directly into the output projection: [M,Dh]@[Dh,D].
        return jnp.dot(ctx.reshape(M, hidden_dim).astype(mxu_dtype), woh,
                       preferred_element_type=jnp.float32)

    acc = jnp.zeros((M, D), jnp.float32)

    if head_num <= _MAX_UNROLLED_HEADS:
        # Small static head count: unroll (keeps LLO scheduler visibility).
        for h in range(head_num):
            lo = h * hidden_dim
            hi = lo + hidden_dim
            acc = acc + attend_one_head(q3[:, :, lo:hi], k3[:, :, lo:hi],
                                        v3[:, :, lo:hi],
                                        wo_ref[lo:hi, :].astype(mxu_dtype))
    else:
        # Large head count: fori_loop bounds vreg/VMEM live ranges.
        # TODO(synk): dynamic lane-dim slicing may relayout when hidden_dim is
        #             not a multiple of 128; fine for this large-H path.
        def head_body(h, acc):
            lo = pl.multiple_of(h * hidden_dim, hidden_dim)
            qh = lax.dynamic_slice_in_dim(q3, lo, hidden_dim, axis=2)
            kh = lax.dynamic_slice_in_dim(k3, lo, hidden_dim, axis=2)
            vh = lax.dynamic_slice_in_dim(v3, lo, hidden_dim, axis=2)
            woh = wo_ref[pl.ds(lo, hidden_dim), :].astype(mxu_dtype)
            return acc + attend_one_head(qh, kh, vh, woh)
        acc = lax.fori_loop(0, head_num, head_body, acc)

    out = acc + bo_ref[...]
    o_ref[...] = out.reshape(Bt, S, D).astype(o_ref.dtype)


def _vmem_footprint(bt, S, D, hidden_dim, in_itemsize, w_itemsize):
    """Rough per-grid-step VMEM footprint (bytes) for batch block bt."""
    m = bt * S
    io_blocks = 2 * 4 * m * D * in_itemsize          # 3 in + 1 out, double-buffered
    qkv_f32 = 3 * m * D * 4                          # f32 q/k/v intermediates
    acc_f32 = m * D * 4                              # output-projection accumulator
    score_exp = 2 * bt * S * S * 4                   # score + exp tile (one head live)
    ctx_f32 = m * hidden_dim * 4
    weights = 4 * (D * D + D) * w_itemsize           # single-buffered weights/biases
    return io_blocks + qkv_f32 + acc_f32 + score_exp + ctx_f32 + weights


def _pick_batch_block(B, S, D, hidden_dim, in_itemsize, w_itemsize, vmem_budget):
    """Pick how many batch elements to process per grid step: target ~512 MXU
    rows per step, shrink until the real footprint (incl. f32 intermediates
    and O(S^2) score tiles) fits the generation's VMEM budget, and keep at
    least 2 grid steps so v7x megacore can split the 'parallel' axis."""
    target_rows = 512
    bt = max(1, min(B, max(1, target_rows // max(S, 1))))
    while bt > 1 and _vmem_footprint(bt, S, D, hidden_dim,
                                     in_itemsize, w_itemsize) > vmem_budget:
        bt //= 2
    while B % bt != 0:
        bt -= 1
    if B >= 2 and B // bt < 2:          # guarantee >= 2 grid steps (megacore)
        bt = max(1, B // 2)
        while B % bt != 0:
            bt -= 1
    return max(bt, 1)


def _build_mha_call(B, S, D, head_num, hidden_dim, Bt, out_dtype, vmem_limit,
                    single_buffer_weights):
    kernel = functools.partial(mha_kernel, head_num=head_num,
                               hidden_dim=hidden_dim)

    seq_spec = pl.BlockSpec((Bt, S, D), lambda b: (b, 0, 0))
    if single_buffer_weights:
        # Grid-invariant blocks: single buffer (halves weight VMEM residency).
        w_spec = pl.BlockSpec((D, D), lambda b: (0, 0),
                              pipeline_mode=pl.Buffered(1))
        b_spec = pl.BlockSpec((1, D), lambda b: (0, 0),
                              pipeline_mode=pl.Buffered(1))
    else:
        w_spec = pl.BlockSpec((D, D), lambda b: (0, 0))
        b_spec = pl.BlockSpec((1, D), lambda b: (0, 0))

    return pl.pallas_call(
        kernel,
        out_shape=jax.ShapeDtypeStruct((B, S, D), out_dtype),
        grid_spec=pltpu.PrefetchScalarGridSpec(
            num_scalar_prefetch=0,
            grid=(B // Bt,),
            in_specs=[seq_spec, seq_spec, seq_spec,
                      w_spec, b_spec, w_spec, b_spec, w_spec, b_spec,
                      w_spec, b_spec],
            out_specs=seq_spec,
        ),
        compiler_params=pltpu.CompilerParams(
            dimension_semantics=("parallel",),
            vmem_limit_bytes=int(vmem_limit)),
    )


def multi_head_attention(query_input, key_input, value_input, params, weights):
    """params: dict with 'head_num', 'input_dim'. weights: dict of JAX arrays
    (wq, bq, wk, bk, wv, bv, wo, bo) with w* already [in_dim, out_dim]."""
    B, S, D = query_input.shape
    head_num = params['head_num']
    assert D % head_num == 0, "input_dim must be divisible by head_num"
    hidden_dim = D // head_num

    try:
        vmem_cap = int(pltpu.get_tpu_info().vmem_capacity_bytes)
    except Exception:
        vmem_cap = 64 << 20    # conservative fallback: v7x per-TensorCore VMEM

    in_itemsize = query_input.dtype.itemsize
    w_itemsize = weights['wq'].dtype.itemsize
    Bt = _pick_batch_block(B, S, D, hidden_dim, in_itemsize, w_itemsize,
                           int(vmem_cap * 0.7))
    footprint = _vmem_footprint(Bt, S, D, hidden_dim, in_itemsize, w_itemsize)
    vmem_limit = min(int(vmem_cap * 0.9), max(32 << 20, 2 * footprint))

    args = (query_input, key_input, value_input,
            weights['wq'], weights['bq'],
            weights['wk'], weights['bk'],
            weights['wv'], weights['bv'],
            weights['wo'], weights['bo'])

    try:
        out = _build_mha_call(B, S, D, head_num, hidden_dim, Bt,
                              query_input.dtype, vmem_limit,
                              single_buffer_weights=True)(*args)
        return jax.block_until_ready(out)
    except Exception:
        # TODO(synk): pipeline_mode=pl.Buffered(1) unsupported on this
        # jax/libtpu build; fall back to default double-buffered weights.
        return _build_mha_call(B, S, D, head_num, hidden_dim, Bt,
                               query_input.dtype, vmem_limit,
                               single_buffer_weights=False)(*args)


def mha_reference(q_in, k_in, v_in, params, weights):
    """Pure-JAX reference mirroring the PyTorch forward exactly."""
    B, S, D = q_in.shape
    H = params['head_num']
    Dh = D // H

    def lin(x, w, b):
        return x @ w + b[0]

    q = lin(q_in, weights['wq'], weights['bq']).reshape(B, S, H, Dh).transpose(0, 2, 1, 3)
    k = lin(k_in, weights['wk'], weights['bk']).reshape(B, S, H, Dh).transpose(0, 2, 1, 3)
    v = lin(v_in, weights['wv'], weights['bv']).reshape(B, S, H, Dh).transpose(0, 2, 1, 3)
    scores = jnp.einsum('bhqd,bhkd->bhqk', q, k) / math.sqrt(Dh)
    attn = jax.nn.softmax(scores, axis=-1)
    ctx = jnp.einsum('bhqk,bhkd->bhqd', attn, v)
    ctx = ctx.transpose(0, 2, 1, 3).reshape(B, S, D)
    return lin(ctx, weights['wo'], weights['bo'])


if __name__ == "__main__":
    # Small shapes consistent with the module: batch=2, seq=8, input_dim=32, head_num=4.
    B, S, D, H = 2, 8, 32, 4
    params = {'head_num': H, 'input_dim': D, 'dropout': 0}

    key = jax.random.PRNGKey(0)
    ks = jax.random.split(key, 11)
    scale = 1.0 / math.sqrt(D)
    weights = {
        'wq': jax.random.uniform(ks[0], (D, D), jnp.float32, -scale, scale),
        'bq': jax.random.uniform(ks[1], (1, D), jnp.float32, -scale, scale),
        'wk': jax.random.uniform(ks[2], (D, D), jnp.float32, -scale, scale),
        'bk': jax.random.uniform(ks[3], (1, D), jnp.float32, -scale, scale),
        'wv': jax.random.uniform(ks[4], (D, D), jnp.float32, -scale, scale),
        'bv': jax.random.uniform(ks[5], (1, D), jnp.float32, -scale, scale),
        'wo': jax.random.uniform(ks[6], (D, D), jnp.float32, -scale, scale),
        'bo': jax.random.uniform(ks[7], (1, D), jnp.float32, -scale, scale),
    }

    q_in = jax.random.normal(ks[8], (B, S, D), jnp.float32)
    k_in = jax.random.normal(ks[9], (B, S, D), jnp.float32)
    v_in = jax.random.normal(ks[10], (B, S, D), jnp.float32)

    out = multi_head_attention(q_in, k_in, v_in, params, weights)
    out = jax.block_until_ready(out)

    ref = mha_reference(q_in, k_in, v_in, params, weights)
    assert out.shape == (B, S, D)
    # Tolerance accounts for approx reciprocal (EUP) and folding Wo into the
    # per-head accumulation (different summation order vs the reference).
    assert jnp.allclose(out, ref, atol=1e-3, rtol=1e-3), "mismatch vs reference"

    print("KERNEL_OK")
</pallas_src>

<mosaic_0001>
module attributes {stable_mosaic.version = 11 : i64} {
  func.func @mha_kernel(%arg0: i32, %arg1: memref<1x8x32xf32, #tpu.memory_space<vmem>>, %arg2: memref<1x8x32xf32, #tpu.memory_space<vmem>>, %arg3: memref<1x8x32xf32, #tpu.memory_space<vmem>>, %arg4: memref<32x32xf32, #tpu.memory_space<vmem>>, %arg5: memref<1x32xf32, #tpu.memory_space<vmem>>, %arg6: memref<32x32xf32, #tpu.memory_space<vmem>>, %arg7: memref<1x32xf32, #tpu.memory_space<vmem>>, %arg8: memref<32x32xf32, #tpu.memory_space<vmem>>, %arg9: memref<1x32xf32, #tpu.memory_space<vmem>>, %arg10: memref<32x32xf32, #tpu.memory_space<vmem>>, %arg11: memref<1x32xf32, #tpu.memory_space<vmem>>, %arg12: memref<1x8x32xf32, #tpu.memory_space<vmem>>) attributes {dimension_semantics = [#tpu.dimension_semantics<parallel>], iteration_bounds = array<i64: 2>, scalar_prefetch = 0 : i64, scratch_operands = 0 : i64, tpu.core_type = #tpu.core_type<tc>, window_params = [{transform_indices = @transform_0, window_bounds = array<i64: 1, 8, 32>}, {transform_indices = @transform_1, window_bounds = array<i64: 1, 8, 32>}, {transform_indices = @transform_2, window_bounds = array<i64: 1, 8, 32>}, {pipeline_mode = #tpu.pipeline_mode<synchronous>, transform_indices = @transform_3, window_bounds = array<i64: 32, 32>}, {pipeline_mode = #tpu.pipeline_mode<synchronous>, transform_indices = @transform_4, window_bounds = array<i64: 1, 32>}, {pipeline_mode = #tpu.pipeline_mode<synchronous>, transform_indices = @transform_5, window_bounds = array<i64: 32, 32>}, {pipeline_mode = #tpu.pipeline_mode<synchronous>, transform_indices = @transform_6, window_bounds = array<i64: 1, 32>}, {pipeline_mode = #tpu.pipeline_mode<synchronous>, transform_indices = @transform_7, window_bounds = array<i64: 32, 32>}, {pipeline_mode = #tpu.pipeline_mode<synchronous>, transform_indices = @transform_8, window_bounds = array<i64: 1, 32>}, {pipeline_mode = #tpu.pipeline_mode<synchronous>, transform_indices = @transform_9, window_bounds = array<i64: 32, 32>}, {pipeline_mode = #tpu.pipeline_mode<synchronous>, transform_indices = @transform_10, window_bounds = array<i64: 1, 32>}, {transform_indices = @transform_11, window_bounds = array<i64: 1, 8, 32>}]} {
    %c0 = arith.constant 0 : index
    %c0_0 = arith.constant 0 : index
    %c0_1 = arith.constant 0 : index
    %0 = vector.load %arg1[%c0, %c0_0, %c0_1] : memref<1x8x32xf32, #tpu.memory_space<vmem>>, vector<1x8x32xf32>
    %1 = vector.shape_cast %0 : vector<1x8x32xf32> to vector<8x32xf32>
    %c0_2 = arith.constant 0 : index
    %c0_3 = arith.constant 0 : index
    %c0_4 = arith.constant 0 : index
    %2 = vector.load %arg2[%c0_2, %c0_3, %c0_4] : memref<1x8x32xf32, #tpu.memory_space<vmem>>, vector<1x8x32xf32>
    %3 = vector.shape_cast %2 : vector<1x8x32xf32> to vector<8x32xf32>
    %c0_5 = arith.constant 0 : index
    %c0_6 = arith.constant 0 : index
    %c0_7 = arith.constant 0 : index
    %4 = vector.load %arg3[%c0_5, %c0_6, %c0_7] : memref<1x8x32xf32, #tpu.memory_space<vmem>>, vector<1x8x32xf32>
    %5 = vector.shape_cast %4 : vector<1x8x32xf32> to vector<8x32xf32>
    %c0_8 = arith.constant 0 : index
    %c0_9 = arith.constant 0 : index
    %6 = vector.load %arg4[%c0_8, %c0_9] : memref<32x32xf32, #tpu.memory_space<vmem>>, vector<32x32xf32>
    %cst = arith.constant dense<0.000000e+00> : vector<8x32xf32>
    %7 = tpu.matmul %1, %6, %cst {dimension_numbers = #tpu.dot_dimension_numbers<[1], [0], [0], [1], [0, 0, 1, 1], [], []>} : vector<8x32xf32>, vector<32x32xf32>, vector<8x32xf32> -> vector<8x32xf32>
    %c0_10 = arith.constant 0 : index
    %c0_11 = arith.constant 0 : index
    %8 = vector.load %arg5[%c0_10, %c0_11] : memref<1x32xf32, #tpu.memory_space<vmem>>, vector<1x32xf32>
    %9 = vector.broadcast %8 : vector<1x32xf32> to vector<8x32xf32>
    %10 = arith.addf %7, %9 : vector<8x32xf32>
    %cst_12 = arith.constant 0.353553385 : f32
    %11 = vector.broadcast %cst_12 : f32 to vector<8x32xf32>
    %12 = arith.mulf %10, %11 : vector<8x32xf32>
    %c0_13 = arith.constant 0 : index
    %c0_14 = arith.constant 0 : index
    %13 = vector.load %arg6[%c0_13, %c0_14] : memref<32x32xf32, #tpu.memory_space<vmem>>, vector<32x32xf32>
    %cst_15 = arith.constant dense<0.000000e+00> : vector<8x32xf32>
    %14 = tpu.matmul %3, %13, %cst_15 {dimension_numbers = #tpu.dot_dimension_numbers<[1], [0], [0], [1], [0, 0, 1, 1], [], []>} : vector<8x32xf32>, vector<32x32xf32>, vector<8x32xf32> -> vector<8x32xf32>
    %c0_16 = arith.constant 0 : index
    %c0_17 = arith.constant 0 : index
    %15 = vector.load %arg7[%c0_16, %c0_17] : memref<1x32xf32, #tpu.memory_space<vmem>>, vector<1x32xf32>
    %16 = vector.broadcast %15 : vector<1x32xf32> to vector<8x32xf32>
    %17 = arith.addf %14, %16 : vector<8x32xf32>
    %c0_18 = arith.constant 0 : index
    %c0_19 = arith.constant 0 : index
    %18 = vector.load %arg8[%c0_18, %c0_19] : memref<32x32xf32, #tpu.memory_space<vmem>>, vector<32x32xf32>
    %cst_20 = arith.constant dense<0.000000e+00> : vector<8x32xf32>
    %19 = tpu.matmul %5, %18, %cst_20 {dimension_numbers = #tpu.dot_dimension_numbers<[1], [0], [0], [1], [0, 0, 1, 1], [], []>} : vector<8x32xf32>, vector<32x32xf32>, vector<8x32xf32> -> vector<8x32xf32>
    %c0_21 = arith.constant 0 : index
    %c0_22 = arith.constant 0 : index
    %20 = vector.load %arg9[%c0_21, %c0_22] : memref<1x32xf32, #tpu.memory_space<vmem>>, vector<1x32xf32>
    %21 = vector.broadcast %20 : vector<1x32xf32> to vector<8x32xf32>
    %22 = arith.addf %19, %21 : vector<8x32xf32>
    %23 = vector.shape_cast %12 : vector<8x32xf32> to vector<1x8x32xf32>
    %24 = vector.shape_cast %17 : vector<8x32xf32> to vector<1x8x32xf32>
    %25 = vector.shape_cast %22 : vector<8x32xf32> to vector<1x8x32xf32>
    %cst_23 = arith.constant 0.000000e+00 : f32
    %26 = vector.broadcast %cst_23 : f32 to vector<8x32xf32>
    %27 = vector.extract_strided_slice %23 {offsets = [0, 0, 0], sizes = [1, 8, 8], strides = [1, 1, 1]} : vector<1x8x32xf32> to vector<1x8x8xf32>
    %28 = vector.extract_strided_slice %24 {offsets = [0, 0, 0], sizes = [1, 8, 8], strides = [1, 1, 1]} : vector<1x8x32xf32> to vector<1x8x8xf32>
    %29 = vector.extract_strided_slice %25 {offsets = [0, 0, 0], sizes = [1, 8, 8], strides = [1, 1, 1]} : vector<1x8x32xf32> to vector<1x8x8xf32>
    %c0_24 = arith.constant 0 : index
    %c0_25 = arith.constant 0 : index
    %30 = vector.load %arg10[%c0_24, %c0_25] : memref<32x32xf32, #tpu.memory_space<vmem>>, vector<8x32xf32>
    %cst_26 = arith.constant dense<0.000000e+00> : vector<1x8x8xf32>
    %31 = tpu.matmul %27, %28, %cst_26 {dimension_numbers = #tpu.dot_dimension_numbers<[2], [2], [1], [1], [0, 0, 0, 1, 1, 1], [0], [0]>} : vector<1x8x8xf32>, vector<1x8x8xf32>, vector<1x8x8xf32> -> vector<1x8x8xf32>
    %cst_27 = arith.constant dense<0xFF800000> : vector<1x8xf32>
    %32 = vector.multi_reduction <maximumf>, %31, %cst_27 [2] : vector<1x8x8xf32> to vector<1x8xf32>
    %33 = vector.shape_cast %32 : vector<1x8xf32> to vector<1x8x1xf32>
    %34 = vector.broadcast %33 : vector<1x8x1xf32> to vector<1x8x8xf32>
    %35 = arith.subf %31, %34 : vector<1x8x8xf32>
    %36 = math.exp %35 : vector<1x8x8xf32>
    %cst_28 = arith.constant dense<0.000000e+00> : vector<1x8xf32>
    %37 = vector.multi_reduction <add>, %36, %cst_28 [2] : vector<1x8x8xf32> to vector<1x8xf32>
    %38 = vector.shape_cast %37 : vector<1x8xf32> to vector<1x8x1xf32>
    %cst_29 = arith.constant dense<0.000000e+00> : vector<1x8x8xf32>
    %39 = tpu.matmul %36, %29, %cst_29 {dimension_numbers = #tpu.dot_dimension_numbers<[2], [1], [1], [2], [0, 0, 0, 1, 1, 2], [0], [0]>} : vector<1x8x8xf32>, vector<1x8x8xf32>, vector<1x8x8xf32> -> vector<1x8x8xf32>
    %40 = tpu.reciprocal %38 {approx = true} : vector<1x8x1xf32> -> vector<1x8x1xf32>
    %41 = vector.broadcast %40 : vector<1x8x1xf32> to vector<1x8x8xf32>
    %42 = arith.mulf %39, %41 : vector<1x8x8xf32>
    %43 = vector.shape_cast %42 : vector<1x8x8xf32> to vector<8x8xf32>
    %cst_30 = arith.constant dense<0.000000e+00> : vector<8x32xf32>
    %44 = tpu.matmul %43, %30, %cst_30 {dimension_numbers = #tpu.dot_dimension_numbers<[1], [0], [0], [1], [0, 0, 1, 1], [], []>} : vector<8x8xf32>, vector<8x32xf32>, vector<8x32xf32> -> vector<8x32xf32>
    %45 = arith.addf %26, %44 : vector<8x32xf32>
    %46 = vector.extract_strided_slice %23 {offsets = [0, 0, 8], sizes = [1, 8, 8], strides = [1, 1, 1]} : vector<1x8x32xf32> to vector<1x8x8xf32>
    %47 = vector.extract_strided_slice %24 {offsets = [0, 0, 8], sizes = [1, 8, 8], strides = [1, 1, 1]} : vector<1x8x32xf32> to vector<1x8x8xf32>
    %48 = vector.extract_strided_slice %25 {offsets = [0, 0, 8], sizes = [1, 8, 8], strides = [1, 1, 1]} : vector<1x8x32xf32> to vector<1x8x8xf32>
    %c8 = arith.constant 8 : index
    %c0_31 = arith.constant 0 : index
    %49 = vector.load %arg10[%c8, %c0_31] : memref<32x32xf32, #tpu.memory_space<vmem>>, vector<8x32xf32>
    %cst_32 = arith.constant dense<0.000000e+00> : vector<1x8x8xf32>
    %50 = tpu.matmul %46, %47, %cst_32 {dimension_numbers = #tpu.dot_dimension_numbers<[2], [2], [1], [1], [0, 0, 0, 1, 1, 1], [0], [0]>} : vector<1x8x8xf32>, vector<1x8x8xf32>, vector<1x8x8xf32> -> vector<1x8x8xf32>
    %cst_33 = arith.constant dense<0xFF800000> : vector<1x8xf32>
    %51 = vector.multi_reduction <maximumf>, %50, %cst_33 [2] : vector<1x8x8xf32> to vector<1x8xf32>
    %52 = vector.shape_cast %51 : vector<1x8xf32> to vector<1x8x1xf32>
    %53 = vector.broadcast %52 : vector<1x8x1xf32> to vector<1x8x8xf32>
    %54 = arith.subf %50, %53 : vector<1x8x8xf32>
    %55 = math.exp %54 : vector<1x8x8xf32>
    %cst_34 = arith.constant dense<0.000000e+00> : vector<1x8xf32>
    %56 = vector.multi_reduction <add>, %55, %cst_34 [2] : vector<1x8x8xf32> to vector<1x8xf32>
    %57 = vector.shape_cast %56 : vector<1x8xf32> to vector<1x8x1xf32>
    %cst_35 = arith.constant dense<0.000000e+00> : vector<1x8x8xf32>
    %58 = tpu.matmul %55, %48, %cst_35 {dimension_numbers = #tpu.dot_dimension_numbers<[2], [1], [1], [2], [0, 0, 0, 1, 1, 2], [0], [0]>} : vector<1x8x8xf32>, vector<1x8x8xf32>, vector<1x8x8xf32> -> vector<1x8x8xf32>
    %59 = tpu.reciprocal %57 {approx = true} : vector<1x8x1xf32> -> vector<1x8x1xf32>
    %60 = vector.broadcast %59 : vector<1x8x1xf32> to vector<1x8x8xf32>
    %61 = arith.mulf %58, %60 : vector<1x8x8xf32>
    %62 = vector.shape_cast %61 : vector<1x8x8xf32> to vector<8x8xf32>
    %cst_36 = arith.constant dense<0.000000e+00> : vector<8x32xf32>
    %63 = tpu.matmul %62, %49, %cst_36 {dimension_numbers = #tpu.dot_dimension_numbers<[1], [0], [0], [1], [0, 0, 1, 1], [], []>} : vector<8x8xf32>, vector<8x32xf32>, vector<8x32xf32> -> vector<8x32xf32>
    %64 = arith.addf %45, %63 : vector<8x32xf32>
    %65 = vector.extract_strided_slice %23 {offsets = [0, 0, 16], sizes = [1, 8, 8], strides = [1, 1, 1]} : vector<1x8x32xf32> to vector<1x8x8xf32>
    %66 = vector.extract_strided_slice %24 {offsets = [0, 0, 16], sizes = [1, 8, 8], strides = [1, 1, 1]} : vector<1x8x32xf32> to vector<1x8x8xf32>
    %67 = vector.extract_strided_slice %25 {offsets = [0, 0, 16], sizes = [1, 8, 8], strides = [1, 1, 1]} : vector<1x8x32xf32> to vector<1x8x8xf32>
    %c16 = arith.constant 16 : index
    %c0_37 = arith.constant 0 : index
    %68 = vector.load %arg10[%c16, %c0_37] : memref<32x32xf32, #tpu.memory_space<vmem>>, vector<8x32xf32>
    %cst_38 = arith.constant dense<0.000000e+00> : vector<1x8x8xf32>
    %69 = tpu.matmul %65, %66, %cst_38 {dimension_numbers = #tpu.dot_dimension_numbers<[2], [2], [1], [1], [0, 0, 0, 1, 1, 1], [0], [0]>} : vector<1x8x8xf32>, vector<1x8x8xf32>, vector<1x8x8xf32> -> vector<1x8x8xf32>
    %cst_39 = arith.constant dense<0xFF800000> : vector<1x8xf32>
    %70 = vector.multi_reduction <maximumf>, %69, %cst_39 [2] : vector<1x8x8xf32> to vector<1x8xf32>
    %71 = vector.shape_cast %70 : vector<1x8xf32> to vector<1x8x1xf32>
    %72 = vector.broadcast %71 : vector<1x8x1xf32> to vector<1x8x8xf32>
    %73 = arith.subf %69, %72 : vector<1x8x8xf32>
    %74 = math.exp %73 : vector<1x8x8xf32>
    %cst_40 = arith.constant dense<0.000000e+00> : vector<1x8xf32>
    %75 = vector.multi_reduction <add>, %74, %cst_40 [2] : vector<1x8x8xf32> to vector<1x8xf32>
    %76 = vector.shape_cast %75 : vector<1x8xf32> to vector<1x8x1xf32>
    %cst_41 = arith.constant dense<0.000000e+00> : vector<1x8x8xf32>
    %77 = tpu.matmul %74, %67, %cst_41 {dimension_numbers = #tpu.dot_dimension_numbers<[2], [1], [1], [2], [0, 0, 0, 1, 1, 2], [0], [0]>} : vector<1x8x8xf32>, vector<1x8x8xf32>, vector<1x8x8xf32> -> vector<1x8x8xf32>
    %78 = tpu.reciprocal %76 {approx = true} : vector<1x8x1xf32> -> vector<1x8x1xf32>
    %79 = vector.broadcast %78 : vector<1x8x1xf32> to vector<1x8x8xf32>
    %80 = arith.mulf %77, %79 : vector<1x8x8xf32>
    %81 = vector.shape_cast %80 : vector<1x8x8xf32> to vector<8x8xf32>
    %cst_42 = arith.constant dense<0.000000e+00> : vector<8x32xf32>
    %82 = tpu.matmul %81, %68, %cst_42 {dimension_numbers = #tpu.dot_dimension_numbers<[1], [0], [0], [1], [0, 0, 1, 1], [], []>} : vector<8x8xf32>, vector<8x32xf32>, vector<8x32xf32> -> vector<8x32xf32>
    %83 = arith.addf %64, %82 : vector<8x32xf32>
    %84 = vector.extract_strided_slice %23 {offsets = [0, 0, 24], sizes = [1, 8, 8], strides = [1, 1, 1]} : vector<1x8x32xf32> to vector<1x8x8xf32>
    %85 = vector.extract_strided_slice %24 {offsets = [0, 0, 24], sizes = [1, 8, 8], strides = [1, 1, 1]} : vector<1x8x32xf32> to vector<1x8x8xf32>
    %86 = vector.extract_strided_slice %25 {offsets = [0, 0, 24], sizes = [1, 8, 8], strides = [1, 1, 1]} : vector<1x8x32xf32> to vector<1x8x8xf32>
    %c24 = arith.constant 24 : index
    %c0_43 = arith.constant 0 : index
    %87 = vector.load %arg10[%c24, %c0_43] : memref<32x32xf32, #tpu.memory_space<vmem>>, vector<8x32xf32>
    %cst_44 = arith.constant dense<0.000000e+00> : vector<1x8x8xf32>
    %88 = tpu.matmul %84, %85, %cst_44 {dimension_numbers = #tpu.dot_dimension_numbers<[2], [2], [1], [1], [0, 0, 0, 1, 1, 1], [0], [0]>} : vector<1x8x8xf32>, vector<1x8x8xf32>, vector<1x8x8xf32> -> vector<1x8x8xf32>
    %cst_45 = arith.constant dense<0xFF800000> : vector<1x8xf32>
    %89 = vector.multi_reduction <maximumf>, %88, %cst_45 [2] : vector<1x8x8xf32> to vector<1x8xf32>
    %90 = vector.shape_cast %89 : vector<1x8xf32> to vector<1x8x1xf32>
    %91 = vector.broadcast %90 : vector<1x8x1xf32> to vector<1x8x8xf32>
    %92 = arith.subf %88, %91 : vector<1x8x8xf32>
    %93 = math.exp %92 : vector<1x8x8xf32>
    %cst_46 = arith.constant dense<0.000000e+00> : vector<1x8xf32>
    %94 = vector.multi_reduction <add>, %93, %cst_46 [2] : vector<1x8x8xf32> to vector<1x8xf32>
    %95 = vector.shape_cast %94 : vector<1x8xf32> to vector<1x8x1xf32>
    %cst_47 = arith.constant dense<0.000000e+00> : vector<1x8x8xf32>
    %96 = tpu.matmul %93, %86, %cst_47 {dimension_numbers = #tpu.dot_dimension_numbers<[2], [1], [1], [2], [0, 0, 0, 1, 1, 2], [0], [0]>} : vector<1x8x8xf32>, vector<1x8x8xf32>, vector<1x8x8xf32> -> vector<1x8x8xf32>
    %97 = tpu.reciprocal %95 {approx = true} : vector<1x8x1xf32> -> vector<1x8x1xf32>
    %98 = vector.broadcast %97 : vector<1x8x1xf32> to vector<1x8x8xf32>
    %99 = arith.mulf %96, %98 : vector<1x8x8xf32>
    %100 = vector.shape_cast %99 : vector<1x8x8xf32> to vector<8x8xf32>
    %cst_48 = arith.constant dense<0.000000e+00> : vector<8x32xf32>
    %101 = tpu.matmul %100, %87, %cst_48 {dimension_numbers = #tpu.dot_dimension_numbers<[1], [0], [0], [1], [0, 0, 1, 1], [], []>} : vector<8x8xf32>, vector<8x32xf32>, vector<8x32xf32> -> vector<8x32xf32>
    %102 = arith.addf %83, %101 : vector<8x32xf32>
    %c0_49 = arith.constant 0 : index
    %c0_50 = arith.constant 0 : index
    %103 = vector.load %arg11[%c0_49, %c0_50] : memref<1x32xf32, #tpu.memory_space<vmem>>, vector<1x32xf32>
    %104 = vector.broadcast %103 : vector<1x32xf32> to vector<8x32xf32>
    %105 = arith.addf %102, %104 : vector<8x32xf32>
    %106 = vector.shape_cast %105 : vector<8x32xf32> to vector<1x8x32xf32>
    %c0_51 = arith.constant 0 : index
    %c0_52 = arith.constant 0 : index
    %c0_53 = arith.constant 0 : index
    %107 = vector.load %arg12[%c0_51, %c0_52, %c0_53] : memref<1x8x32xf32, #tpu.memory_space<vmem>>, vector<1x8x32xf32>
    tpu.vector_store %arg12[%c0_51, %c0_52, %c0_53], %106 {strides = array<i32>} : memref<1x8x32xf32, #tpu.memory_space<vmem>>, vector<1x8x32xf32>,
    return
  }
  func.func @transform_0(%arg0: i32) -> (i32, i32, i32) {
    %c0_i32 = arith.constant 0 : i32
    %c0_i32_0 = arith.constant 0 : i32
    %c0_i32_1 = arith.constant 0 : i32
    return %arg0, %c0_i32, %c0_i32_0 : i32, i32, i32
  }
  func.func @transform_1(%arg0: i32) -> (i32, i32, i32) {
    %c0_i32 = arith.constant 0 : i32
    %c0_i32_0 = arith.constant 0 : i32
    %c0_i32_1 = arith.constant 0 : i32
    return %arg0, %c0_i32, %c0_i32_0 : i32, i32, i32
  }
  func.func @transform_2(%arg0: i32) -> (i32, i32, i32) {
    %c0_i32 = arith.constant 0 : i32
    %c0_i32_0 = arith.constant 0 : i32
    %c0_i32_1 = arith.constant 0 : i32
    return %arg0, %c0_i32, %c0_i32_0 : i32, i32, i32
  }
  func.func @transform_3(%arg0: i32) -> (i32, i32) {
    %c0_i32 = arith.constant 0 : i32
    %c0_i32_0 = arith.constant 0 : i32
    %c0_i32_1 = arith.constant 0 : i32
    return %c0_i32, %c0_i32_0 : i32, i32
  }
  func.func @transform_4(%arg0: i32) -> (i32, i32) {
    %c0_i32 = arith.constant 0 : i32
    %c0_i32_0 = arith.constant 0 : i32
    %c0_i32_1 = arith.constant 0 : i32
    return %c0_i32, %c0_i32_0 : i32, i32
  }
  func.func @transform_5(%arg0: i32) -> (i32, i32) {
    %c0_i32 = arith.constant 0 : i32
    %c0_i32_0 = arith.constant 0 : i32
    %c0_i32_1 = arith.constant 0 : i32
    return %c0_i32, %c0_i32_0 : i32, i32
  }
  func.func @transform_6(%arg0: i32) -> (i32, i32) {
    %c0_i32 = arith.constant 0 : i32
    %c0_i32_0 = arith.constant 0 : i32
    %c0_i32_1 = arith.constant 0 : i32
    return %c0_i32, %c0_i32_0 : i32, i32
  }
  func.func @transform_7(%arg0: i32) -> (i32, i32) {
    %c0_i32 = arith.constant 0 : i32
    %c0_i32_0 = arith.constant 0 : i32
    %c0_i32_1 = arith.constant 0 : i32
    return %c0_i32, %c0_i32_0 : i32, i32
  }
  func.func @transform_8(%arg0: i32) -> (i32, i32) {
    %c0_i32 = arith.constant 0 : i32
    %c0_i32_0 = arith.constant 0 : i32
    %c0_i32_1 = arith.constant 0 : i32
    return %c0_i32, %c0_i32_0 : i32, i32
  }
  func.func @transform_9(%arg0: i32) -> (i32, i32) {
    %c0_i32 = arith.constant 0 : i32
    %c0_i32_0 = arith.constant 0 : i32
    %c0_i32_1 = arith.constant 0 : i32
    return %c0_i32, %c0_i32_0 : i32, i32
  }
  func.func @transform_10(%arg0: i32) -> (i32, i32) {
    %c0_i32 = arith.constant 0 : i32
    %c0_i32_0 = arith.constant 0 : i32
    %c0_i32_1 = arith.constant 0 : i32
    return %c0_i32, %c0_i32_0 : i32, i32
  }
  func.func @transform_11(%arg0: i32) -> (i32, i32, i32) {
    %c0_i32 = arith.constant 0 : i32
    %c0_i32_0 = arith.constant 0 : i32
    %c0_i32_1 = arith.constant 0 : i32
    return %arg0, %c0_i32, %c0_i32_0 : i32, i32, i32
  }
}

module attributes {stable_mosaic.version = 11 : i64} {
  func.func @mha_kernel(%arg0: i32, %arg1: memref<1x8x32xf32, #tpu.memory_space<vmem>>, %arg2: memref<1x8x32xf32, #tpu.memory_space<vmem>>, %arg3: memref<1x8x32xf32, #tpu.memory_space<vmem>>, %arg4: memref<32x32xf32, #tpu.memory_space<vmem>>, %arg5: memref<1x32xf32, #tpu.memory_space<vmem>>, %arg6: memref<32x32xf32, #tpu.memory_space<vmem>>, %arg7: memref<1x32xf32, #tpu.memory_space<vmem>>, %arg8: memref<32x32xf32, #tpu.memory_space<vmem>>, %arg9: memref<1x32xf32, #tpu.memory_space<vmem>>, %arg10: memref<32x32xf32, #tpu.memory_space<vmem>>, %arg11: memref<1x32xf32, #tpu.memory_space<vmem>>, %arg12: memref<1x8x32xf32, #tpu.memory_space<vmem>>) attributes {dimension_semantics = [#tpu.dimension_semantics<parallel>], iteration_bounds = array<i64: 2>, scalar_prefetch = 0 : i64, scratch_operands = 0 : i64, tpu.core_type = #tpu.core_type<tc>, window_params = [{transform_indices = @transform_0, window_bounds = array<i64: 1, 8, 32>}, {transform_indices = @transform_1, window_bounds = array<i64: 1, 8, 32>}, {transform_indices = @transform_2, window_bounds = array<i64: 1, 8, 32>}, {pipeline_mode = #tpu.pipeline_mode<synchronous>, transform_indices = @transform_3, window_bounds = array<i64: 32, 32>}, {pipeline_mode = #tpu.pipeline_mode<synchronous>, transform_indices = @transform_4, window_bounds = array<i64: 1, 32>}, {pipeline_mode = #tpu.pipeline_mode<synchronous>, transform_indices = @transform_5, window_bounds = array<i64: 32, 32>}, {pipeline_mode = #tpu.pipeline_mode<synchronous>, transform_indices = @transform_6, window_bounds = array<i64: 1, 32>}, {pipeline_mode = #tpu.pipeline_mode<synchronous>, transform_indices = @transform_7, window_bounds = array<i64: 32, 32>}, {pipeline_mode = #tpu.pipeline_mode<synchronous>, transform_indices = @transform_8, window_bounds = array<i64: 1, 32>}, {pipeline_mode = #tpu.pipeline_mode<synchronous>, transform_indices = @transform_9, window_bounds = array<i64: 32, 32>}, {pipeline_mode = #tpu.pipeline_mode<synchronous>, transform_indices = @transform_10, window_bounds = array<i64: 1, 32>}, {transform_indices = @transform_11, window_bounds = array<i64: 1, 8, 32>}]} {
    %c0 = arith.constant 0 : index
    %c0_0 = arith.constant 0 : index
    %c0_1 = arith.constant 0 : index
    %0 = vector.load %arg1[%c0, %c0_0, %c0_1] : memref<1x8x32xf32, #tpu.memory_space<vmem>>, vector<1x8x32xf32>
    %1 = vector.shape_cast %0 : vector<1x8x32xf32> to vector<8x32xf32>
    %c0_2 = arith.constant 0 : index
    %c0_3 = arith.constant 0 : index
    %c0_4 = arith.constant 0 : index
    %2 = vector.load %arg2[%c0_2, %c0_3, %c0_4] : memref<1x8x32xf32, #tpu.memory_space<vmem>>, vector<1x8x32xf32>
    %3 = vector.shape_cast %2 : vector<1x8x32xf32> to vector<8x32xf32>
    %c0_5 = arith.constant 0 : index
    %c0_6 = arith.constant 0 : index
    %c0_7 = arith.constant 0 : index
    %4 = vector.load %arg3[%c0_5, %c0_6, %c0_7] : memref<1x8x32xf32, #tpu.memory_space<vmem>>, vector<1x8x32xf32>
    %5 = vector.shape_cast %4 : vector<1x8x32xf32> to vector<8x32xf32>
    %c0_8 = arith.constant 0 : index
    %c0_9 = arith.constant 0 : index
    %6 = vector.load %arg4[%c0_8, %c0_9] : memref<32x32xf32, #tpu.memory_space<vmem>>, vector<32x32xf32>
    %cst = arith.constant dense<0.000000e+00> : vector<8x32xf32>
    %7 = tpu.matmul %1, %6, %cst {dimension_numbers = #tpu.dot_dimension_numbers<[1], [0], [0], [1], [0, 0, 1, 1], [], []>} : vector<8x32xf32>, vector<32x32xf32>, vector<8x32xf32> -> vector<8x32xf32>
    %c0_10 = arith.constant 0 : index
    %c0_11 = arith.constant 0 : index
    %8 = vector.load %arg5[%c0_10, %c0_11] : memref<1x32xf32, #tpu.memory_space<vmem>>, vector<1x32xf32>
    %9 = vector.broadcast %8 : vector<1x32xf32> to vector<8x32xf32>
    %10 = arith.addf %7, %9 : vector<8x32xf32>
    %cst_12 = arith.constant 0.353553385 : f32
    %11 = vector.broadcast %cst_12 : f32 to vector<8x32xf32>
    %12 = arith.mulf %10, %11 : vector<8x32xf32>
    %c0_13 = arith.constant 0 : index
    %c0_14 = arith.constant 0 : index
    %13 = vector.load %arg6[%c0_13, %c0_14] : memref<32x32xf32, #tpu.memory_space<vmem>>, vector<32x32xf32>
    %cst_15 = arith.constant dense<0.000000e+00> : vector<8x32xf32>
    %14 = tpu.matmul %3, %13, %cst_15 {dimension_numbers = #tpu.dot_dimension_numbers<[1], [0], [0], [1], [0, 0, 1, 1], [], []>} : vector<8x32xf32>, vector<32x32xf32>, vector<8x32xf32> -> vector<8x32xf32>
    %c0_16 = arith.constant 0 : index
    %c0_17 = arith.constant 0 : index
    %15 = vector.load %arg7[%c0_16, %c0_17] : memref<1x32xf32, #tpu.memory_space<vmem>>, vector<1x32xf32>
    %16 = vector.broadcast %15 : vector<1x32xf32> to vector<8x32xf32>
    %17 = arith.addf %14, %16 : vector<8x32xf32>
    %c0_18 = arith.constant 0 : index
    %c0_19 = arith.constant 0 : index
    %18 = vector.load %arg8[%c0_18, %c0_19] : memref<32x32xf32, #tpu.memory_space<vmem>>, vector<32x32xf32>
    %cst_20 = arith.constant dense<0.000000e+00> : vector<8x32xf32>
    %19 = tpu.matmul %5, %18, %cst_20 {dimension_numbers = #tpu.dot_dimension_numbers<[1], [0], [0], [1], [0, 0, 1, 1], [], []>} : vector<8x32xf32>, vector<32x32xf32>, vector<8x32xf32> -> vector<8x32xf32>
    %c0_21 = arith.constant 0 : index
    %c0_22 = arith.constant 0 : index
    %20 = vector.load %arg9[%c0_21, %c0_22] : memref<1x32xf32, #tpu.memory_space<vmem>>, vector<1x32xf32>
    %21 = vector.broadcast %20 : vector<1x32xf32> to vector<8x32xf32>
    %22 = arith.addf %19, %21 : vector<8x32xf32>
    %23 = vector.shape_cast %12 : vector<8x32xf32> to vector<1x8x32xf32>
    %24 = vector.shape_cast %17 : vector<8x32xf32> to vector<1x8x32xf32>
    %25 = vector.shape_cast %22 : vector<8x32xf32> to vector<1x8x32xf32>
    %cst_23 = arith.constant 0.000000e+00 : f32
    %26 = vector.broadcast %cst_23 : f32 to vector<8x32xf32>
    %27 = vector.extract_strided_slice %23 {offsets = [0, 0, 0], sizes = [1, 8, 8], strides = [1, 1, 1]} : vector<1x8x32xf32> to vector<1x8x8xf32>
    %28 = vector.extract_strided_slice %24 {offsets = [0, 0, 0], sizes = [1, 8, 8], strides = [1, 1, 1]} : vector<1x8x32xf32> to vector<1x8x8xf32>
    %29 = vector.extract_strided_slice %25 {offsets = [0, 0, 0], sizes = [1, 8, 8], strides = [1, 1, 1]} : vector<1x8x32xf32> to vector<1x8x8xf32>
    %c0_24 = arith.constant 0 : index
    %c0_25 = arith.constant 0 : index
    %30 = vector.load %arg10[%c0_24, %c0_25] : memref<32x32xf32, #tpu.memory_space<vmem>>, vector<8x32xf32>
    %cst_26 = arith.constant dense<0.000000e+00> : vector<1x8x8xf32>
    %31 = tpu.matmul %27, %28, %cst_26 {dimension_numbers = #tpu.dot_dimension_numbers<[2], [2], [1], [1], [0, 0, 0, 1, 1, 1], [0], [0]>} : vector<1x8x8xf32>, vector<1x8x8xf32>, vector<1x8x8xf32> -> vector<1x8x8xf32>
    %cst_27 = arith.constant dense<0xFF800000> : vector<1x8xf32>
    %32 = vector.multi_reduction <maximumf>, %31, %cst_27 [2] : vector<1x8x8xf32> to vector<1x8xf32>
    %33 = vector.shape_cast %32 : vector<1x8xf32> to vector<1x8x1xf32>
    %34 = vector.broadcast %33 : vector<1x8x1xf32> to vector<1x8x8xf32>
    %35 = arith.subf %31, %34 : vector<1x8x8xf32>
    %36 = math.exp %35 : vector<1x8x8xf32>
    %cst_28 = arith.constant dense<0.000000e+00> : vector<1x8xf32>
    %37 = vector.multi_reduction <add>, %36, %cst_28 [2] : vector<1x8x8xf32> to vector<1x8xf32>
    %38 = vector.shape_cast %37 : vector<1x8xf32> to vector<1x8x1xf32>
    %cst_29 = arith.constant dense<0.000000e+00> : vector<1x8x8xf32>
    %39 = tpu.matmul %36, %29, %cst_29 {dimension_numbers = #tpu.dot_dimension_numbers<[2], [1], [1], [2], [0, 0, 0, 1, 1, 2], [0], [0]>} : vector<1x8x8xf32>, vector<1x8x8xf32>, vector<1x8x8xf32> -> vector<1x8x8xf32>
    %40 = tpu.reciprocal %38 {approx = true} : vector<1x8x1xf32> -> vector<1x8x1xf32>
    %41 = vector.broadcast %40 : vector<1x8x1xf32> to vector<1x8x8xf32>
    %42 = arith.mulf %39, %41 : vector<1x8x8xf32>
    %43 = vector.shape_cast %42 : vector<1x8x8xf32> to vector<8x8xf32>
    %cst_30 = arith.constant dense<0.000000e+00> : vector<8x32xf32>
    %44 = tpu.matmul %43, %30, %cst_30 {dimension_numbers = #tpu.dot_dimension_numbers<[1], [0], [0], [1], [0, 0, 1, 1], [], []>} : vector<8x8xf32>, vector<8x32xf32>, vector<8x32xf32> -> vector<8x32xf32>
    %45 = arith.addf %26, %44 : vector<8x32xf32>
    %46 = vector.extract_strided_slice %23 {offsets = [0, 0, 8], sizes = [1, 8, 8], strides = [1, 1, 1]} : vector<1x8x32xf32> to vector<1x8x8xf32>
    %47 = vector.extract_strided_slice %24 {offsets = [0, 0, 8], sizes = [1, 8, 8], strides = [1, 1, 1]} : vector<1x8x32xf32> to vector<1x8x8xf32>
    %48 = vector.extract_strided_slice %25 {offsets = [0, 0, 8], sizes = [1, 8, 8], strides = [1, 1, 1]} : vector<1x8x32xf32> to vector<1x8x8xf32>
    %c8 = arith.constant 8 : index
    %c0_31 = arith.constant 0 : index
    %49 = vector.load %arg10[%c8, %c0_31] : memref<32x32xf32, #tpu.memory_space<vmem>>, vector<8x32xf32>
    %cst_32 = arith.constant dense<0.000000e+00> : vector<1x8x8xf32>
    %50 = tpu.matmul %46, %47, %cst_32 {dimension_numbers = #tpu.dot_dimension_numbers<[2], [2], [1], [1], [0, 0, 0, 1, 1, 1], [0], [0]>} : vector<1x8x8xf32>, vector<1x8x8xf32>, vector<1x8x8xf32> -> vector<1x8x8xf32>
    %cst_33 = arith.constant dense<0xFF800000> : vector<1x8xf32>
    %51 = vector.multi_reduction <maximumf>, %50, %cst_33 [2] : vector<1x8x8xf32> to vector<1x8xf32>
    %52 = vector.shape_cast %51 : vector<1x8xf32> to vector<1x8x1xf32>
    %53 = vector.broadcast %52 : vector<1x8x1xf32> to vector<1x8x8xf32>
    %54 = arith.subf %50, %53 : vector<1x8x8xf32>
    %55 = math.exp %54 : vector<1x8x8xf32>
    %cst_34 = arith.constant dense<0.000000e+00> : vector<1x8xf32>
    %56 = vector.multi_reduction <add>, %55, %cst_34 [2] : vector<1x8x8xf32> to vector<1x8xf32>
    %57 = vector.shape_cast %56 : vector<1x8xf32> to vector<1x8x1xf32>
    %cst_35 = arith.constant dense<0.000000e+00> : vector<1x8x8xf32>
    %58 = tpu.matmul %55, %48, %cst_35 {dimension_numbers = #tpu.dot_dimension_numbers<[2], [1], [1], [2], [0, 0, 0, 1, 1, 2], [0], [0]>} : vector<1x8x8xf32>, vector<1x8x8xf32>, vector<1x8x8xf32> -> vector<1x8x8xf32>
    %59 = tpu.reciprocal %57 {approx = true} : vector<1x8x1xf32> -> vector<1x8x1xf32>
    %60 = vector.broadcast %59 : vector<1x8x1xf32> to vector<1x8x8xf32>
    %61 = arith.mulf %58, %60 : vector<1x8x8xf32>
    %62 = vector.shape_cast %61 : vector<1x8x8xf32> to vector<8x8xf32>
    %cst_36 = arith.constant dense<0.000000e+00> : vector<8x32xf32>
    %63 = tpu.matmul %62, %49, %cst_36 {dimension_numbers = #tpu.dot_dimension_numbers<[1], [0], [0], [1], [0, 0, 1, 1], [], []>} : vector<8x8xf32>, vector<8x32xf32>, vector<8x32xf32> -> vector<8x32xf32>
    %64 = arith.addf %45, %63 : vector<8x32xf32>
    %65 = vector.extract_strided_slice %23 {offsets = [0, 0, 16], sizes = [1, 8, 8], strides = [1, 1, 1]} : vector<1x8x32xf32> to vector<1x8x8xf32>
    %66 = vector.extract_strided_slice %24 {offsets = [0, 0, 16], sizes = [1, 8, 8], strides = [1, 1, 1]} : vector<1x8x32xf32> to vector<1x8x8xf32>
    %67 = vector.extract_strided_slice %25 {offsets = [0, 0, 16], sizes = [1, 8, 8], strides = [1, 1, 1]} : vector<1x8x32xf32> to vector<1x8x8xf32>
    %c16 = arith.constant 16 : index
    %c0_37 = arith.constant 0 : index
    %68 = vector.load %arg10[%c16, %c0_37] : memref<32x32xf32, #tpu.memory_space<vmem>>, vector<8x32xf32>
    %cst_38 = arith.constant dense<0.000000e+00> : vector<1x8x8xf32>
    %69 = tpu.matmul %65, %66, %cst_38 {dimension_numbers = #tpu.dot_dimension_numbers<[2], [2], [1], [1], [0, 0, 0, 1, 1, 1], [0], [0]>} : vector<1x8x8xf32>, vector<1x8x8xf32>, vector<1x8x8xf32> -> vector<1x8x8xf32>
    %cst_39 = arith.constant dense<0xFF800000> : vector<1x8xf32>
    %70 = vector.multi_reduction <maximumf>, %69, %cst_39 [2] : vector<1x8x8xf32> to vector<1x8xf32>
    %71 = vector.shape_cast %70 : vector<1x8xf32> to vector<1x8x1xf32>
    %72 = vector.broadcast %71 : vector<1x8x1xf32> to vector<1x8x8xf32>
    %73 = arith.subf %69, %72 : vector<1x8x8xf32>
    %74 = math.exp %73 : vector<1x8x8xf32>
    %cst_40 = arith.constant dense<0.000000e+00> : vector<1x8xf32>
    %75 = vector.multi_reduction <add>, %74, %cst_40 [2] : vector<1x8x8xf32> to vector<1x8xf32>
    %76 = vector.shape_cast %75 : vector<1x8xf32> to vector<1x8x1xf32>
    %cst_41 = arith.constant dense<0.000000e+00> : vector<1x8x8xf32>
    %77 = tpu.matmul %74, %67, %cst_41 {dimension_numbers = #tpu.dot_dimension_numbers<[2], [1], [1], [2], [0, 0, 0, 1, 1, 2], [0], [0]>} : vector<1x8x8xf32>, vector<1x8x8xf32>, vector<1x8x8xf32> -> vector<1x8x8xf32>
    %78 = tpu.reciprocal %76 {approx = true} : vector<1x8x1xf32> -> vector<1x8x1xf32>
    %79 = vector.broadcast %78 : vector<1x8x1xf32> to vector<1x8x8xf32>
    %80 = arith.mulf %77, %79 : vector<1x8x8xf32>
    %81 = vector.shape_cast %80 : vector<1x8x8xf32> to vector<8x8xf32>
    %cst_42 = arith.constant dense<0.000000e+00> : vector<8x32xf32>
    %82 = tpu.matmul %81, %68, %cst_42 {dimension_numbers = #tpu.dot_dimension_numbers<[1], [0], [0], [1], [0, 0, 1, 1], [], []>} : vector<8x8xf32>, vector<8x32xf32>, vector<8x32xf32> -> vector<8x32xf32>
    %83 = arith.addf %64, %82 : vector<8x32xf32>
    %84 = vector.extract_strided_slice %23 {offsets = [0, 0, 24], sizes = [1, 8, 8], strides = [1, 1, 1]} : vector<1x8x32xf32> to vector<1x8x8xf32>
    %85 = vector.extract_strided_slice %24 {offsets = [0, 0, 24], sizes = [1, 8, 8], strides = [1, 1, 1]} : vector<1x8x32xf32> to vector<1x8x8xf32>
    %86 = vector.extract_strided_slice %25 {offsets = [0, 0, 24], sizes = [1, 8, 8], strides = [1, 1, 1]} : vector<1x8x32xf32> to vector<1x8x8xf32>
    %c24 = arith.constant 24 : index
    %c0_43 = arith.constant 0 : index
    %87 = vector.load %arg10[%c24, %c0_43] : memref<32x32xf32, #tpu.memory_space<vmem>>, vector<8x32xf32>
    %cst_44 = arith.constant dense<0.000000e+00> : vector<1x8x8xf32>
    %88 = tpu.matmul %84, %85, %cst_44 {dimension_numbers = #tpu.dot_dimension_numbers<[2], [2], [1], [1], [0, 0, 0, 1, 1, 1], [0], [0]>} : vector<1x8x8xf32>, vector<1x8x8xf32>, vector<1x8x8xf32> -> vector<1x8x8xf32>
    %cst_45 = arith.constant dense<0xFF800000> : vector<1x8xf32>
    %89 = vector.multi_reduction <maximumf>, %88, %cst_45 [2] : vector<1x8x8xf32> to vector<1x8xf32>
    %90 = vector.shape_cast %89 : vector<1x8xf32> to vector<1x8x1xf32>
    %91 = vector.broadcast %90 : vector<1x8x1xf32> to vector<1x8x8xf32>
    %92 = arith.subf %88, %91 : vector<1x8x8xf32>
    %93 = math.exp %92 : vector<1x8x8xf32>
    %cst_46 = arith.constant dense<0.000000e+00> : vector<1x8xf32>
    %94 = vector.multi_reduction <add>, %93, %cst_46 [2] : vector<1x8x8xf32> to vector<1x8xf32>
    %95 = vector.shape_cast %94 : vector<1x8xf32> to vector<1x8x1xf32>
    %cst_47 = arith.constant dense<0.000000e+00> : vector<1x8x8xf32>
    %96 = tpu.matmul %93, %86, %cst_47 {dimension_numbers = #tpu.dot_dimension_numbers<[2], [1], [1], [2], [0, 0, 0, 1, 1, 2], [0], [0]>} : vector<1x8x8xf32>, vector<1x8x8xf32>, vector<1x8x8xf32> -> vector<1x8x8xf32>
    %97 = tpu.reciprocal %95 {approx = true} : vector<1x8x1xf32> -> vector<1x8x1xf32>
    %98 = vector.broadcast %97 : vector<1x8x1xf32> to vector<1x8x8xf32>
    %99 = arith.mulf %96, %98 : vector<1x8x8xf32>
    %100 = vector.shape_cast %99 : vector<1x8x8xf32> to vector<8x8xf32>
    %cst_48 = arith.constant dense<0.000000e+00> : vector<8x32xf32>
    %101 = tpu.matmul %100, %87, %cst_48 {dimension_numbers = #tpu.dot_dimension_numbers<[1], [0], [0], [1], [0, 0, 1, 1], [], []>} : vector<8x8xf32>, vector<8x32xf32>, vector<8x32xf32> -> vector<8x32xf32>
    %102 = arith.addf %83, %101 : vector<8x32xf32>
    %c0_49 = arith.constant 0 : index
    %c0_50 = arith.constant 0 : index
    %103 = vector.load %arg11[%c0_49, %c0_50] : memref<1x32xf32, #tpu.memory_space<vmem>>, vector<1x32xf32>
    %104 = vector.broadcast %103 : vector<1x32xf32> to vector<8x32xf32>
    %105 = arith.addf %102, %104 : vector<8x32xf32>
    %106 = vector.shape_cast %105 : vector<8x32xf32> to vector<1x8x32xf32>
    %c0_51 = arith.constant 0 : index
    %c0_52 = arith.constant 0 : index
    %c0_53 = arith.constant 0 : index
    %107 = vector.load %arg12[%c0_51, %c0_52, %c0_53] : memref<1x8x32xf32, #tpu.memory_space<vmem>>, vector<1x8x32xf32>
    tpu.vector_store %arg12[%c0_51, %c0_52, %c0_53], %106 {strides = array<i32>} : memref<1x8x32xf32, #tpu.memory_space<vmem>>, vector<1x8x32xf32>,
    return
  }
  func.func @transform_0(%arg0: i32) -> (i32, i32, i32) {
    %c0_i32 = arith.constant 0 : i32
    %c0_i32_0 = arith.constant 0 : i32
    %c0_i32_1 = arith.constant 0 : i32
    return %arg0, %c0_i32, %c0_i32_0 : i32, i32, i32
  }
  func.func @transform_1(%arg0: i32) -> (i32, i32, i32) {
    %c0_i32 = arith.constant 0 : i32
    %c0_i32_0 = arith.constant 0 : i32
    %c0_i32_1 = arith.constant 0 : i32
    return %arg0, %c0_i32, %c0_i32_0 : i32, i32, i32
  }
  func.func @transform_2(%arg0: i32) -> (i32, i32, i32) {
    %c0_i32 = arith.constant 0 : i32
    %c0_i32_0 = arith.constant 0 : i32
    %c0_i32_1 = arith.constant 0 : i32
    return %arg0, %c0_i32, %c0_i32_0 : i32, i32, i32
  }
  func.func @transform_3(%arg0: i32) -> (i32, i32) {
    %c0_i32 = arith.constant 0 : i32
    %c0_i32_0 = arith.constant 0 : i32
    %c0_i32_1 = arith.constant 0 : i32
    return %c0_i32, %c0_i32_0 : i32, i32
  }
  func.func @transform_4(%arg0: i32) -> (i32, i32) {
    %c0_i32 = arith.constant 0 : i32
    %c0_i32_0 = arith.constant 0 : i32
    %c0_i32_1 = arith.constant 0 : i32
    return %c0_i32, %c0_i32_0 : i32, i32
  }
  func.func @transform_5(%arg0: i32) -> (i32, i32) {
    %c0_i32 = arith.constant 0 : i32
    %c0_i32_0 = arith.constant 0 : i32
    %c0_i32_1 = arith.constant 0 : i32
    return %c0_i32, %c0_i32_0 : i32, i32
  }
  func.func @transform_6(%arg0: i32) -> (i32, i32) {
    %c0_i32 = arith.constant 0 : i32
    %c0_i32_0 = arith.constant 0 : i32
    %c0_i32_1 = arith.constant 0 : i32
    return %c0_i32, %c0_i32_0 : i32, i32
  }
  func.func @transform_7(%arg0: i32) -> (i32, i32) {
    %c0_i32 = arith.constant 0 : i32
    %c0_i32_0 = arith.constant 0 : i32
    %c0_i32_1 = arith.constant 0 : i32
    return %c0_i32, %c0_i32_0 : i32, i32
  }
  func.func @transform_8(%arg0: i32) -> (i32, i32) {
    %c0_i32 = arith.constant 0 : i32
    %c0_i32_0 = arith.constant 0 : i32
    %c0_i32_1 = arith.constant 0 : i32
    return %c0_i32, %c0_i32_0 : i32, i32
  }
  func.func @transform_9(%arg0: i32) -> (i32, i32) {
    %c0_i32 = arith.constant 0 : i32
    %c0_i32_0 = arith.constant 0 : i32
    %c0_i32_1 = arith.constant 0 : i32
    return %c0_i32, %c0_i32_0 : i32, i32
  }
  func.func @transform_10(%arg0: i32) -> (i32, i32) {
    %c0_i32 = arith.constant 0 : i32
    %c0_i32_0 = arith.constant 0 : i32
    %c0_i32_1 = arith.constant 0 : i32
    return %c0_i32, %c0_i32_0 : i32, i32
  }
  func.func @transform_11(%arg0: i32) -> (i32, i32, i32) {
    %c0_i32 = arith.constant 0 : i32
    %c0_i32_0 = arith.constant 0 : i32
    %c0_i32_1 = arith.constant 0 : i32
    return %arg0, %c0_i32, %c0_i32_0 : i32, i32, i32
  }
}

</mosaic_0001>

<llo_original>
// kernel: tpu_custom_call.1
$region0: #{tpu_custom_call.1}
  #allocation0 [shape = 'u32[]', space=smem, size = 0x4, offset = 0x4, fixed_abs, tag = 'smem constant byte address 0x4 - core index']
  #allocation1 [shape = 'u32[144,128]{1,0:T(1,128)}', space=vmem, size = 0x12000, scoped, tag = 'internal scratch']
  %s0 = inlined_call_operand.hbm [shape: f32[2,8,32], index: 0, kind: input, shape index: {}]
  %s1 = inlined_call_operand.hbm [shape: f32[2,8,32], index: 1, kind: input, shape index: {}]
  %s2 = inlined_call_operand.hbm [shape: f32[2,8,32], index: 2, kind: input, shape index: {}]
  %s3 = inlined_call_operand.hbm [shape: f32[32,32], index: 3, kind: input, shape index: {}]
  %s4 = inlined_call_operand.vmem [shape: f32[1,32], index: 4, kind: input, shape index: {}]
  %s5 = inlined_call_operand.hbm [shape: f32[32,32], index: 5, kind: input, shape index: {}]
  %s6 = inlined_call_operand.vmem [shape: f32[1,32], index: 6, kind: input, shape index: {}]
  %s7 = inlined_call_operand.hbm [shape: f32[32,32], index: 7, kind: input, shape index: {}]
  %s8 = inlined_call_operand.vmem [shape: f32[1,32], index: 8, kind: input, shape index: {}]
  %s9 = inlined_call_operand.hbm [shape: f32[32,32], index: 9, kind: input, shape index: {}]
  %s10 = inlined_call_operand.vmem [shape: f32[1,32], index: 10, kind: input, shape index: {}]
  %s11 = inlined_call_operand.hbm [shape: f32[2,8,32], index: 11, kind: output, shape index: {}]
  %s12 = sld [smem:[#allocation0]]
  $region105: #{tpu_custom_call.1} parent=0
    _
  %s14 = ssub.s32 1, %s12
  %s15 = scalar_select 0, %s14, %s12
  $region1: #{tpu_custom_call.1} parent=0
    #allocation2 [shape = 'u8[8192]{0}', space=vmem, size = 0x2000, scoped, tag = 'input window, operand 0']
    #allocation3 [shape = 's32[2]{0}', space=sflag, size = 0x8, scoped, tag = 'scoped memory for tpu_custom_call.1']
    #allocation4 [shape = 's32[2]{0}', space=sflag, size = 0x8, scoped, tag = 'scoped memory for tpu_custom_call.1']
    #allocation5 [shape = 'u8[8192]{0}', space=vmem, size = 0x2000, scoped, tag = 'input window, operand 1']
    #allocation6 [shape = 's32[2]{0}', space=sflag, size = 0x8, scoped, tag = 'scoped memory for tpu_custom_call.1']
    #allocation7 [shape = 'u8[8192]{0}', space=vmem, size = 0x2000, scoped, tag = 'input window, operand 2']
    #allocation8 [shape = 'u8[16384]{0}', space=vmem, size = 0x4000, scoped, tag = 'input window, operand 3, single buffered']
    #allocation9 [shape = 's32[1]{0}', space=sflag, size = 0x4, scoped, tag = 'scoped memory for tpu_custom_call.1']
    #allocation10 [shape = 'u8[16384]{0}', space=vmem, size = 0x4000, scoped, tag = 'input window, operand 5, single buffered']
    #allocation11 [shape = 'u8[16384]{0}', space=vmem, size = 0x4000, scoped, tag = 'input window, operand 7, single buffered']
    #allocation12 [shape = 's32[1]{0}', space=sflag, size = 0x4, scoped, tag = 'scoped memory for tpu_custom_call.1']
    #allocation13 [shape = 'u8[16384]{0}', space=vmem, size = 0x4000, scoped, tag = 'input window, operand 9, single buffered']
    #allocation14 [shape = 'u8[8192]{0}', space=vmem, size = 0x2000, scoped, tag = 'output window, operand 0']
    %16 = vsyncpa [#allocation3], 0
    %s17 = scalar_lea.sflag [#allocation3], 1
    %18 = vsyncpa %s17, 0
    %19 = vsyncpa [#allocation6], 0
    %s20 = scalar_lea.sflag [#allocation6], 1
    %21 = vsyncpa %s20, 0
    %22 = vsyncpa [#allocation9], 0
    %23 = vsyncpa [#allocation12], 0
    %24 = vsyncpa [#allocation4], 0
    %s25 = scalar_lea.sflag [#allocation4], 1
    %26 = vsyncpa %s25, 0
    loop: start=0, step=1, limit=4
    $region2: #{tpu_custom_call.1} parent=1 // loop_pre_header
      _
    $region3: #{tpu_custom_call.1} parent=1 // loop_header
      %s28 = sphi 0, %s32
      %p29 = scmp.ge.s32.totalorder %s28, 4
      %s38 = sphi 0, %s40
      %s41 = sphi 0, %s38
      %s42 = sphi 0, %s41
      %s58 = sphi 0, %s42
      %s64 = sphi 0, %s66
      %s67 = sphi 0, %s64
      %s68 = sphi 0, %s67
      %s84 = sphi 0, %s68
      %s90 = sphi 0, %s92
      %s93 = sphi 0, %s90
      %s94 = sphi 0, %s93
      %s110 = sphi 0, %s94
      %s114 = sphi 0, %s114
      %s116 = sphi 0, %s114
      %s117 = sphi 0, %s116
      %s131 = sphi 0, %s117
      %s135 = sphi 0, %s135
      %s137 = sphi 0, %s135
      %s138 = sphi 0, %s137
      %s152 = sphi 0, %s138
      %s156 = sphi 0, %s156
      %s158 = sphi 0, %s156
      %s159 = sphi 0, %s158
      %s173 = sphi 0, %s159
      %s177 = sphi 0, %s177
      %s179 = sphi 0, %s177
      %s180 = sphi 0, %s179
      %s194 = sphi 0, %s180
      %s198 = sphi 0, %s198
      %s200 = sphi 0, %s198
      %s201 = sphi 0, %s200
      %s215 = sphi 0, %s201
      %s219 = sphi 0, %s219
      %s221 = sphi 0, %s219
      %s222 = sphi 0, %s221
      %s236 = sphi 0, %s222
      %s240 = sphi 0, %s240
      %s242 = sphi 0, %s240
      %s243 = sphi 0, %s242
      %s257 = sphi 0, %s243
      %s261 = sphi 0, %s261
      %s263 = sphi 0, %s261
      %s264 = sphi 0, %s263
      %s278 = sphi 0, %s264
      %s284 = sphi 0, %s286
      %s287 = sphi 0, %s284
      %s288 = sphi 0, %s287
      %s304 = sphi 0, %s288
    $region4: #{tpu_custom_call.1} parent=1 // loop_header_branch
      %31 = sbr.rel (%p29) target = $region8
    $region5: #{tpu_custom_call.1} parent=1 // loop_body
      %s33 = ssub.s32 %s28, 1
      %s34 = ssub.s32 %s28, 2
      %s35 = sadd.s32 %s28, 1
      %s36 = ssub.s32 %s28, %s35
      %p37 = scmp.eq.s32.totalorder %s36, 0
      %s39 = sadd.s32 %s38, 1
      %s40 = scalar_select %p37, %s38, %s39
      %p43 = pneg %p37
      %p44 = scmp.eq.s32.totalorder %s28, 1
      %p45 = por %p43, %p44
      %p46 = scmp.ne.s32.totalorder %s38, %s41
      %p47 = scmp.eq.s32.totalorder %s28, 0
      %p48 = por %p46, %p47
      %p49 = scmp.ne.s32.totalorder %s38, %s41
      %p50 = scmp.eq.s32.totalorder %s33, 1
      %p51 = por %p49, %p50
      %p52 = scmp.ne.s32.totalorder %s41, %s42
      %p53 = scmp.eq.s32.totalorder %s33, 0
      %p54 = por %p52, %p53
      %p55 = scmp.ne.s32.totalorder %s41, %s42
      %p56 = scmp.eq.s32.totalorder %s34, 1
      %p57 = por %p55, %p56
      %p59 = scmp.ne.s32.totalorder %s42, %s58
      %p60 = scmp.eq.s32.totalorder %s34, 0
      %p61 = por %p59, %p60
      %s62 = ssub.s32 %s28, %s35
      %p63 = scmp.eq.s32.totalorder %s62, 0
      %s65 = sadd.s32 %s64, 1
      %s66 = scalar_select %p63, %s64, %s65
      %p69 = pneg %p63
      %p70 = scmp.eq.s32.totalorder %s28, 1
      %p71 = por %p69, %p70
      %p72 = scmp.ne.s32.totalorder %s64, %s67
      %p73 = scmp.eq.s32.totalorder %s28, 0
      %p74 = por %p72, %p73
      %p75 = scmp.ne.s32.totalorder %s64, %s67
      %p76 = scmp.eq.s32.totalorder %s33, 1
      %p77 = por %p75, %p76
      %p78 = scmp.ne.s32.totalorder %s67, %s68
      %p79 = scmp.eq.s32.totalorder %s33, 0
      %p80 = por %p78, %p79
      %p81 = scmp.ne.s32.totalorder %s67, %s68
      %p82 = scmp.eq.s32.totalorder %s34, 1
      %p83 = por %p81, %p82
      %p85 = scmp.ne.s32.totalorder %s68, %s84
      %p86 = scmp.eq.s32.totalorder %s34, 0
      %p87 = por %p85, %p86
      %s88 = ssub.s32 %s28, %s35
      %p89 = scmp.eq.s32.totalorder %s88, 0
      %s91 = sadd.s32 %s90, 1
      %s92 = scalar_select %p89, %s90, %s91
      %p95 = pneg %p89
      %p96 = scmp.eq.s32.totalorder %s28, 1
      %p97 = por %p95, %p96
      %p98 = scmp.ne.s32.totalorder %s90, %s93
      %p99 = scmp.eq.s32.totalorder %s28, 0
      %p100 = por %p98, %p99
      %p101 = scmp.ne.s32.totalorder %s90, %s93
      %p102 = scmp.eq.s32.totalorder %s33, 1
      %p103 = por %p101, %p102
      %p104 = scmp.ne.s32.totalorder %s93, %s94
      %p105 = scmp.eq.s32.totalorder %s33, 0
      %p106 = por %p104, %p105
      %p107 = scmp.ne.s32.totalorder %s93, %s94
      %p108 = scmp.eq.s32.totalorder %s34, 1
      %p109 = por %p107, %p108
      %p111 = scmp.ne.s32.totalorder %s94, %s110
      %p112 = scmp.eq.s32.totalorder %s34, 0
      %p113 = por %p111, %p112
      %s115 = sadd.s32 %s114, 1
      %p118 = scmp.eq.s32.totalorder %s28, 1
      %p119 = scmp.ne.s32.totalorder %s114, %s116
      %p120 = scmp.eq.s32.totalorder %s28, 0
      %p121 = por %p119, %p120
      %p122 = scmp.ne.s32.totalorder %s114, %s116
      %p123 = scmp.eq.s32.totalorder %s33, 1
      %p124 = por %p122, %p123
      %p125 = scmp.ne.s32.totalorder %s116, %s117
      %p126 = scmp.eq.s32.totalorder %s33, 0
      %p127 = por %p125, %p126
      %p128 = scmp.ne.s32.totalorder %s116, %s117
      %p129 = scmp.eq.s32.totalorder %s34, 1
      %p130 = por %p128, %p129
      %p132 = scmp.ne.s32.totalorder %s117, %s131
      %p133 = scmp.eq.s32.totalorder %s34, 0
      %p134 = por %p132, %p133
      %s136 = sadd.s32 %s135, 1
      %p139 = scmp.eq.s32.totalorder %s28, 1
      %p140 = scmp.ne.s32.totalorder %s135, %s137
      %p141 = scmp.eq.s32.totalorder %s28, 0
      %p142 = por %p140, %p141
      %p143 = scmp.ne.s32.totalorder %s135, %s137
      %p144 = scmp.eq.s32.totalorder %s33, 1
      %p145 = por %p143, %p144
      %p146 = scmp.ne.s32.totalorder %s137, %s138
      %p147 = scmp.eq.s32.totalorder %s33, 0
      %p148 = por %p146, %p147
      %p149 = scmp.ne.s32.totalorder %s137, %s138
      %p150 = scmp.eq.s32.totalorder %s34, 1
      %p151 = por %p149, %p150
      %p153 = scmp.ne.s32.totalorder %s138, %s152
      %p154 = scmp.eq.s32.totalorder %s34, 0
      %p155 = por %p153, %p154
      %s157 = sadd.s32 %s156, 1
      %p160 = scmp.eq.s32.totalorder %s28, 1
      %p161 = scmp.ne.s32.totalorder %s156, %s158
      %p162 = scmp.eq.s32.totalorder %s28, 0
      %p163 = por %p161, %p162
      %p164 = scmp.ne.s32.totalorder %s156, %s158
      %p165 = scmp.eq.s32.totalorder %s33, 1
      %p166 = por %p164, %p165
      %p167 = scmp.ne.s32.totalorder %s158, %s159
      %p168 = scmp.eq.s32.totalorder %s33, 0
      %p169 = por %p167, %p168
      %p170 = scmp.ne.s32.totalorder %s158, %s159
      %p171 = scmp.eq.s32.totalorder %s34, 1
      %p172 = por %p170, %p171
      %p174 = scmp.ne.s32.totalorder %s159, %s173
      %p175 = scmp.eq.s32.totalorder %s34, 0
      %p176 = por %p174, %p175
      %s178 = sadd.s32 %s177, 1
      %p181 = scmp.eq.s32.totalorder %s28, 1
      %p182 = scmp.ne.s32.totalorder %s177, %s179
      %p183 = scmp.eq.s32.totalorder %s28, 0
      %p184 = por %p182, %p183
      %p185 = scmp.ne.s32.totalorder %s177, %s179
      %p186 = scmp.eq.s32.totalorder %s33, 1
      %p187 = por %p185, %p186
      %p188 = scmp.ne.s32.totalorder %s179, %s180
      %p189 = scmp.eq.s32.totalorder %s33, 0
      %p190 = por %p188, %p189
      %p191 = scmp.ne.s32.totalorder %s179, %s180
      %p192 = scmp.eq.s32.totalorder %s34, 1
      %p193 = por %p191, %p192
      %p195 = scmp.ne.s32.totalorder %s180, %s194
      %p196 = scmp.eq.s32.totalorder %s34, 0
      %p197 = por %p195, %p196
      %s199 = sadd.s32 %s198, 1
      %p202 = scmp.eq.s32.totalorder %s28, 1
      %p203 = scmp.ne.s32.totalorder %s198, %s200
      %p204 = scmp.eq.s32.totalorder %s28, 0
      %p205 = por %p203, %p204
      %p206 = scmp.ne.s32.totalorder %s198, %s200
      %p207 = scmp.eq.s32.totalorder %s33, 1
      %p208 = por %p206, %p207
      %p209 = scmp.ne.s32.totalorder %s200, %s201
      %p210 = scmp.eq.s32.totalorder %s33, 0
      %p211 = por %p209, %p210
      %p212 = scmp.ne.s32.totalorder %s200, %s201
      %p213 = scmp.eq.s32.totalorder %s34, 1
      %p214 = por %p212, %p213
      %p216 = scmp.ne.s32.totalorder %s201, %s215
      %p217 = scmp.eq.s32.totalorder %s34, 0
      %p218 = por %p216, %p217
      %s220 = sadd.s32 %s219, 1
      %p223 = scmp.eq.s32.totalorder %s28, 1
      %p224 = scmp.ne.s32.totalorder %s219, %s221
      %p225 = scmp.eq.s32.totalorder %s28, 0
      %p226 = por %p224, %p225
      %p227 = scmp.ne.s32.totalorder %s219, %s221
      %p228 = scmp.eq.s32.totalorder %s33, 1
      %p229 = por %p227, %p228
      %p230 = scmp.ne.s32.totalorder %s221, %s222
      %p231 = scmp.eq.s32.totalorder %s33, 0
      %p232 = por %p230, %p231
      %p233 = scmp.ne.s32.totalorder %s221, %s222
      %p234 = scmp.eq.s32.totalorder %s34, 1
      %p235 = por %p233, %p234
      %p237 = scmp.ne.s32.totalorder %s222, %s236
      %p238 = scmp.eq.s32.totalorder %s34, 0
      %p239 = por %p237, %p238
      %s241 = sadd.s32 %s240, 1
      %p244 = scmp.eq.s32.totalorder %s28, 1
      %p245 = scmp.ne.s32.totalorder %s240, %s242
      %p246 = scmp.eq.s32.totalorder %s28, 0
      %p247 = por %p245, %p246
      %p248 = scmp.ne.s32.totalorder %s240, %s242
      %p249 = scmp.eq.s32.totalorder %s33, 1
      %p250 = por %p248, %p249
      %p251 = scmp.ne.s32.totalorder %s242, %s243
      %p252 = scmp.eq.s32.totalorder %s33, 0
      %p253 = por %p251, %p252
      %p254 = scmp.ne.s32.totalorder %s242, %s243
      %p255 = scmp.eq.s32.totalorder %s34, 1
      %p256 = por %p254, %p255
      %p258 = scmp.ne.s32.totalorder %s243, %s257
      %p259 = scmp.eq.s32.totalorder %s34, 0
      %p260 = por %p258, %p259
      %s262 = sadd.s32 %s261, 1
      %p265 = scmp.eq.s32.totalorder %s28, 1
      %p266 = scmp.ne.s32.totalorder %s261, %s263
      %p267 = scmp.eq.s32.totalorder %s28, 0
      %p268 = por %p266, %p267
      %p269 = scmp.ne.s32.totalorder %s261, %s263
      %p270 = scmp.eq.s32.totalorder %s33, 1
      %p271 = por %p269, %p270
      %p272 = scmp.ne.s32.totalorder %s263, %s264
      %p273 = scmp.eq.s32.totalorder %s33, 0
      %p274 = por %p272, %p273
      %p275 = scmp.ne.s32.totalorder %s263, %s264
      %p276 = scmp.eq.s32.totalorder %s34, 1
      %p277 = por %p275, %p276
      %p279 = scmp.ne.s32.totalorder %s264, %s278
      %p280 = scmp.eq.s32.totalorder %s34, 0
      %p281 = por %p279, %p280
      %s282 = ssub.s32 %s28, %s35
      %p283 = scmp.eq.s32.totalorder %s282, 0
      %s285 = sadd.s32 %s284, 1
      %s286 = scalar_select %p283, %s284, %s285
      %p289 = pneg %p283
      %p290 = scmp.eq.s32.totalorder %s28, 1
      %p291 = por %p289, %p290
      %p292 = scmp.ne.s32.totalorder %s284, %s287
      %p293 = scmp.eq.s32.totalorder %s28, 0
      %p294 = por %p292, %p293
      %p295 = scmp.ne.s32.totalorder %s284, %s287
      %p296 = scmp.eq.s32.totalorder %s33, 1
      %p297 = por %p295, %p296
      %p298 = scmp.ne.s32.totalorder %s287, %s288
      %p299 = scmp.eq.s32.totalorder %s33, 0
      %p300 = por %p298, %p299
      %p301 = scmp.ne.s32.totalorder %s287, %s288
      %p302 = scmp.eq.s32.totalorder %s34, 1
      %p303 = por %p301, %p302
      %p305 = scmp.ne.s32.totalorder %s288, %s304
      %p306 = scmp.eq.s32.totalorder %s34, 0
      %p307 = por %p305, %p306
      %p308 = scmp.le.s32.totalorder 1, %s28
      %p309 = scmp.lt.s32.totalorder %s28, 3
      %p310 = pnand %p308, %p309
      %p311 = pneg %p310
      // Predicated region
      $region9: #{tpu_custom_call.1} parent=5 // pred_check
        _
      $region10: #{tpu_custom_call.1} parent=5 // pred_check_branch
        %313 = sbr.rel (%p310) target = $region12
      $region11: #{tpu_custom_call.1} parent=5 // pred_region
        %s314 = ssub.s32 %s28, 1
        // Predicated region
        $region13: #{tpu_custom_call.1} parent=11 // pred_check
          %p315 = pneg %p127
        $region14: #{tpu_custom_call.1} parent=11 // pred_check_branch
          %317 = sbr.rel (%p315) target = $region16
        $region15: #{tpu_custom_call.1} parent=11 // pred_region
          %s319 = ssub.s32 512, 512
          %320 = vsyncadd [#allocation9], %s319
          %s321 = sshll.u32 [#allocation8], 4
          %s322 = int_to_ptr.vmem [resolvable:$true] %s321
          %327 = dma.hbm_to_vmem [thread:$0]  %s3, 512, %s322, [#allocation9], 128, 128, 8
        $region16: #{tpu_custom_call.1} parent=11 // pred_fallthru
          _
        // Predicated region
        $region17: #{tpu_custom_call.1} parent=11 // pred_check
          %p328 = pneg %p148
        $region18: #{tpu_custom_call.1} parent=11 // pred_check_branch
          %330 = sbr.rel (%p328) target = $region20
        $region19: #{tpu_custom_call.1} parent=11 // pred_region
          _
        $region20: #{tpu_custom_call.1} parent=11 // pred_fallthru
          _
        // Predicated region
        $region21: #{tpu_custom_call.1} parent=11 // pred_check
          %p331 = pneg %p169
        $region22: #{tpu_custom_call.1} parent=11 // pred_check_branch
          %333 = sbr.rel (%p331) target = $region24
        $region23: #{tpu_custom_call.1} parent=11 // pred_region
          %s335 = ssub.s32 512, 512
          %336 = vsyncadd [#allocation9], %s335
          %s337 = sshll.u32 [#allocation10], 4
          %s338 = int_to_ptr.vmem [resolvable:$true] %s337
          %343 = dma.hbm_to_vmem [thread:$0]  %s5, 512, %s338, [#allocation9], 128, 128, 8
        $region24: #{tpu_custom_call.1} parent=11 // pred_fallthru
          _
        // Predicated region
        $region25: #{tpu_custom_call.1} parent=11 // pred_check
          %p344 = pneg %p190
        $region26: #{tpu_custom_call.1} parent=11 // pred_check_branch
          %346 = sbr.rel (%p344) target = $region28
        $region27: #{tpu_custom_call.1} parent=11 // pred_region
          _
        $region28: #{tpu_custom_call.1} parent=11 // pred_fallthru
          _
        // Predicated region
        $region29: #{tpu_custom_call.1} parent=11 // pred_check
          %p347 = pneg %p211
        $region30: #{tpu_custom_call.1} parent=11 // pred_check_branch
          %349 = sbr.rel (%p347) target = $region32
        $region31: #{tpu_custom_call.1} parent=11 // pred_region
          %s351 = ssub.s32 512, 512
          %352 = vsyncadd [#allocation12], %s351
          %s353 = sshll.u32 [#allocation11], 4
          %s354 = int_to_ptr.vmem [resolvable:$true] %s353
          %359 = dma.hbm_to_vmem [thread:$0]  %s7, 512, %s354, [#allocation12], 128, 128, 8
        $region32: #{tpu_custom_call.1} parent=11 // pred_fallthru
          _
        // Predicated region
        $region33: #{tpu_custom_call.1} parent=11 // pred_check
          %p360 = pneg %p232
        $region34: #{tpu_custom_call.1} parent=11 // pred_check_branch
          %362 = sbr.rel (%p360) target = $region36
        $region35: #{tpu_custom_call.1} parent=11 // pred_region
          _
        $region36: #{tpu_custom_call.1} parent=11 // pred_fallthru
          _
        // Predicated region
        $region37: #{tpu_custom_call.1} parent=11 // pred_check
          %p363 = pneg %p253
        $region38: #{tpu_custom_call.1} parent=11 // pred_check_branch
          %365 = sbr.rel (%p363) target = $region40
        $region39: #{tpu_custom_call.1} parent=11 // pred_region
          %s367 = ssub.s32 512, 512
          %368 = vsyncadd [#allocation12], %s367
          %s369 = sshll.u32 [#allocation13], 4
          %s370 = int_to_ptr.vmem [resolvable:$true] %s369
          %375 = dma.hbm_to_vmem [thread:$0]  %s9, 512, %s370, [#allocation12], 128, 128, 8
        $region40: #{tpu_custom_call.1} parent=11 // pred_fallthru
          _
        // Predicated region
        $region41: #{tpu_custom_call.1} parent=11 // pred_check
          %p376 = pneg %p274
        $region42: #{tpu_custom_call.1} parent=11 // pred_check_branch
          %378 = sbr.rel (%p376) target = $region44
        $region43: #{tpu_custom_call.1} parent=11 // pred_region
          _
        $region44: #{tpu_custom_call.1} parent=11 // pred_fallthru
          _
      $region12: #{tpu_custom_call.1} parent=5 // pred_fallthru
        _
      %p379 = scmp.lt.s32.totalorder %s28, 2
      // Predicated region
      $region45: #{tpu_custom_call.1} parent=5 // pred_check
        %p380 = pneg %p379
      $region46: #{tpu_custom_call.1} parent=5 // pred_check_branch
        %382 = sbr.rel (%p380) target = $region48
      $region47: #{tpu_custom_call.1} parent=5 // pred_region
        // Predicated region
        $region49: #{tpu_custom_call.1} parent=47 // pred_check
          %p383 = pneg %p48
        $region50: #{tpu_custom_call.1} parent=47 // pred_check_branch
          %385 = sbr.rel (%p383) target = $region52
        $region51: #{tpu_custom_call.1} parent=47 // pred_region
          %s386 = sand.u32 %s38, 1
          %s387 = scalar_lea.sflag [#allocation3], %s386
          %s388 = sand.u32 %s38, 1
          %s389 = smul.addr %s388, 8
          %s390 = scalar_lea.vmem [#allocation2], %s389
          %s392 = ssub.s32 128, 128
          %393 = vsyncadd %s387, %s392
          %s394 = smul.addr %s28, 128
          %s395 = scalar_lea.hbm %s0, %s394
          %s397 = sshll.u32 %s390, 4
          %s398 = int_to_ptr.vmem [resolvable:$true] %s397
          %400 = dma.hbm_to_vmem [thread:$0]  %s395, 128, %s398, %s387
        $region52: #{tpu_custom_call.1} parent=47 // pred_fallthru
          _
        // Predicated region
        $region53: #{tpu_custom_call.1} parent=47 // pred_check
          %p401 = pneg %p74
        $region54: #{tpu_custom_call.1} parent=47 // pred_check_branch
          %403 = sbr.rel (%p401) target = $region56
        $region55: #{tpu_custom_call.1} parent=47 // pred_region
          %s404 = sand.u32 %s28, 1
          %s405 = scalar_lea.sflag [#allocation6], %s404
          %s406 = sand.u32 %s64, 1
          %s407 = smul.addr %s406, 8
          %s408 = scalar_lea.vmem [#allocation5], %s407
          %s410 = ssub.s32 128, 128
          %411 = vsyncadd %s405, %s410
          %s412 = smul.addr %s28, 128
          %s413 = scalar_lea.hbm %s1, %s412
          %s415 = sshll.u32 %s408, 4
          %s416 = int_to_ptr.vmem [resolvable:$true] %s415
          %418 = dma.hbm_to_vmem [thread:$0]  %s413, 128, %s416, %s405
        $region56: #{tpu_custom_call.1} parent=47 // pred_fallthru
          _
        // Predicated region
        $region57: #{tpu_custom_call.1} parent=47 // pred_check
          %p419 = pneg %p100
        $region58: #{tpu_custom_call.1} parent=47 // pred_check_branch
          %421 = sbr.rel (%p419) target = $region60
        $region59: #{tpu_custom_call.1} parent=47 // pred_region
          %s422 = sand.u32 %s28, 1
          %s423 = scalar_lea.sflag [#allocation6], %s422
          %s424 = sand.u32 %s90, 1
          %s425 = smul.addr %s424, 8
          %s426 = scalar_lea.vmem [#allocation7], %s425
          %s428 = ssub.s32 128, 128
          %429 = vsyncadd %s423, %s428
          %s430 = smul.addr %s28, 128
          %s431 = scalar_lea.hbm %s2, %s430
          %s433 = sshll.u32 %s426, 4
          %s434 = int_to_ptr.vmem [resolvable:$true] %s433
          %436 = dma.hbm_to_vmem [thread:$0]  %s431, 128, %s434, %s423
        $region60: #{tpu_custom_call.1} parent=47 // pred_fallthru
          _
      $region48: #{tpu_custom_call.1} parent=5 // pred_fallthru
        _
      %p437 = scmp.le.s32.totalorder 1, %s28
      %p438 = scmp.lt.s32.totalorder %s28, 3
      %p439 = pnand %p437, %p438
      %p440 = pneg %p439
      // Predicated region
      $region61: #{tpu_custom_call.1} parent=5 // pred_check
        _
      $region62: #{tpu_custom_call.1} parent=5 // pred_check_branch
        %442 = sbr.rel (%p439) target = $region64
      $region63: #{tpu_custom_call.1} parent=5 // pred_region
        %s443 = ssub.s32 %s28, 1
        %s444 = sand.u32 %s41, 1
        %s445 = scalar_lea.sflag [#allocation3], %s444
        %s446 = sand.u32 %s41, 1
        %s447 = smul.addr %s446, 8
        %s448 = scalar_lea.vmem [#allocation2], %s447
        // Predicated region
        $region65: #{tpu_custom_call.1} parent=63 // pred_check
          %p449 = pneg %p54
        $region66: #{tpu_custom_call.1} parent=63 // pred_check_branch
          %451 = sbr.rel (%p449) target = $region68
        $region67: #{tpu_custom_call.1} parent=63 // pred_region
          %452 = dma.done %s445, 128
        $region68: #{tpu_custom_call.1} parent=63 // pred_fallthru
          _
        %s453 = sand.u32 %s33, 1
        %s454 = scalar_lea.sflag [#allocation6], %s453
        %s455 = sand.u32 %s67, 1
        %s456 = smul.addr %s455, 8
        %s457 = scalar_lea.vmem [#allocation5], %s456
        // Predicated region
        $region69: #{tpu_custom_call.1} parent=63 // pred_check
          %p458 = pneg %p80
        $region70: #{tpu_custom_call.1} parent=63 // pred_check_branch
          %460 = sbr.rel (%p458) target = $region72
        $region71: #{tpu_custom_call.1} parent=63 // pred_region
          %461 = dma.done %s454, 128
        $region72: #{tpu_custom_call.1} parent=63 // pred_fallthru
          _
        %s462 = sand.u32 %s33, 1
        %s463 = scalar_lea.sflag [#allocation6], %s462
        %s464 = sand.u32 %s93, 1
        %s465 = smul.addr %s464, 8
        %s466 = scalar_lea.vmem [#allocation7], %s465
        // Predicated region
        $region73: #{tpu_custom_call.1} parent=63 // pred_check
          %p467 = pneg %p106
        $region74: #{tpu_custom_call.1} parent=63 // pred_check_branch
          %469 = sbr.rel (%p467) target = $region76
        $region75: #{tpu_custom_call.1} parent=63 // pred_region
          %470 = dma.done %s463, 128
        $region76: #{tpu_custom_call.1} parent=63 // pred_fallthru
          _
        // Predicated region
        $region77: #{tpu_custom_call.1} parent=63 // pred_check
          %p471 = pneg %p127
        $region78: #{tpu_custom_call.1} parent=63 // pred_check_branch
          %473 = sbr.rel (%p471) target = $region80
        $region79: #{tpu_custom_call.1} parent=63 // pred_region
          %474 = dma.done [#allocation9], 512
        $region80: #{tpu_custom_call.1} parent=63 // pred_fallthru
          _
        // Predicated region
        $region81: #{tpu_custom_call.1} parent=63 // pred_check
          %p475 = pneg %p169
        $region82: #{tpu_custom_call.1} parent=63 // pred_check_branch
          %477 = sbr.rel (%p475) target = $region84
        $region83: #{tpu_custom_call.1} parent=63 // pred_region
          %478 = dma.done [#allocation9], 512
        $region84: #{tpu_custom_call.1} parent=63 // pred_fallthru
          _
        // Predicated region
        $region85: #{tpu_custom_call.1} parent=63 // pred_check
          %p479 = pneg %p211
        $region86: #{tpu_custom_call.1} parent=63 // pred_check_branch
          %481 = sbr.rel (%p479) target = $region88
        $region87: #{tpu_custom_call.1} parent=63 // pred_region
          %482 = dma.done [#allocation12], 512
        $region88: #{tpu_custom_call.1} parent=63 // pred_fallthru
          _
        // Predicated region
        $region89: #{tpu_custom_call.1} parent=63 // pred_check
          %p483 = pneg %p253
        $region90: #{tpu_custom_call.1} parent=63 // pred_check_branch
          %485 = sbr.rel (%p483) target = $region92
        $region91: #{tpu_custom_call.1} parent=63 // pred_region
          %486 = dma.done [#allocation12], 512
        $region92: #{tpu_custom_call.1} parent=63 // pred_fallthru
          _
        %s487 = sand.u32 %s41, 1
        %s488 = scalar_lea.sflag [#allocation3], %s487
        %s489 = sand.u32 %s41, 1
        %s490 = smul.addr %s489, 8
        %s491 = scalar_lea.vmem [#allocation2], %s490
        %p492 = pneg %p54
        %p493 = pneg %p51
        %s494 = sand.u32 %s33, 1
        %s495 = scalar_lea.sflag [#allocation6], %s494
        %s496 = sand.u32 %s67, 1
        %s497 = smul.addr %s496, 8
        %s498 = scalar_lea.vmem [#allocation5], %s497
        %p499 = pneg %p80
        %p500 = pneg %p77
        %s501 = sand.u32 %s33, 1
        %s502 = scalar_lea.sflag [#allocation6], %s501
        %s503 = sand.u32 %s93, 1
        %s504 = smul.addr %s503, 8
        %s505 = scalar_lea.vmem [#allocation7], %s504
        %p506 = pneg %p106
        %p507 = pneg %p103
        %p508 = pneg %p127
        %p509 = pneg %p124
        %p510 = pneg %p148
        %p511 = pneg %p145
        %p512 = pneg %p169
        %p513 = pneg %p166
        %p514 = pneg %p190
        %p515 = pneg %p187
        %p516 = pneg %p211
        %p517 = pneg %p208
        %p518 = pneg %p232
        %p519 = pneg %p229
        %p520 = pneg %p253
        %p521 = pneg %p250
        %p522 = pneg %p274
        %p523 = pneg %p271
        %p524 = pneg %p300
        %p525 = pneg %p297
        %s526 = sand.u32 %s287, 1
        %s527 = scalar_lea.sflag [#allocation4], %s526
        %s528 = sand.u32 %s287, 1
        %s529 = smul.addr %s528, 8
        %s530 = scalar_lea.vmem [#allocation14], %s529
        %v531 = vld [vmem:[%s448] sm:$0xff]
        %v532 = vld [vmem:[%s457] sm:$0xff]
        %v533 = vld [vmem:[%s466] sm:$0xff]
        %v534 = vld [vmem:[#allocation8] sm:$0xff]
        %v535 = vld [vmem:[#allocation8 + $0x8] sm:$0xff]
        %v536 = vld [vmem:[#allocation8 + $0x10] sm:$0xff]
        %v537 = vld [vmem:[#allocation8 + $0x18] sm:$0xff]
        %v538 = vld [vmem:[%s4] sm:$0x1]
        %v540 = vlaneseq
        %v541 = vshrl.u32 %v540, 7
        %v542 = vsub.s32 0, %v541
        %v543 = vrot.slane %v538, %v542
        %vm545 = vcmask 261120
        %v547 = vsel %vm545, %v531, 0
        %549 = vmatprep.subr.mxu0 0.0
        %550 = vmatpush1.msra.mxu0 0.0
        %551 = vmatprep.subr.mxu0 0.0
        %552 = vmatpush1.msra.mxu0 0.0
        %553 = vmatprep.subr.mxu0 0.0
        %554 = vmatpush1.msra.mxu0 0.0
        %555 = vmatprep.subr.mxu0 0.0
        %556 = vmatpush1.msra.mxu0 0.0
        %557 = vmatprep.subr.mxu0 0.0
        %558 = vmatpush1.msra.mxu0 0.0
        %559 = vmatprep.subr.mxu0 0.0
        %560 = vmatpush1.msra.mxu0 0.0
        %561 = vmatprep.subr.mxu0 0.0
        %562 = vmatpush1.msra.mxu0 0.0
        %563 = vmatprep.subr.mxu0 0.0
        %564 = vmatpush1.msra.mxu0 0.0
        %565 = vmatprep.subr.mxu0 0.0
        %566 = vmatpush1.msra.mxu0 0.0
        %567 = vmatprep.subr.mxu0 0.0
        %568 = vmatpush1.msra.mxu0 0.0
        %569 = vmatprep.subr.mxu0 0.0
        %570 = vmatpush1.msra.mxu0 0.0
        %571 = vmatprep.subr.mxu0 0.0
        %572 = vmatpush1.msra.mxu0 0.0
        %573 = vmatprep.subr.mxu0 0.0
        %574 = vmatpush1.msra.mxu0 %v537
        %575 = vmatprep.subr.mxu0 0.0
        %576 = vmatpush1.msra.mxu0 %v536
        %577 = vmatprep.subr.mxu0 0.0
        %578 = vmatpush1.msra.mxu0 %v535
        %579 = vmatprep.subr.mxu0 0.0
        %580 = vmatpush1.msra.mxu0 %v534
        %581 = vmatprep.subr.mxu0 0.0
        %582 = vmatpush2.msra.mxu0 0.0
        %583 = vmatprep.subr.mxu0 0.0
        %584 = vmatpush2.msra.mxu0 0.0
        %585 = vmatprep.subr.mxu0 0.0
        %586 = vmatpush2.msra.mxu0 0.0
        %587 = vmatprep.subr.mxu0 0.0
        %588 = vmatpush2.msra.mxu0 0.0
        %589 = vmatprep.subr.mxu0 0.0
        %590 = vmatpush2.msra.mxu0 0.0
        %591 = vmatprep.subr.mxu0 0.0
        %592 = vmatpush2.msra.mxu0 0.0
        %593 = vmatprep.subr.mxu0 0.0
        %594 = vmatpush2.msra.mxu0 0.0
        %595 = vmatprep.subr.mxu0 0.0
        %596 = vmatpush2.msra.mxu0 0.0
        %597 = vmatprep.subr.mxu0 0.0
        %598 = vmatpush2.msra.mxu0 0.0
        %599 = vmatprep.subr.mxu0 0.0
        %600 = vmatpush2.msra.mxu0 0.0
        %601 = vmatprep.subr.mxu0 0.0
        %602 = vmatpush2.msra.mxu0 0.0
        %603 = vmatprep.subr.mxu0 0.0
        %604 = vmatpush2.msra.mxu0 0.0
        %605 = vmatprep.subr.mxu0 0.0
        %606 = vmatpush2.msra.mxu0 0.0
        %607 = vmatprep.subr.mxu0 0.0
        %608 = vmatpush2.msra.mxu0 0.0
        %609 = vmatprep.subr.mxu0 0.0
        %610 = vmatpush2.msra.mxu0 0.0
        %611 = vmatprep.subr.mxu0 0.0
        %612 = vmatpush2.msra.mxu0 0.0
        %613 = vmatprep.mubr.f32.mxu0 0.0
        %614 = vmatmul.mubr.f32.gmra.mxu0 %v547
        %v615 = vpop.f32.mrf.mxu0
        %v616 = vadd.f32 %v543, %v615
        %v617 = vpop.f32.mrf.mxu0
        %618 = vdwg.mxu0
        %v619 = vmul.f32 %v616, 0.35355338
        %v620 = vld [vmem:[#allocation10] sm:$0xff]
        %v621 = vld [vmem:[#allocation10 + $0x8] sm:$0xff]
        %v622 = vld [vmem:[#allocation10 + $0x10] sm:$0xff]
        %v623 = vld [vmem:[#allocation10 + $0x18] sm:$0xff]
        %v624 = vld [vmem:[%s6] sm:$0x1]
        %v626 = vlaneseq
        %v627 = vshrl.u32 %v626, 7
        %v628 = vsub.s32 0, %v627
        %v629 = vrot.slane %v624, %v628
        %v632 = vsel %vm545, %v532, 0
        %634 = vmatprep.subr.mxu0 0.0
        %635 = vmatpush1.msra.mxu0 0.0
        %636 = vmatprep.subr.mxu0 0.0
        %637 = vmatpush1.msra.mxu0 0.0
        %638 = vmatprep.subr.mxu0 0.0
        %639 = vmatpush1.msra.mxu0 0.0
        %640 = vmatprep.subr.mxu0 0.0
        %641 = vmatpush1.msra.mxu0 0.0
        %642 = vmatprep.subr.mxu0 0.0
        %643 = vmatpush1.msra.mxu0 0.0
        %644 = vmatprep.subr.mxu0 0.0
        %645 = vmatpush1.msra.mxu0 0.0
        %646 = vmatprep.subr.mxu0 0.0
        %647 = vmatpush1.msra.mxu0 0.0
        %648 = vmatprep.subr.mxu0 0.0
        %649 = vmatpush1.msra.mxu0 0.0
        %650 = vmatprep.subr.mxu0 0.0
        %651 = vmatpush1.msra.mxu0 0.0
        %652 = vmatprep.subr.mxu0 0.0
        %653 = vmatpush1.msra.mxu0 0.0
        %654 = vmatprep.subr.mxu0 0.0
        %655 = vmatpush1.msra.mxu0 0.0
        %656 = vmatprep.subr.mxu0 0.0
        %657 = vmatpush1.msra.mxu0 0.0
        %658 = vmatprep.subr.mxu0 0.0
        %659 = vmatpush1.msra.mxu0 %v623
        %660 = vmatprep.subr.mxu0 0.0
        %661 = vmatpush1.msra.mxu0 %v622
        %662 = vmatprep.subr.mxu0 0.0
        %663 = vmatpush1.msra.mxu0 %v621
        %664 = vmatprep.subr.mxu0 0.0
        %665 = vmatpush1.msra.mxu0 %v620
        %666 = vmatprep.subr.mxu0 0.0
        %667 = vmatpush2.msra.mxu0 0.0
        %668 = vmatprep.subr.mxu0 0.0
        %669 = vmatpush2.msra.mxu0 0.0
        %670 = vmatprep.subr.mxu0 0.0
        %671 = vmatpush2.msra.mxu0 0.0
        %672 = vmatprep.subr.mxu0 0.0
        %673 = vmatpush2.msra.mxu0 0.0
        %674 = vmatprep.subr.mxu0 0.0
        %675 = vmatpush2.msra.mxu0 0.0
        %676 = vmatprep.subr.mxu0 0.0
        %677 = vmatpush2.msra.mxu0 0.0
        %678 = vmatprep.subr.mxu0 0.0
        %679 = vmatpush2.msra.mxu0 0.0
        %680 = vmatprep.subr.mxu0 0.0
        %681 = vmatpush2.msra.mxu0 0.0
        %682 = vmatprep.subr.mxu0 0.0
        %683 = vmatpush2.msra.mxu0 0.0
        %684 = vmatprep.subr.mxu0 0.0
        %685 = vmatpush2.msra.mxu0 0.0
        %686 = vmatprep.subr.mxu0 0.0
        %687 = vmatpush2.msra.mxu0 0.0
        %688 = vmatprep.subr.mxu0 0.0
        %689 = vmatpush2.msra.mxu0 0.0
        %690 = vmatprep.subr.mxu0 0.0
        %691 = vmatpush2.msra.mxu0 0.0
        %692 = vmatprep.subr.mxu0 0.0
        %693 = vmatpush2.msra.mxu0 0.0
        %694 = vmatprep.subr.mxu0 0.0
        %695 = vmatpush2.msra.mxu0 0.0
        %696 = vmatprep.subr.mxu0 0.0
        %697 = vmatpush2.msra.mxu0 0.0
        %698 = vmatprep.mubr.f32.mxu0 0.0
        %699 = vmatmul.mubr.f32.gmra.mxu0 %v632
        %v700 = vpop.f32.mrf.mxu0
        %v701 = vadd.f32 %v629, %v700
        %v702 = vpop.f32.mrf.mxu0
        %703 = vdwg.mxu0
        %v704 = vld [vmem:[#allocation11] sm:$0xff]
        %v705 = vld [vmem:[#allocation11 + $0x8] sm:$0xff]
        %v706 = vld [vmem:[#allocation11 + $0x10] sm:$0xff]
        %v707 = vld [vmem:[#allocation11 + $0x18] sm:$0xff]
        %v708 = vld [vmem:[%s8] sm:$0x1]
        %v710 = vlaneseq
        %v711 = vshrl.u32 %v710, 7
        %v712 = vsub.s32 0, %v711
        %v713 = vrot.slane %v708, %v712
        %v716 = vsel %vm545, %v533, 0
        %718 = vmatprep.subr.mxu0 0.0
        %719 = vmatpush1.msra.mxu0 0.0
        %720 = vmatprep.subr.mxu0 0.0
        %721 = vmatpush1.msra.mxu0 0.0
        %722 = vmatprep.subr.mxu0 0.0
        %723 = vmatpush1.msra.mxu0 0.0
        %724 = vmatprep.subr.mxu0 0.0
        %725 = vmatpush1.msra.mxu0 0.0
        %726 = vmatprep.subr.mxu0 0.0
        %727 = vmatpush1.msra.mxu0 0.0
        %728 = vmatprep.subr.mxu0 0.0
        %729 = vmatpush1.msra.mxu0 0.0
        %730 = vmatprep.subr.mxu0 0.0
        %731 = vmatpush1.msra.mxu0 0.0
        %732 = vmatprep.subr.mxu0 0.0
        %733 = vmatpush1.msra.mxu0 0.0
        %734 = vmatprep.subr.mxu0 0.0
        %735 = vmatpush1.msra.mxu0 0.0
        %736 = vmatprep.subr.mxu0 0.0
        %737 = vmatpush1.msra.mxu0 0.0
        %738 = vmatprep.subr.mxu0 0.0
        %739 = vmatpush1.msra.mxu0 0.0
        %740 = vmatprep.subr.mxu0 0.0
        %741 = vmatpush1.msra.mxu0 0.0
        %742 = vmatprep.subr.mxu0 0.0
        %743 = vmatpush1.msra.mxu0 %v707
        %744 = vmatprep.subr.mxu0 0.0
        %745 = vmatpush1.msra.mxu0 %v706
        %746 = vmatprep.subr.mxu0 0.0
        %747 = vmatpush1.msra.mxu0 %v705
        %748 = vmatprep.subr.mxu0 0.0
        %749 = vmatpush1.msra.mxu0 %v704
        %750 = vmatprep.subr.mxu0 0.0
        %751 = vmatpush2.msra.mxu0 0.0
        %752 = vmatprep.subr.mxu0 0.0
        %753 = vmatpush2.msra.mxu0 0.0
        %754 = vmatprep.subr.mxu0 0.0
        %755 = vmatpush2.msra.mxu0 0.0
        %756 = vmatprep.subr.mxu0 0.0
        %757 = vmatpush2.msra.mxu0 0.0
        %758 = vmatprep.subr.mxu0 0.0
        %759 = vmatpush2.msra.mxu0 0.0
        %760 = vmatprep.subr.mxu0 0.0
        %761 = vmatpush2.msra.mxu0 0.0
        %762 = vmatprep.subr.mxu0 0.0
        %763 = vmatpush2.msra.mxu0 0.0
        %764 = vmatprep.subr.mxu0 0.0
        %765 = vmatpush2.msra.mxu0 0.0
        %766 = vmatprep.subr.mxu0 0.0
        %767 = vmatpush2.msra.mxu0 0.0
        %768 = vmatprep.subr.mxu0 0.0
        %769 = vmatpush2.msra.mxu0 0.0
        %770 = vmatprep.subr.mxu0 0.0
        %771 = vmatpush2.msra.mxu0 0.0
        %772 = vmatprep.subr.mxu0 0.0
        %773 = vmatpush2.msra.mxu0 0.0
        %774 = vmatprep.subr.mxu0 0.0
        %775 = vmatpush2.msra.mxu0 0.0
        %776 = vmatprep.subr.mxu0 0.0
        %777 = vmatpush2.msra.mxu0 0.0
        %778 = vmatprep.subr.mxu0 0.0
        %779 = vmatpush2.msra.mxu0 0.0
        %780 = vmatprep.subr.mxu0 0.0
        %781 = vmatpush2.msra.mxu0 0.0
        %782 = vmatprep.mubr.f32.mxu0 0.0
        %783 = vmatmul.mubr.f32.gmra.mxu0 %v716
        %v784 = vpop.f32.mrf.mxu0
        %v785 = vadd.f32 %v713, %v784
        %v786 = vpop.f32.mrf.mxu0
        %787 = vdwg.mxu0
        %v788 = vld [vmem:[#allocation13] sm:$0xff]
        %vm789 = vcmask 64512
        %v791 = vsel %vm789, %v619, 0
        %v794 = vsel %vm789, %v701, 0
        %796 = vmatprep.subr.mxu0 0.0
        %797 = vmatpush1.xpose.msra.mxu0 0.0
        %798 = vmatprep.subr.mxu0 0.0
        %799 = vmatpush1.xpose.msra.mxu0 0.0
        %800 = vmatprep.subr.mxu0 0.0
        %801 = vmatpush1.xpose.msra.mxu0 0.0
        %802 = vmatprep.subr.mxu0 0.0
        %803 = vmatpush1.xpose.msra.mxu0 0.0
        %804 = vmatprep.subr.mxu0 0.0
        %805 = vmatpush1.xpose.msra.mxu0 0.0
        %806 = vmatprep.subr.mxu0 0.0
        %807 = vmatpush1.xpose.msra.mxu0 0.0
        %808 = vmatprep.subr.mxu0 0.0
        %809 = vmatpush1.xpose.msra.mxu0 0.0
        %810 = vmatprep.subr.mxu0 0.0
        %811 = vmatpush1.xpose.msra.mxu0 0.0
        %812 = vmatprep.subr.mxu0 0.0
        %813 = vmatpush1.xpose.msra.mxu0 0.0
        %814 = vmatprep.subr.mxu0 0.0
        %815 = vmatpush1.xpose.msra.mxu0 0.0
        %816 = vmatprep.subr.mxu0 0.0
        %817 = vmatpush1.xpose.msra.mxu0 0.0
        %818 = vmatprep.subr.mxu0 0.0
        %819 = vmatpush1.xpose.msra.mxu0 0.0
        %820 = vmatprep.subr.mxu0 0.0
        %821 = vmatpush1.xpose.msra.mxu0 0.0
        %822 = vmatprep.subr.mxu0 0.0
        %823 = vmatpush1.xpose.msra.mxu0 0.0
        %824 = vmatprep.subr.mxu0 0.0
        %825 = vmatpush1.xpose.msra.mxu0 0.0
        %826 = vmatprep.subr.mxu0 0.0
        %827 = vmatpush1.xpose.msra.mxu0 %v794
        %828 = vmatprep.subr.mxu0 0.0
        %829 = vmatpush2.xpose.msra.mxu0 0.0
        %830 = vmatprep.subr.mxu0 0.0
        %831 = vmatpush2.xpose.msra.mxu0 0.0
        %832 = vmatprep.subr.mxu0 0.0
        %833 = vmatpush2.xpose.msra.mxu0 0.0
        %834 = vmatprep.subr.mxu0 0.0
        %835 = vmatpush2.xpose.msra.mxu0 0.0
        %836 = vmatprep.subr.mxu0 0.0
        %837 = vmatpush2.xpose.msra.mxu0 0.0
        %838 = vmatprep.subr.mxu0 0.0
        %839 = vmatpush2.xpose.msra.mxu0 0.0
        %840 = vmatprep.subr.mxu0 0.0
        %841 = vmatpush2.xpose.msra.mxu0 0.0
        %842 = vmatprep.subr.mxu0 0.0
        %843 = vmatpush2.xpose.msra.mxu0 0.0
        %844 = vmatprep.subr.mxu0 0.0
        %845 = vmatpush2.xpose.msra.mxu0 0.0
        %846 = vmatprep.subr.mxu0 0.0
        %847 = vmatpush2.xpose.msra.mxu0 0.0
        %848 = vmatprep.subr.mxu0 0.0
        %849 = vmatpush2.xpose.msra.mxu0 0.0
        %850 = vmatprep.subr.mxu0 0.0
        %851 = vmatpush2.xpose.msra.mxu0 0.0
        %852 = vmatprep.subr.mxu0 0.0
        %853 = vmatpush2.xpose.msra.mxu0 0.0
        %854 = vmatprep.subr.mxu0 0.0
        %855 = vmatpush2.xpose.msra.mxu0 0.0
        %856 = vmatprep.subr.mxu0 0.0
        %857 = vmatpush2.xpose.msra.mxu0 0.0
        %858 = vmatprep.subr.mxu0 0.0
        %859 = vmatpush2.xpose.msra.mxu0 0.0
        %860 = vmatprep.mubr.f32.mxu0 0.0
        %861 = vmatmul.mubr.f32.gmra.mxu0 %v791
        %v862 = vpop.f32.mrf.mxu0
        %v863 = vadd.f32 0.0, %v862
        %v864 = vpop.f32.mrf.mxu0
        %865 = vdwg.mxu0
        %v866 = vsel %vm789, %v863, -inf
        %867 = vmax.xlane.f32.xlu0 %v866
        %v868 = vpop.xlane.xlu0 %867
        %v869 = vsub.f32 %v863, %v868
        %v870 = vmul.f32 %v869, 1.442695
        %v871 = vpow.pop %v870
        %v872 = vsel %vm789, %v871, 0.0
        %873 = vadd.xlane.f32.xlu0 %v872
        %v874 = vpop.xlane.xlu0 %873
        %v876 = vsel %vm789, %v871, 0
        %878 = vmatprep.subr.mxu0 0.0
        %879 = vmatpush1.msra.mxu0 0.0
        %880 = vmatprep.subr.mxu0 0.0
        %881 = vmatpush1.msra.mxu0 0.0
        %882 = vmatprep.subr.mxu0 0.0
        %883 = vmatpush1.msra.mxu0 0.0
        %884 = vmatprep.subr.mxu0 0.0
        %885 = vmatpush1.msra.mxu0 0.0
        %886 = vmatprep.subr.mxu0 0.0
        %887 = vmatpush1.msra.mxu0 0.0
        %888 = vmatprep.subr.mxu0 0.0
        %889 = vmatpush1.msra.mxu0 0.0
        %890 = vmatprep.subr.mxu0 0.0
        %891 = vmatpush1.msra.mxu0 0.0
        %892 = vmatprep.subr.mxu0 0.0
        %893 = vmatpush1.msra.mxu0 0.0
        %894 = vmatprep.subr.mxu0 0.0
        %895 = vmatpush1.msra.mxu0 0.0
        %896 = vmatprep.subr.mxu0 0.0
        %897 = vmatpush1.msra.mxu0 0.0
        %898 = vmatprep.subr.mxu0 0.0
        %899 = vmatpush1.msra.mxu0 0.0
        %900 = vmatprep.subr.mxu0 0.0
        %901 = vmatpush1.msra.mxu0 0.0
        %902 = vmatprep.subr.mxu0 0.0
        %903 = vmatpush1.msra.mxu0 0.0
        %904 = vmatprep.subr.mxu0 0.0
        %905 = vmatpush1.msra.mxu0 0.0
        %906 = vmatprep.subr.mxu0 0.0
        %907 = vmatpush1.msra.mxu0 0.0
        %908 = vmatprep.subr.mxu0 0.0
        %909 = vmatpush1.msra.mxu0 %v785
        %910 = vmatprep.subr.mxu0 0.0
        %911 = vmatpush2.msra.mxu0 0.0
        %912 = vmatprep.subr.mxu0 0.0
        %913 = vmatpush2.msra.mxu0 0.0
        %914 = vmatprep.subr.mxu0 0.0
        %915 = vmatpush2.msra.mxu0 0.0
        %916 = vmatprep.subr.mxu0 0.0
        %917 = vmatpush2.msra.mxu0 0.0
        %918 = vmatprep.subr.mxu0 0.0
        %919 = vmatpush2.msra.mxu0 0.0
        %920 = vmatprep.subr.mxu0 0.0
        %921 = vmatpush2.msra.mxu0 0.0
        %922 = vmatprep.subr.mxu0 0.0
        %923 = vmatpush2.msra.mxu0 0.0
        %924 = vmatprep.subr.mxu0 0.0
        %925 = vmatpush2.msra.mxu0 0.0
        %926 = vmatprep.subr.mxu0 0.0
        %927 = vmatpush2.msra.mxu0 0.0
        %928 = vmatprep.subr.mxu0 0.0
        %929 = vmatpush2.msra.mxu0 0.0
        %930 = vmatprep.subr.mxu0 0.0
        %931 = vmatpush2.msra.mxu0 0.0
        %932 = vmatprep.subr.mxu0 0.0
        %933 = vmatpush2.msra.mxu0 0.0
        %934 = vmatprep.subr.mxu0 0.0
        %935 = vmatpush2.msra.mxu0 0.0
        %936 = vmatprep.subr.mxu0 0.0
        %937 = vmatpush2.msra.mxu0 0.0
        %938 = vmatprep.subr.mxu0 0.0
        %939 = vmatpush2.msra.mxu0 0.0
        %940 = vmatprep.subr.mxu0 0.0
        %941 = vmatpush2.msra.mxu0 0.0
        %942 = vmatprep.mubr.f32.mxu0 0.0
        %943 = vmatmul.mubr.f32.gmra.mxu0 %v876
        %v944 = vpop.f32.mrf.mxu0
        %v945 = vadd.f32 0.0, %v944
        %v946 = vpop.f32.mrf.mxu0
        %947 = vdwg.mxu0
        %v948 = vrcp.pop %v874
        %v949 = vmul.f32 %v945, %v948
        %v950 = vld [vmem:[#allocation13 + $0x8] sm:$0xff]
        %951 = vrot.lane.b32.xlu0 %v619, 120
        %v952 = vpop.permute.xlu0 %951
        %953 = vrot.lane.b32.xlu0 %v701, 120
        %v954 = vpop.permute.xlu0 %953
        %v955 = vsel %vm789, %v952, 0
        %v957 = vsel %vm789, %v954, 0
        %959 = vmatprep.subr.mxu0 0.0
        %960 = vmatpush1.xpose.msra.mxu0 0.0
        %961 = vmatprep.subr.mxu0 0.0
        %962 = vmatpush1.xpose.msra.mxu0 0.0
        %963 = vmatprep.subr.mxu0 0.0
        %964 = vmatpush1.xpose.msra.mxu0 0.0
        %965 = vmatprep.subr.mxu0 0.0
        %966 = vmatpush1.xpose.msra.mxu0 0.0
        %967 = vmatprep.subr.mxu0 0.0
        %968 = vmatpush1.xpose.msra.mxu0 0.0
        %969 = vmatprep.subr.mxu0 0.0
        %970 = vmatpush1.xpose.msra.mxu0 0.0
        %971 = vmatprep.subr.mxu0 0.0
        %972 = vmatpush1.xpose.msra.mxu0 0.0
        %973 = vmatprep.subr.mxu0 0.0
        %974 = vmatpush1.xpose.msra.mxu0 0.0
        %975 = vmatprep.subr.mxu0 0.0
        %976 = vmatpush1.xpose.msra.mxu0 0.0
        %977 = vmatprep.subr.mxu0 0.0
        %978 = vmatpush1.xpose.msra.mxu0 0.0
        %979 = vmatprep.subr.mxu0 0.0
        %980 = vmatpush1.xpose.msra.mxu0 0.0
        %981 = vmatprep.subr.mxu0 0.0
        %982 = vmatpush1.xpose.msra.mxu0 0.0
        %983 = vmatprep.subr.mxu0 0.0
        %984 = vmatpush1.xpose.msra.mxu0 0.0
        %985 = vmatprep.subr.mxu0 0.0
        %986 = vmatpush1.xpose.msra.mxu0 0.0
        %987 = vmatprep.subr.mxu0 0.0
        %988 = vmatpush1.xpose.msra.mxu0 0.0
        %989 = vmatprep.subr.mxu0 0.0
        %990 = vmatpush1.xpose.msra.mxu0 %v957
        %991 = vmatprep.subr.mxu0 0.0
        %992 = vmatpush2.xpose.msra.mxu0 0.0
        %993 = vmatprep.subr.mxu0 0.0
        %994 = vmatpush2.xpose.msra.mxu0 0.0
        %995 = vmatprep.subr.mxu0 0.0
        %996 = vmatpush2.xpose.msra.mxu0 0.0
        %997 = vmatprep.subr.mxu0 0.0
        %998 = vmatpush2.xpose.msra.mxu0 0.0
        %999 = vmatprep.subr.mxu0 0.0
        %1000 = vmatpush2.xpose.msra.mxu0 0.0
        %1001 = vmatprep.subr.mxu0 0.0
        %1002 = vmatpush2.xpose.msra.mxu0 0.0
        %1003 = vmatprep.subr.mxu0 0.0
        %1004 = vmatpush2.xpose.msra.mxu0 0.0
        %1005 = vmatprep.subr.mxu0 0.0
        %1006 = vmatpush2.xpose.msra.mxu0 0.0
        %1007 = vmatprep.subr.mxu0 0.0
        %1008 = vmatpush2.xpose.msra.mxu0 0.0
        %1009 = vmatprep.subr.mxu0 0.0
        %1010 = vmatpush2.xpose.msra.mxu0 0.0
        %1011 = vmatprep.subr.mxu0 0.0
        %1012 = vmatpush2.xpose.msra.mxu0 0.0
        %1013 = vmatprep.subr.mxu0 0.0
        %1014 = vmatpush2.xpose.msra.mxu0 0.0
        %1015 = vmatprep.subr.mxu0 0.0
        %1016 = vmatpush2.xpose.msra.mxu0 0.0
        %1017 = vmatprep.subr.mxu0 0.0
        %1018 = vmatpush2.xpose.msra.mxu0 0.0
        %1019 = vmatprep.subr.mxu0 0.0
        %1020 = vmatpush2.xpose.msra.mxu0 0.0
        %1021 = vmatprep.subr.mxu0 0.0
        %1022 = vmatpush2.xpose.msra.mxu0 0.0
        %1023 = vmatprep.mubr.f32.mxu0 0.0
        %1024 = vmatmul.mubr.f32.gmra.mxu0 %v955
        %v1025 = vpop.f32.mrf.mxu0
        %v1026 = vadd.f32 0.0, %v1025
        %v1027 = vpop.f32.mrf.mxu0
        %1028 = vdwg.mxu0
        %v1029 = vsel %vm789, %v1026, -inf
        %1030 = vmax.xlane.f32.xlu0 %v1029
        %v1031 = vpop.xlane.xlu0 %1030
        %v1032 = vsub.f32 %v1026, %v1031
        %v1033 = vmul.f32 %v1032, 1.442695
        %v1034 = vpow.pop %v1033
        %v1035 = vsel %vm789, %v1034, 0.0
        %1036 = vadd.xlane.f32.xlu0 %v1035
        %v1037 = vpop.xlane.xlu0 %1036
        %1039 = vrot.lane.b32.xlu0 %v785, 120
        %v1040 = vpop.permute.xlu0 %1039
        %v1043 = vsel %vm789, %v1034, 0
        %1045 = vmatprep.subr.mxu0 0.0
        %1046 = vmatpush1.msra.mxu0 0.0
        %1047 = vmatprep.subr.mxu0 0.0
        %1048 = vmatpush1.msra.mxu0 0.0
        %1049 = vmatprep.subr.mxu0 0.0
        %1050 = vmatpush1.msra.mxu0 0.0
        %1051 = vmatprep.subr.mxu0 0.0
        %1052 = vmatpush1.msra.mxu0 0.0
        %1053 = vmatprep.subr.mxu0 0.0
        %1054 = vmatpush1.msra.mxu0 0.0
        %1055 = vmatprep.subr.mxu0 0.0
        %1056 = vmatpush1.msra.mxu0 0.0
        %1057 = vmatprep.subr.mxu0 0.0
        %1058 = vmatpush1.msra.mxu0 0.0
        %1059 = vmatprep.subr.mxu0 0.0
        %1060 = vmatpush1.msra.mxu0 0.0
        %1061 = vmatprep.subr.mxu0 0.0
        %1062 = vmatpush1.msra.mxu0 0.0
        %1063 = vmatprep.subr.mxu0 0.0
        %1064 = vmatpush1.msra.mxu0 0.0
        %1065 = vmatprep.subr.mxu0 0.0
        %1066 = vmatpush1.msra.mxu0 0.0
        %1067 = vmatprep.subr.mxu0 0.0
        %1068 = vmatpush1.msra.mxu0 0.0
        %1069 = vmatprep.subr.mxu0 0.0
        %1070 = vmatpush1.msra.mxu0 0.0
        %1071 = vmatprep.subr.mxu0 0.0
        %1072 = vmatpush1.msra.mxu0 0.0
        %1073 = vmatprep.subr.mxu0 0.0
        %1074 = vmatpush1.msra.mxu0 0.0
        %1075 = vmatprep.subr.mxu0 0.0
        %1076 = vmatpush1.msra.mxu0 %v1040
        %1077 = vmatprep.subr.mxu0 0.0
        %1078 = vmatpush2.msra.mxu0 0.0
        %1079 = vmatprep.subr.mxu0 0.0
        %1080 = vmatpush2.msra.mxu0 0.0
        %1081 = vmatprep.subr.mxu0 0.0
        %1082 = vmatpush2.msra.mxu0 0.0
        %1083 = vmatprep.subr.mxu0 0.0
        %1084 = vmatpush2.msra.mxu0 0.0
        %1085 = vmatprep.subr.mxu0 0.0
        %1086 = vmatpush2.msra.mxu0 0.0
        %1087 = vmatprep.subr.mxu0 0.0
        %1088 = vmatpush2.msra.mxu0 0.0
        %1089 = vmatprep.subr.mxu0 0.0
        %1090 = vmatpush2.msra.mxu0 0.0
        %1091 = vmatprep.subr.mxu0 0.0
        %1092 = vmatpush2.msra.mxu0 0.0
        %1093 = vmatprep.subr.mxu0 0.0
        %1094 = vmatpush2.msra.mxu0 0.0
        %1095 = vmatprep.subr.mxu0 0.0
        %1096 = vmatpush2.msra.mxu0 0.0
        %1097 = vmatprep.subr.mxu0 0.0
        %1098 = vmatpush2.msra.mxu0 0.0
        %1099 = vmatprep.subr.mxu0 0.0
        %1100 = vmatpush2.msra.mxu0 0.0
        %1101 = vmatprep.subr.mxu0 0.0
        %1102 = vmatpush2.msra.mxu0 0.0
        %1103 = vmatprep.subr.mxu0 0.0
        %1104 = vmatpush2.msra.mxu0 0.0
        %1105 = vmatprep.subr.mxu0 0.0
        %1106 = vmatpush2.msra.mxu0 0.0
        %1107 = vmatprep.subr.mxu0 0.0
        %1108 = vmatpush2.msra.mxu0 0.0
        %1109 = vmatprep.mubr.f32.mxu0 0.0
        %1110 = vmatmul.mubr.f32.gmra.mxu0 %v1043
        %v1111 = vpop.f32.mrf.mxu0
        %v1112 = vadd.f32 0.0, %v1111
        %v1113 = vpop.f32.mrf.mxu0
        %1114 = vdwg.mxu0
        %v1115 = vrcp.pop %v1037
        %v1116 = vmul.f32 %v1112, %v1115
        %v1118 = vsel %vm789, %v1116, 0
        %1120 = vmatprep.subr.mxu0 0.0
        %1121 = vmatpush1.msra.mxu0 0.0
        %1122 = vmatprep.subr.mxu0 0.0
        %1123 = vmatpush1.msra.mxu0 0.0
        %1124 = vmatprep.subr.mxu0 0.0
        %1125 = vmatpush1.msra.mxu0 0.0
        %1126 = vmatprep.subr.mxu0 0.0
        %1127 = vmatpush1.msra.mxu0 0.0
        %1128 = vmatprep.subr.mxu0 0.0
        %1129 = vmatpush1.msra.mxu0 0.0
        %1130 = vmatprep.subr.mxu0 0.0
        %1131 = vmatpush1.msra.mxu0 0.0
        %1132 = vmatprep.subr.mxu0 0.0
        %1133 = vmatpush1.msra.mxu0 0.0
        %1134 = vmatprep.subr.mxu0 0.0
        %1135 = vmatpush1.msra.mxu0 0.0
        %1136 = vmatprep.subr.mxu0 0.0
        %1137 = vmatpush1.msra.mxu0 0.0
        %1138 = vmatprep.subr.mxu0 0.0
        %1139 = vmatpush1.msra.mxu0 0.0
        %1140 = vmatprep.subr.mxu0 0.0
        %1141 = vmatpush1.msra.mxu0 0.0
        %1142 = vmatprep.subr.mxu0 0.0
        %1143 = vmatpush1.msra.mxu0 0.0
        %1144 = vmatprep.subr.mxu0 0.0
        %1145 = vmatpush1.msra.mxu0 0.0
        %1146 = vmatprep.subr.mxu0 0.0
        %1147 = vmatpush1.msra.mxu0 0.0
        %1148 = vmatprep.subr.mxu0 0.0
        %1149 = vmatpush1.msra.mxu0 0.0
        %1150 = vmatprep.subr.mxu0 0.0
        %1151 = vmatpush1.msra.mxu0 %v950
        %1152 = vmatprep.subr.mxu0 0.0
        %1153 = vmatpush2.msra.mxu0 0.0
        %1154 = vmatprep.subr.mxu0 0.0
        %1155 = vmatpush2.msra.mxu0 0.0
        %1156 = vmatprep.subr.mxu0 0.0
        %1157 = vmatpush2.msra.mxu0 0.0
        %1158 = vmatprep.subr.mxu0 0.0
        %1159 = vmatpush2.msra.mxu0 0.0
        %1160 = vmatprep.subr.mxu0 0.0
        %1161 = vmatpush2.msra.mxu0 0.0
        %1162 = vmatprep.subr.mxu0 0.0
        %1163 = vmatpush2.msra.mxu0 0.0
        %1164 = vmatprep.subr.mxu0 0.0
        %1165 = vmatpush2.msra.mxu0 0.0
        %1166 = vmatprep.subr.mxu0 0.0
        %1167 = vmatpush2.msra.mxu0 0.0
        %1168 = vmatprep.subr.mxu0 0.0
        %1169 = vmatpush2.msra.mxu0 0.0
        %1170 = vmatprep.subr.mxu0 0.0
        %1171 = vmatpush2.msra.mxu0 0.0
        %1172 = vmatprep.subr.mxu0 0.0
        %1173 = vmatpush2.msra.mxu0 0.0
        %1174 = vmatprep.subr.mxu0 0.0
        %1175 = vmatpush2.msra.mxu0 0.0
        %1176 = vmatprep.subr.mxu0 0.0
        %1177 = vmatpush2.msra.mxu0 0.0
        %1178 = vmatprep.subr.mxu0 0.0
        %1179 = vmatpush2.msra.mxu0 0.0
        %1180 = vmatprep.subr.mxu0 0.0
        %1181 = vmatpush2.msra.mxu0 0.0
        %1182 = vmatprep.subr.mxu0 0.0
        %1183 = vmatpush2.msra.mxu0 0.0
        %1184 = vmatprep.mubr.f32.mxu0 0.0
        %1185 = vmatmul.mubr.f32.gmra.mxu0 %v1118
        %v1186 = vpop.f32.mrf.mxu0
        %v1187 = vadd.f32 0.0, %v1186
        %v1188 = vpop.f32.mrf.mxu0
        %1189 = vdwg.mxu0
        %v1191 = vsel %vm789, %v949, 0
        %1193 = vmatprep.subr.mxu0 0.0
        %1194 = vmatpush1.msra.mxu0 0.0
        %1195 = vmatprep.subr.mxu0 0.0
        %1196 = vmatpush1.msra.mxu0 0.0
        %1197 = vmatprep.subr.mxu0 0.0
        %1198 = vmatpush1.msra.mxu0 0.0
        %1199 = vmatprep.subr.mxu0 0.0
        %1200 = vmatpush1.msra.mxu0 0.0
        %1201 = vmatprep.subr.mxu0 0.0
        %1202 = vmatpush1.msra.mxu0 0.0
        %1203 = vmatprep.subr.mxu0 0.0
        %1204 = vmatpush1.msra.mxu0 0.0
        %1205 = vmatprep.subr.mxu0 0.0
        %1206 = vmatpush1.msra.mxu0 0.0
        %1207 = vmatprep.subr.mxu0 0.0
        %1208 = vmatpush1.msra.mxu0 0.0
        %1209 = vmatprep.subr.mxu0 0.0
        %1210 = vmatpush1.msra.mxu0 0.0
        %1211 = vmatprep.subr.mxu0 0.0
        %1212 = vmatpush1.msra.mxu0 0.0
        %1213 = vmatprep.subr.mxu0 0.0
        %1214 = vmatpush1.msra.mxu0 0.0
        %1215 = vmatprep.subr.mxu0 0.0
        %1216 = vmatpush1.msra.mxu0 0.0
        %1217 = vmatprep.subr.mxu0 0.0
        %1218 = vmatpush1.msra.mxu0 0.0
        %1219 = vmatprep.subr.mxu0 0.0
        %1220 = vmatpush1.msra.mxu0 0.0
        %1221 = vmatprep.subr.mxu0 0.0
        %1222 = vmatpush1.msra.mxu0 0.0
        %1223 = vmatprep.subr.mxu0 0.0
        %1224 = vmatpush1.msra.mxu0 %v788
        %1225 = vmatprep.subr.mxu0 0.0
        %1226 = vmatpush2.msra.mxu0 0.0
        %1227 = vmatprep.subr.mxu0 0.0
        %1228 = vmatpush2.msra.mxu0 0.0
        %1229 = vmatprep.subr.mxu0 0.0
        %1230 = vmatpush2.msra.mxu0 0.0
        %1231 = vmatprep.subr.mxu0 0.0
        %1232 = vmatpush2.msra.mxu0 0.0
        %1233 = vmatprep.subr.mxu0 0.0
        %1234 = vmatpush2.msra.mxu0 0.0
        %1235 = vmatprep.subr.mxu0 0.0
        %1236 = vmatpush2.msra.mxu0 0.0
        %1237 = vmatprep.subr.mxu0 0.0
        %1238 = vmatpush2.msra.mxu0 0.0
        %1239 = vmatprep.subr.mxu0 0.0
        %1240 = vmatpush2.msra.mxu0 0.0
        %1241 = vmatprep.subr.mxu0 0.0
        %1242 = vmatpush2.msra.mxu0 0.0
        %1243 = vmatprep.subr.mxu0 0.0
        %1244 = vmatpush2.msra.mxu0 0.0
        %1245 = vmatprep.subr.mxu0 0.0
        %1246 = vmatpush2.msra.mxu0 0.0
        %1247 = vmatprep.subr.mxu0 0.0
        %1248 = vmatpush2.msra.mxu0 0.0
        %1249 = vmatprep.subr.mxu0 0.0
        %1250 = vmatpush2.msra.mxu0 0.0
        %1251 = vmatprep.subr.mxu0 0.0
        %1252 = vmatpush2.msra.mxu0 0.0
        %1253 = vmatprep.subr.mxu0 0.0
        %1254 = vmatpush2.msra.mxu0 0.0
        %1255 = vmatprep.subr.mxu0 0.0
        %1256 = vmatpush2.msra.mxu0 0.0
        %1257 = vmatprep.mubr.f32.mxu0 0.0
        %1258 = vmatmul.mubr.f32.gmra.mxu0 %v1191
        %v1259 = vpop.f32.mrf.mxu0
        %v1260 = vadd.f32 %v1187, %v1259
        %v1261 = vpop.f32.mrf.mxu0
        %1262 = vdwg.mxu0
        %v1263 = vld [vmem:[#allocation13 + $0x10] sm:$0xff]
        %1264 = vrot.lane.b32.xlu0 %v619, 112
        %v1265 = vpop.permute.xlu0 %1264
        %1266 = vrot.lane.b32.xlu0 %v701, 112
        %v1267 = vpop.permute.xlu0 %1266
        %v1268 = vsel %vm789, %v1265, 0
        %v1270 = vsel %vm789, %v1267, 0
        %1272 = vmatprep.subr.mxu0 0.0
        %1273 = vmatpush1.xpose.msra.mxu0 0.0
        %1274 = vmatprep.subr.mxu0 0.0
        %1275 = vmatpush1.xpose.msra.mxu0 0.0
        %1276 = vmatprep.subr.mxu0 0.0
        %1277 = vmatpush1.xpose.msra.mxu0 0.0
        %1278 = vmatprep.subr.mxu0 0.0
        %1279 = vmatpush1.xpose.msra.mxu0 0.0
        %1280 = vmatprep.subr.mxu0 0.0
        %1281 = vmatpush1.xpose.msra.mxu0 0.0
        %1282 = vmatprep.subr.mxu0 0.0
        %1283 = vmatpush1.xpose.msra.mxu0 0.0
        %1284 = vmatprep.subr.mxu0 0.0
        %1285 = vmatpush1.xpose.msra.mxu0 0.0
        %1286 = vmatprep.subr.mxu0 0.0
        %1287 = vmatpush1.xpose.msra.mxu0 0.0
        %1288 = vmatprep.subr.mxu0 0.0
        %1289 = vmatpush1.xpose.msra.mxu0 0.0
        %1290 = vmatprep.subr.mxu0 0.0
        %1291 = vmatpush1.xpose.msra.mxu0 0.0
        %1292 = vmatprep.subr.mxu0 0.0
        %1293 = vmatpush1.xpose.msra.mxu0 0.0
        %1294 = vmatprep.subr.mxu0 0.0
        %1295 = vmatpush1.xpose.msra.mxu0 0.0
        %1296 = vmatprep.subr.mxu0 0.0
        %1297 = vmatpush1.xpose.msra.mxu0 0.0
        %1298 = vmatprep.subr.mxu0 0.0
        %1299 = vmatpush1.xpose.msra.mxu0 0.0
        %1300 = vmatprep.subr.mxu0 0.0
        %1301 = vmatpush1.xpose.msra.mxu0 0.0
        %1302 = vmatprep.subr.mxu0 0.0
        %1303 = vmatpush1.xpose.msra.mxu0 %v1270
        %1304 = vmatprep.subr.mxu0 0.0
        %1305 = vmatpush2.xpose.msra.mxu0 0.0
        %1306 = vmatprep.subr.mxu0 0.0
        %1307 = vmatpush2.xpose.msra.mxu0 0.0
        %1308 = vmatprep.subr.mxu0 0.0
        %1309 = vmatpush2.xpose.msra.mxu0 0.0
        %1310 = vmatprep.subr.mxu0 0.0
        %1311 = vmatpush2.xpose.msra.mxu0 0.0
        %1312 = vmatprep.subr.mxu0 0.0
        %1313 = vmatpush2.xpose.msra.mxu0 0.0
        %1314 = vmatprep.subr.mxu0 0.0
        %1315 = vmatpush2.xpose.msra.mxu0 0.0
        %1316 = vmatprep.subr.mxu0 0.0
        %1317 = vmatpush2.xpose.msra.mxu0 0.0
        %1318 = vmatprep.subr.mxu0 0.0
        %1319 = vmatpush2.xpose.msra.mxu0 0.0
        %1320 = vmatprep.subr.mxu0 0.0
        %1321 = vmatpush2.xpose.msra.mxu0 0.0
        %1322 = vmatprep.subr.mxu0 0.0
        %1323 = vmatpush2.xpose.msra.mxu0 0.0
        %1324 = vmatprep.subr.mxu0 0.0
        %1325 = vmatpush2.xpose.msra.mxu0 0.0
        %1326 = vmatprep.subr.mxu0 0.0
        %1327 = vmatpush2.xpose.msra.mxu0 0.0
        %1328 = vmatprep.subr.mxu0 0.0
        %1329 = vmatpush2.xpose.msra.mxu0 0.0
        %1330 = vmatprep.subr.mxu0 0.0
        %1331 = vmatpush2.xpose.msra.mxu0 0.0
        %1332 = vmatprep.subr.mxu0 0.0
        %1333 = vmatpush2.xpose.msra.mxu0 0.0
        %1334 = vmatprep.subr.mxu0 0.0
        %1335 = vmatpush2.xpose.msra.mxu0 0.0
        %1336 = vmatprep.mubr.f32.mxu0 0.0
        %1337 = vmatmul.mubr.f32.gmra.mxu0 %v1268
        %v1338 = vpop.f32.mrf.mxu0
        %v1339 = vadd.f32 0.0, %v1338
        %v1340 = vpop.f32.mrf.mxu0
        %1341 = vdwg.mxu0
        %v1342 = vsel %vm789, %v1339, -inf
        %1343 = vmax.xlane.f32.xlu0 %v1342
        %v1344 = vpop.xlane.xlu0 %1343
        %v1345 = vsub.f32 %v1339, %v1344
        %v1346 = vmul.f32 %v1345, 1.442695
        %v1347 = vpow.pop %v1346
        %v1348 = vsel %vm789, %v1347, 0.0
        %1349 = vadd.xlane.f32.xlu0 %v1348
        %v1350 = vpop.xlane.xlu0 %1349
        %1351 = vrot.lane.b32.xlu0 %v785, 112
        %v1352 = vpop.permute.xlu0 %1351
        %v1355 = vsel %vm789, %v1347, 0
        %1357 = vmatprep.subr.mxu0 0.0
        %1358 = vmatpush1.msra.mxu0 0.0
        %1359 = vmatprep.subr.mxu0 0.0
        %1360 = vmatpush1.msra.mxu0 0.0
        %1361 = vmatprep.subr.mxu0 0.0
        %1362 = vmatpush1.msra.mxu0 0.0
        %1363 = vmatprep.subr.mxu0 0.0
        %1364 = vmatpush1.msra.mxu0 0.0
        %1365 = vmatprep.subr.mxu0 0.0
        %1366 = vmatpush1.msra.mxu0 0.0
        %1367 = vmatprep.subr.mxu0 0.0
        %1368 = vmatpush1.msra.mxu0 0.0
        %1369 = vmatprep.subr.mxu0 0.0
        %1370 = vmatpush1.msra.mxu0 0.0
        %1371 = vmatprep.subr.mxu0 0.0
        %1372 = vmatpush1.msra.mxu0 0.0
        %1373 = vmatprep.subr.mxu0 0.0
        %1374 = vmatpush1.msra.mxu0 0.0
        %1375 = vmatprep.subr.mxu0 0.0
        %1376 = vmatpush1.msra.mxu0 0.0
        %1377 = vmatprep.subr.mxu0 0.0
        %1378 = vmatpush1.msra.mxu0 0.0
        %1379 = vmatprep.subr.mxu0 0.0
        %1380 = vmatpush1.msra.mxu0 0.0
        %1381 = vmatprep.subr.mxu0 0.0
        %1382 = vmatpush1.msra.mxu0 0.0
        %1383 = vmatprep.subr.mxu0 0.0
        %1384 = vmatpush1.msra.mxu0 0.0
        %1385 = vmatprep.subr.mxu0 0.0
        %1386 = vmatpush1.msra.mxu0 0.0
        %1387 = vmatprep.subr.mxu0 0.0
        %1388 = vmatpush1.msra.mxu0 %v1352
        %1389 = vmatprep.subr.mxu0 0.0
        %1390 = vmatpush2.msra.mxu0 0.0
        %1391 = vmatprep.subr.mxu0 0.0
        %1392 = vmatpush2.msra.mxu0 0.0
        %1393 = vmatprep.subr.mxu0 0.0
        %1394 = vmatpush2.msra.mxu0 0.0
        %1395 = vmatprep.subr.mxu0 0.0
        %1396 = vmatpush2.msra.mxu0 0.0
        %1397 = vmatprep.subr.mxu0 0.0
        %1398 = vmatpush2.msra.mxu0 0.0
        %1399 = vmatprep.subr.mxu0 0.0
        %1400 = vmatpush2.msra.mxu0 0.0
        %1401 = vmatprep.subr.mxu0 0.0
        %1402 = vmatpush2.msra.mxu0 0.0
        %1403 = vmatprep.subr.mxu0 0.0
        %1404 = vmatpush2.msra.mxu0 0.0
        %1405 = vmatprep.subr.mxu0 0.0
        %1406 = vmatpush2.msra.mxu0 0.0
        %1407 = vmatprep.subr.mxu0 0.0
        %1408 = vmatpush2.msra.mxu0 0.0
        %1409 = vmatprep.subr.mxu0 0.0
        %1410 = vmatpush2.msra.mxu0 0.0
        %1411 = vmatprep.subr.mxu0 0.0
        %1412 = vmatpush2.msra.mxu0 0.0
        %1413 = vmatprep.subr.mxu0 0.0
        %1414 = vmatpush2.msra.mxu0 0.0
        %1415 = vmatprep.subr.mxu0 0.0
        %1416 = vmatpush2.msra.mxu0 0.0
        %1417 = vmatprep.subr.mxu0 0.0
        %1418 = vmatpush2.msra.mxu0 0.0
        %1419 = vmatprep.subr.mxu0 0.0
        %1420 = vmatpush2.msra.mxu0 0.0
        %1421 = vmatprep.mubr.f32.mxu0 0.0
        %1422 = vmatmul.mubr.f32.gmra.mxu0 %v1355
        %v1423 = vpop.f32.mrf.mxu0
        %v1424 = vadd.f32 0.0, %v1423
        %v1425 = vpop.f32.mrf.mxu0
        %1426 = vdwg.mxu0
        %v1427 = vrcp.pop %v1350
        %v1428 = vmul.f32 %v1424, %v1427
        %v1430 = vsel %vm789, %v1428, 0
        %1432 = vmatprep.subr.mxu0 0.0
        %1433 = vmatpush1.msra.mxu0 0.0
        %1434 = vmatprep.subr.mxu0 0.0
        %1435 = vmatpush1.msra.mxu0 0.0
        %1436 = vmatprep.subr.mxu0 0.0
        %1437 = vmatpush1.msra.mxu0 0.0
        %1438 = vmatprep.subr.mxu0 0.0
        %1439 = vmatpush1.msra.mxu0 0.0
        %1440 = vmatprep.subr.mxu0 0.0
        %1441 = vmatpush1.msra.mxu0 0.0
        %1442 = vmatprep.subr.mxu0 0.0
        %1443 = vmatpush1.msra.mxu0 0.0
        %1444 = vmatprep.subr.mxu0 0.0
        %1445 = vmatpush1.msra.mxu0 0.0
        %1446 = vmatprep.subr.mxu0 0.0
        %1447 = vmatpush1.msra.mxu0 0.0
        %1448 = vmatprep.subr.mxu0 0.0
        %1449 = vmatpush1.msra.mxu0 0.0
        %1450 = vmatprep.subr.mxu0 0.0
        %1451 = vmatpush1.msra.mxu0 0.0
        %1452 = vmatprep.subr.mxu0 0.0
        %1453 = vmatpush1.msra.mxu0 0.0
        %1454 = vmatprep.subr.mxu0 0.0
        %1455 = vmatpush1.msra.mxu0 0.0
        %1456 = vmatprep.subr.mxu0 0.0
        %1457 = vmatpush1.msra.mxu0 0.0
        %1458 = vmatprep.subr.mxu0 0.0
        %1459 = vmatpush1.msra.mxu0 0.0
        %1460 = vmatprep.subr.mxu0 0.0
        %1461 = vmatpush1.msra.mxu0 0.0
        %1462 = vmatprep.subr.mxu0 0.0
        %1463 = vmatpush1.msra.mxu0 %v1263
        %1464 = vmatprep.subr.mxu0 0.0
        %1465 = vmatpush2.msra.mxu0 0.0
        %1466 = vmatprep.subr.mxu0 0.0
        %1467 = vmatpush2.msra.mxu0 0.0
        %1468 = vmatprep.subr.mxu0 0.0
        %1469 = vmatpush2.msra.mxu0 0.0
        %1470 = vmatprep.subr.mxu0 0.0
        %1471 = vmatpush2.msra.mxu0 0.0
        %1472 = vmatprep.subr.mxu0 0.0
        %1473 = vmatpush2.msra.mxu0 0.0
        %1474 = vmatprep.subr.mxu0 0.0
        %1475 = vmatpush2.msra.mxu0 0.0
        %1476 = vmatprep.subr.mxu0 0.0
        %1477 = vmatpush2.msra.mxu0 0.0
        %1478 = vmatprep.subr.mxu0 0.0
        %1479 = vmatpush2.msra.mxu0 0.0
        %1480 = vmatprep.subr.mxu0 0.0
        %1481 = vmatpush2.msra.mxu0 0.0
        %1482 = vmatprep.subr.mxu0 0.0
        %1483 = vmatpush2.msra.mxu0 0.0
        %1484 = vmatprep.subr.mxu0 0.0
        %1485 = vmatpush2.msra.mxu0 0.0
        %1486 = vmatprep.subr.mxu0 0.0
        %1487 = vmatpush2.msra.mxu0 0.0
        %1488 = vmatprep.subr.mxu0 0.0
        %1489 = vmatpush2.msra.mxu0 0.0
        %1490 = vmatprep.subr.mxu0 0.0
        %1491 = vmatpush2.msra.mxu0 0.0
        %1492 = vmatprep.subr.mxu0 0.0
        %1493 = vmatpush2.msra.mxu0 0.0
        %1494 = vmatprep.subr.mxu0 0.0
        %1495 = vmatpush2.msra.mxu0 0.0
        %1496 = vmatprep.mubr.f32.mxu0 0.0
        %1497 = vmatmul.mubr.f32.gmra.mxu0 %v1430
        %v1498 = vpop.f32.mrf.mxu0
        %v1499 = vadd.f32 0.0, %v1498
        %v1500 = vpop.f32.mrf.mxu0
        %1501 = vdwg.mxu0
        %v1502 = vadd.f32 %v1260, %v1499
        %v1503 = vld [vmem:[#allocation13 + $0x18] sm:$0xff]
        %1504 = vrot.lane.b32.xlu0 %v619, 104
        %v1505 = vpop.permute.xlu0 %1504
        %1506 = vrot.lane.b32.xlu0 %v701, 104
        %v1507 = vpop.permute.xlu0 %1506
        %v1508 = vsel %vm789, %v1505, 0
        %v1510 = vsel %vm789, %v1507, 0
        %1512 = vmatprep.subr.mxu0 0.0
        %1513 = vmatpush1.xpose.msra.mxu0 0.0
        %1514 = vmatprep.subr.mxu0 0.0
        %1515 = vmatpush1.xpose.msra.mxu0 0.0
        %1516 = vmatprep.subr.mxu0 0.0
        %1517 = vmatpush1.xpose.msra.mxu0 0.0
        %1518 = vmatprep.subr.mxu0 0.0
        %1519 = vmatpush1.xpose.msra.mxu0 0.0
        %1520 = vmatprep.subr.mxu0 0.0
        %1521 = vmatpush1.xpose.msra.mxu0 0.0
        %1522 = vmatprep.subr.mxu0 0.0
        %1523 = vmatpush1.xpose.msra.mxu0 0.0
        %1524 = vmatprep.subr.mxu0 0.0
        %1525 = vmatpush1.xpose.msra.mxu0 0.0
        %1526 = vmatprep.subr.mxu0 0.0
        %1527 = vmatpush1.xpose.msra.mxu0 0.0
        %1528 = vmatprep.subr.mxu0 0.0
        %1529 = vmatpush1.xpose.msra.mxu0 0.0
        %1530 = vmatprep.subr.mxu0 0.0
        %1531 = vmatpush1.xpose.msra.mxu0 0.0
        %1532 = vmatprep.subr.mxu0 0.0
        %1533 = vmatpush1.xpose.msra.mxu0 0.0
        %1534 = vmatprep.subr.mxu0 0.0
        %1535 = vmatpush1.xpose.msra.mxu0 0.0
        %1536 = vmatprep.subr.mxu0 0.0
        %1537 = vmatpush1.xpose.msra.mxu0 0.0
        %1538 = vmatprep.subr.mxu0 0.0
        %1539 = vmatpush1.xpose.msra.mxu0 0.0
        %1540 = vmatprep.subr.mxu0 0.0
        %1541 = vmatpush1.xpose.msra.mxu0 0.0
        %1542 = vmatprep.subr.mxu0 0.0
        %1543 = vmatpush1.xpose.msra.mxu0 %v1510
        %1544 = vmatprep.subr.mxu0 0.0
        %1545 = vmatpush2.xpose.msra.mxu0 0.0
        %1546 = vmatprep.subr.mxu0 0.0
        %1547 = vmatpush2.xpose.msra.mxu0 0.0
        %1548 = vmatprep.subr.mxu0 0.0
        %1549 = vmatpush2.xpose.msra.mxu0 0.0
        %1550 = vmatprep.subr.mxu0 0.0
        %1551 = vmatpush2.xpose.msra.mxu0 0.0
        %1552 = vmatprep.subr.mxu0 0.0
        %1553 = vmatpush2.xpose.msra.mxu0 0.0
        %1554 = vmatprep.subr.mxu0 0.0
        %1555 = vmatpush2.xpose.msra.mxu0 0.0
        %1556 = vmatprep.subr.mxu0 0.0
        %1557 = vmatpush2.xpose.msra.mxu0 0.0
        %1558 = vmatprep.subr.mxu0 0.0
        %1559 = vmatpush2.xpose.msra.mxu0 0.0
        %1560 = vmatprep.subr.mxu0 0.0
        %1561 = vmatpush2.xpose.msra.mxu0 0.0
        %1562 = vmatprep.subr.mxu0 0.0
        %1563 = vmatpush2.xpose.msra.mxu0 0.0
        %1564 = vmatprep.subr.mxu0 0.0
        %1565 = vmatpush2.xpose.msra.mxu0 0.0
        %1566 = vmatprep.subr.mxu0 0.0
        %1567 = vmatpush2.xpose.msra.mxu0 0.0
        %1568 = vmatprep.subr.mxu0 0.0
        %1569 = vmatpush2.xpose.msra.mxu0 0.0
        %1570 = vmatprep.subr.mxu0 0.0
        %1571 = vmatpush2.xpose.msra.mxu0 0.0
        %1572 = vmatprep.subr.mxu0 0.0
        %1573 = vmatpush2.xpose.msra.mxu0 0.0
        %1574 = vmatprep.subr.mxu0 0.0
        %1575 = vmatpush2.xpose.msra.mxu0 0.0
        %1576 = vmatprep.mubr.f32.mxu0 0.0
        %1577 = vmatmul.mubr.f32.gmra.mxu0 %v1508
        %v1578 = vpop.f32.mrf.mxu0
        %v1579 = vadd.f32 0.0, %v1578
        %v1580 = vpop.f32.mrf.mxu0
        %1581 = vdwg.mxu0
        %v1582 = vsel %vm789, %v1579, -inf
        %1583 = vmax.xlane.f32.xlu0 %v1582
        %v1584 = vpop.xlane.xlu0 %1583
        %v1585 = vsub.f32 %v1579, %v1584
        %v1586 = vmul.f32 %v1585, 1.442695
        %v1587 = vpow.pop %v1586
        %v1588 = vsel %vm789, %v1587, 0.0
        %1589 = vadd.xlane.f32.xlu0 %v1588
        %v1590 = vpop.xlane.xlu0 %1589
        %1591 = vrot.lane.b32.xlu0 %v785, 104
        %v1592 = vpop.permute.xlu0 %1591
        %v1595 = vsel %vm789, %v1587, 0
        %1597 = vmatprep.subr.mxu0 0.0
        %1598 = vmatpush1.msra.mxu0 0.0
        %1599 = vmatprep.subr.mxu0 0.0
        %1600 = vmatpush1.msra.mxu0 0.0
        %1601 = vmatprep.subr.mxu0 0.0
        %1602 = vmatpush1.msra.mxu0 0.0
        %1603 = vmatprep.subr.mxu0 0.0
        %1604 = vmatpush1.msra.mxu0 0.0
        %1605 = vmatprep.subr.mxu0 0.0
        %1606 = vmatpush1.msra.mxu0 0.0
        %1607 = vmatprep.subr.mxu0 0.0
        %1608 = vmatpush1.msra.mxu0 0.0
        %1609 = vmatprep.subr.mxu0 0.0
        %1610 = vmatpush1.msra.mxu0 0.0
        %1611 = vmatprep.subr.mxu0 0.0
        %1612 = vmatpush1.msra.mxu0 0.0
        %1613 = vmatprep.subr.mxu0 0.0
        %1614 = vmatpush1.msra.mxu0 0.0
        %1615 = vmatprep.subr.mxu0 0.0
        %1616 = vmatpush1.msra.mxu0 0.0
        %1617 = vmatprep.subr.mxu0 0.0
        %1618 = vmatpush1.msra.mxu0 0.0
        %1619 = vmatprep.subr.mxu0 0.0
        %1620 = vmatpush1.msra.mxu0 0.0
        %1621 = vmatprep.subr.mxu0 0.0
        %1622 = vmatpush1.msra.mxu0 0.0
        %1623 = vmatprep.subr.mxu0 0.0
        %1624 = vmatpush1.msra.mxu0 0.0
        %1625 = vmatprep.subr.mxu0 0.0
        %1626 = vmatpush1.msra.mxu0 0.0
        %1627 = vmatprep.subr.mxu0 0.0
        %1628 = vmatpush1.msra.mxu0 %v1592
        %1629 = vmatprep.subr.mxu0 0.0
        %1630 = vmatpush2.msra.mxu0 0.0
        %1631 = vmatprep.subr.mxu0 0.0
        %1632 = vmatpush2.msra.mxu0 0.0
        %1633 = vmatprep.subr.mxu0 0.0
        %1634 = vmatpush2.msra.mxu0 0.0
        %1635 = vmatprep.subr.mxu0 0.0
        %1636 = vmatpush2.msra.mxu0 0.0
        %1637 = vmatprep.subr.mxu0 0.0
        %1638 = vmatpush2.msra.mxu0 0.0
        %1639 = vmatprep.subr.mxu0 0.0
        %1640 = vmatpush2.msra.mxu0 0.0
        %1641 = vmatprep.subr.mxu0 0.0
        %1642 = vmatpush2.msra.mxu0 0.0
        %1643 = vmatprep.subr.mxu0 0.0
        %1644 = vmatpush2.msra.mxu0 0.0
        %1645 = vmatprep.subr.mxu0 0.0
        %1646 = vmatpush2.msra.mxu0 0.0
        %1647 = vmatprep.subr.mxu0 0.0
        %1648 = vmatpush2.msra.mxu0 0.0
        %1649 = vmatprep.subr.mxu0 0.0
        %1650 = vmatpush2.msra.mxu0 0.0
        %1651 = vmatprep.subr.mxu0 0.0
        %1652 = vmatpush2.msra.mxu0 0.0
        %1653 = vmatprep.subr.mxu0 0.0
        %1654 = vmatpush2.msra.mxu0 0.0
        %1655 = vmatprep.subr.mxu0 0.0
        %1656 = vmatpush2.msra.mxu0 0.0
        %1657 = vmatprep.subr.mxu0 0.0
        %1658 = vmatpush2.msra.mxu0 0.0
        %1659 = vmatprep.subr.mxu0 0.0
        %1660 = vmatpush2.msra.mxu0 0.0
        %1661 = vmatprep.mubr.f32.mxu0 0.0
        %1662 = vmatmul.mubr.f32.gmra.mxu0 %v1595
        %v1663 = vpop.f32.mrf.mxu0
        %v1664 = vadd.f32 0.0, %v1663
        %v1665 = vpop.f32.mrf.mxu0
        %1666 = vdwg.mxu0
        %v1667 = vrcp.pop %v1590
        %v1668 = vmul.f32 %v1664, %v1667
        %v1670 = vsel %vm789, %v1668, 0
        %1672 = vmatprep.subr.mxu0 0.0
        %1673 = vmatpush1.msra.mxu0 0.0
        %1674 = vmatprep.subr.mxu0 0.0
        %1675 = vmatpush1.msra.mxu0 0.0
        %1676 = vmatprep.subr.mxu0 0.0
        %1677 = vmatpush1.msra.mxu0 0.0
        %1678 = vmatprep.subr.mxu0 0.0
        %1679 = vmatpush1.msra.mxu0 0.0
        %1680 = vmatprep.subr.mxu0 0.0
        %1681 = vmatpush1.msra.mxu0 0.0
        %1682 = vmatprep.subr.mxu0 0.0
        %1683 = vmatpush1.msra.mxu0 0.0
        %1684 = vmatprep.subr.mxu0 0.0
        %1685 = vmatpush1.msra.mxu0 0.0
        %1686 = vmatprep.subr.mxu0 0.0
        %1687 = vmatpush1.msra.mxu0 0.0
        %1688 = vmatprep.subr.mxu0 0.0
        %1689 = vmatpush1.msra.mxu0 0.0
        %1690 = vmatprep.subr.mxu0 0.0
        %1691 = vmatpush1.msra.mxu0 0.0
        %1692 = vmatprep.subr.mxu0 0.0
        %1693 = vmatpush1.msra.mxu0 0.0
        %1694 = vmatprep.subr.mxu0 0.0
        %1695 = vmatpush1.msra.mxu0 0.0
        %1696 = vmatprep.subr.mxu0 0.0
        %1697 = vmatpush1.msra.mxu0 0.0
        %1698 = vmatprep.subr.mxu0 0.0
        %1699 = vmatpush1.msra.mxu0 0.0
        %1700 = vmatprep.subr.mxu0 0.0
        %1701 = vmatpush1.msra.mxu0 0.0
        %1702 = vmatprep.subr.mxu0 0.0
        %1703 = vmatpush1.msra.mxu0 %v1503
        %1704 = vmatprep.subr.mxu0 0.0
        %1705 = vmatpush2.msra.mxu0 0.0
        %1706 = vmatprep.subr.mxu0 0.0
        %1707 = vmatpush2.msra.mxu0 0.0
        %1708 = vmatprep.subr.mxu0 0.0
        %1709 = vmatpush2.msra.mxu0 0.0
        %1710 = vmatprep.subr.mxu0 0.0
        %1711 = vmatpush2.msra.mxu0 0.0
        %1712 = vmatprep.subr.mxu0 0.0
        %1713 = vmatpush2.msra.mxu0 0.0
        %1714 = vmatprep.subr.mxu0 0.0
        %1715 = vmatpush2.msra.mxu0 0.0
        %1716 = vmatprep.subr.mxu0 0.0
        %1717 = vmatpush2.msra.mxu0 0.0
        %1718 = vmatprep.subr.mxu0 0.0
        %1719 = vmatpush2.msra.mxu0 0.0
        %1720 = vmatprep.subr.mxu0 0.0
        %1721 = vmatpush2.msra.mxu0 0.0
        %1722 = vmatprep.subr.mxu0 0.0
        %1723 = vmatpush2.msra.mxu0 0.0
        %1724 = vmatprep.subr.mxu0 0.0
        %1725 = vmatpush2.msra.mxu0 0.0
        %1726 = vmatprep.subr.mxu0 0.0
        %1727 = vmatpush2.msra.mxu0 0.0
        %1728 = vmatprep.subr.mxu0 0.0
        %1729 = vmatpush2.msra.mxu0 0.0
        %1730 = vmatprep.subr.mxu0 0.0
        %1731 = vmatpush2.msra.mxu0 0.0
        %1732 = vmatprep.subr.mxu0 0.0
        %1733 = vmatpush2.msra.mxu0 0.0
        %1734 = vmatprep.subr.mxu0 0.0
        %1735 = vmatpush2.msra.mxu0 0.0
        %1736 = vmatprep.mubr.f32.mxu0 0.0
        %1737 = vmatmul.mubr.f32.gmra.mxu0 %v1670
        %v1738 = vpop.f32.mrf.mxu0
        %v1739 = vadd.f32 0.0, %v1738
        %v1740 = vpop.f32.mrf.mxu0
        %1741 = vdwg.mxu0
        %v1742 = vadd.f32 %v1502, %v1739
        %v1743 = vld [vmem:[%s10] sm:$0x1]
        %v1745 = vlaneseq
        %v1746 = vshrl.u32 %v1745, 7
        %v1747 = vsub.s32 0, %v1746
        %v1748 = vrot.slane %v1743, %v1747
        %v1750 = vadd.f32 %v1742, %v1748
        %1751 = vst.msk [vmem:[%s530] sm:$0xff] %vm545, %v1750
        %s1752 = sand.u32 %s287, 1
        %s1753 = scalar_lea.sflag [#allocation4], %s1752
        %s1754 = sand.u32 %s287, 1
        %s1755 = smul.addr %s1754, 8
        %s1756 = scalar_lea.vmem [#allocation14], %s1755
        // Predicated region
        $region93: #{tpu_custom_call.1} parent=63 // pred_check
          %p1757 = pneg %p297
        $region94: #{tpu_custom_call.1} parent=63 // pred_check_branch
          %1759 = sbr.rel (%p1757) target = $region96
        $region95: #{tpu_custom_call.1} parent=63 // pred_region
          %s1761 = ssub.s32 128, 128
          %1762 = vsyncadd %s1753, %s1761
          %s1763 = smul.addr %s33, 128
          %s1764 = scalar_lea.hbm %s11, %s1763
          %s1766 = sshll.u32 %s1756, 4
          %s1767 = int_to_ptr.vmem [resolvable:$true] %s1766
          %1769 = dma.vmem_to_hbm [thread:$0]  %s1767, 128, %s1764, %s1753
        $region96: #{tpu_custom_call.1} parent=63 // pred_fallthru
          _
      $region64: #{tpu_custom_call.1} parent=5 // pred_fallthru
        _
      %p1770 = scmp.le.s32.totalorder 2, %s28
      // Predicated region
      $region97: #{tpu_custom_call.1} parent=5 // pred_check
        %p1771 = pneg %p1770
      $region98: #{tpu_custom_call.1} parent=5 // pred_check_branch
        %1773 = sbr.rel (%p1771) target = $region100
      $region99: #{tpu_custom_call.1} parent=5 // pred_region
        %s1774 = ssub.s32 %s28, 2
        // Predicated region
        $region101: #{tpu_custom_call.1} parent=99 // pred_check
          %p1775 = pneg %p303
        $region102: #{tpu_custom_call.1} parent=99 // pred_check_branch
          %1777 = sbr.rel (%p1775) target = $region104
        $region103: #{tpu_custom_call.1} parent=99 // pred_region
          %s1778 = sand.u32 %s288, 1
          %s1779 = scalar_lea.sflag [#allocation4], %s1778
          %s1780 = sand.u32 %s288, 1
          %s1781 = smul.addr %s1780, 8
          %s1782 = scalar_lea.vmem [#allocation14], %s1781
          %1783 = dma.done %s1779, 128
        $region104: #{tpu_custom_call.1} parent=99 // pred_fallthru
          _
      $region100: #{tpu_custom_call.1} parent=5 // pred_fallthru
        _
    $region6: #{tpu_custom_call.1} parent=1 // loop_footer
      %s32 = sadd.s32 1, %s28
    $region7: #{tpu_custom_call.1} parent=1 // loop_footer_branch
      %27 = sbr.rel target = $region3
    $region8: #{tpu_custom_call.1} parent=1 // loop_exit
      _
    %1784 = vsyncpa [#allocation3], 1
    %s1785 = scalar_lea.sflag [#allocation3], 1
    %1786 = vsyncpa %s1785, 1
    %1787 = vsyncpa [#allocation6], 1
    %s1788 = scalar_lea.sflag [#allocation6], 1
    %1789 = vsyncpa %s1788, 1
    %1790 = vsyncpa [#allocation9], 1
    %1791 = vsyncpa [#allocation12], 1
    %1792 = vsyncpa [#allocation4], 1
    %s1793 = scalar_lea.sflag [#allocation4], 1
    %1794 = vsyncpa %s1793, 1

// kernel: tpu_custom_call.1
$region0: #{tpu_custom_call.1}
  #allocation0 [shape = 'u32[]', space=smem, size = 0x4, offset = 0x4, fixed_abs, tag = 'smem constant byte address 0x4 - core index']
  #allocation1 [shape = 'u32[144,128]{1,0:T(1,128)}', space=vmem, size = 0x12000, scoped, tag = 'internal scratch']
  %s0 = inlined_call_operand.hbm [shape: f32[2,8,32], index: 0, kind: input, shape index: {}]
  %s1 = inlined_call_operand.hbm [shape: f32[2,8,32], index: 1, kind: input, shape index: {}]
  %s2 = inlined_call_operand.hbm [shape: f32[2,8,32], index: 2, kind: input, shape index: {}]
  %s3 = inlined_call_operand.hbm [shape: f32[32,32], index: 3, kind: input, shape index: {}]
  %s4 = inlined_call_operand.vmem [shape: f32[1,32], index: 4, kind: input, shape index: {}]
  %s5 = inlined_call_operand.hbm [shape: f32[32,32], index: 5, kind: input, shape index: {}]
  %s6 = inlined_call_operand.vmem [shape: f32[1,32], index: 6, kind: input, shape index: {}]
  %s7 = inlined_call_operand.hbm [shape: f32[32,32], index: 7, kind: input, shape index: {}]
  %s8 = inlined_call_operand.vmem [shape: f32[1,32], index: 8, kind: input, shape index: {}]
  %s9 = inlined_call_operand.hbm [shape: f32[32,32], index: 9, kind: input, shape index: {}]
  %s10 = inlined_call_operand.vmem [shape: f32[1,32], index: 10, kind: input, shape index: {}]
  %s11 = inlined_call_operand.hbm [shape: f32[2,8,32], index: 11, kind: output, shape index: {}]
  %s12 = sld [smem:[#allocation0]]
  $region105: #{tpu_custom_call.1} parent=0
    _
  %s14 = ssub.s32 1, %s12
  %s15 = scalar_select 0, %s14, %s12
  $region1: #{tpu_custom_call.1} parent=0
    #allocation2 [shape = 'u8[8192]{0}', space=vmem, size = 0x2000, scoped, tag = 'input window, operand 0']
    #allocation3 [shape = 's32[2]{0}', space=sflag, size = 0x8, scoped, tag = 'scoped memory for tpu_custom_call.1']
    #allocation4 [shape = 's32[2]{0}', space=sflag, size = 0x8, scoped, tag = 'scoped memory for tpu_custom_call.1']
    #allocation5 [shape = 'u8[8192]{0}', space=vmem, size = 0x2000, scoped, tag = 'input window, operand 1']
    #allocation6 [shape = 's32[2]{0}', space=sflag, size = 0x8, scoped, tag = 'scoped memory for tpu_custom_call.1']
    #allocation7 [shape = 'u8[8192]{0}', space=vmem, size = 0x2000, scoped, tag = 'input window, operand 2']
    #allocation8 [shape = 'u8[16384]{0}', space=vmem, size = 0x4000, scoped, tag = 'input window, operand 3, single buffered']
    #allocation9 [shape = 's32[1]{0}', space=sflag, size = 0x4, scoped, tag = 'scoped memory for tpu_custom_call.1']
    #allocation10 [shape = 'u8[16384]{0}', space=vmem, size = 0x4000, scoped, tag = 'input window, operand 5, single buffered']
    #allocation11 [shape = 'u8[16384]{0}', space=vmem, size = 0x4000, scoped, tag = 'input window, operand 7, single buffered']
    #allocation12 [shape = 's32[1]{0}', space=sflag, size = 0x4, scoped, tag = 'scoped memory for tpu_custom_call.1']
    #allocation13 [shape = 'u8[16384]{0}', space=vmem, size = 0x4000, scoped, tag = 'input window, operand 9, single buffered']
    #allocation14 [shape = 'u8[8192]{0}', space=vmem, size = 0x2000, scoped, tag = 'output window, operand 0']
    %16 = vsyncpa [#allocation3], 0
    %s17 = scalar_lea.sflag [#allocation3], 1
    %18 = vsyncpa %s17, 0
    %19 = vsyncpa [#allocation6], 0
    %s20 = scalar_lea.sflag [#allocation6], 1
    %21 = vsyncpa %s20, 0
    %22 = vsyncpa [#allocation9], 0
    %23 = vsyncpa [#allocation12], 0
    %24 = vsyncpa [#allocation4], 0
    %s25 = scalar_lea.sflag [#allocation4], 1
    %26 = vsyncpa %s25, 0
    loop: start=0, step=1, limit=4
    $region2: #{tpu_custom_call.1} parent=1 // loop_pre_header
      _
    $region3: #{tpu_custom_call.1} parent=1 // loop_header
      %s28 = sphi 0, %s32
      %p29 = scmp.ge.s32.totalorder %s28, 4
      %s38 = sphi 0, %s40
      %s41 = sphi 0, %s38
      %s42 = sphi 0, %s41
      %s58 = sphi 0, %s42
      %s64 = sphi 0, %s66
      %s67 = sphi 0, %s64
      %s68 = sphi 0, %s67
      %s84 = sphi 0, %s68
      %s90 = sphi 0, %s92
      %s93 = sphi 0, %s90
      %s94 = sphi 0, %s93
      %s110 = sphi 0, %s94
      %s114 = sphi 0, %s114
      %s116 = sphi 0, %s114
      %s117 = sphi 0, %s116
      %s131 = sphi 0, %s117
      %s135 = sphi 0, %s135
      %s137 = sphi 0, %s135
      %s138 = sphi 0, %s137
      %s152 = sphi 0, %s138
      %s156 = sphi 0, %s156
      %s158 = sphi 0, %s156
      %s159 = sphi 0, %s158
      %s173 = sphi 0, %s159
      %s177 = sphi 0, %s177
      %s179 = sphi 0, %s177
      %s180 = sphi 0, %s179
      %s194 = sphi 0, %s180
      %s198 = sphi 0, %s198
      %s200 = sphi 0, %s198
      %s201 = sphi 0, %s200
      %s215 = sphi 0, %s201
      %s219 = sphi 0, %s219
      %s221 = sphi 0, %s219
      %s222 = sphi 0, %s221
      %s236 = sphi 0, %s222
      %s240 = sphi 0, %s240
      %s242 = sphi 0, %s240
      %s243 = sphi 0, %s242
      %s257 = sphi 0, %s243
      %s261 = sphi 0, %s261
      %s263 = sphi 0, %s261
      %s264 = sphi 0, %s263
      %s278 = sphi 0, %s264
      %s284 = sphi 0, %s286
      %s287 = sphi 0, %s284
      %s288 = sphi 0, %s287
      %s304 = sphi 0, %s288
    $region4: #{tpu_custom_call.1} parent=1 // loop_header_branch
      %31 = sbr.rel (%p29) target = $region8
    $region5: #{tpu_custom_call.1} parent=1 // loop_body
      %s33 = ssub.s32 %s28, 1
      %s34 = ssub.s32 %s28, 2
      %s35 = sadd.s32 %s28, 1
      %s36 = ssub.s32 %s28, %s35
      %p37 = scmp.eq.s32.totalorder %s36, 0
      %s39 = sadd.s32 %s38, 1
      %s40 = scalar_select %p37, %s38, %s39
      %p43 = pneg %p37
      %p44 = scmp.eq.s32.totalorder %s28, 1
      %p45 = por %p43, %p44
      %p46 = scmp.ne.s32.totalorder %s38, %s41
      %p47 = scmp.eq.s32.totalorder %s28, 0
      %p48 = por %p46, %p47
      %p49 = scmp.ne.s32.totalorder %s38, %s41
      %p50 = scmp.eq.s32.totalorder %s33, 1
      %p51 = por %p49, %p50
      %p52 = scmp.ne.s32.totalorder %s41, %s42
      %p53 = scmp.eq.s32.totalorder %s33, 0
      %p54 = por %p52, %p53
      %p55 = scmp.ne.s32.totalorder %s41, %s42
      %p56 = scmp.eq.s32.totalorder %s34, 1
      %p57 = por %p55, %p56
      %p59 = scmp.ne.s32.totalorder %s42, %s58
      %p60 = scmp.eq.s32.totalorder %s34, 0
      %p61 = por %p59, %p60
      %s62 = ssub.s32 %s28, %s35
      %p63 = scmp.eq.s32.totalorder %s62, 0
      %s65 = sadd.s32 %s64, 1
      %s66 = scalar_select %p63, %s64, %s65
      %p69 = pneg %p63
      %p70 = scmp.eq.s32.totalorder %s28, 1
      %p71 = por %p69, %p70
      %p72 = scmp.ne.s32.totalorder %s64, %s67
      %p73 = scmp.eq.s32.totalorder %s28, 0
      %p74 = por %p72, %p73
      %p75 = scmp.ne.s32.totalorder %s64, %s67
      %p76 = scmp.eq.s32.totalorder %s33, 1
      %p77 = por %p75, %p76
      %p78 = scmp.ne.s32.totalorder %s67, %s68
      %p79 = scmp.eq.s32.totalorder %s33, 0
      %p80 = por %p78, %p79
      %p81 = scmp.ne.s32.totalorder %s67, %s68
      %p82 = scmp.eq.s32.totalorder %s34, 1
      %p83 = por %p81, %p82
      %p85 = scmp.ne.s32.totalorder %s68, %s84
      %p86 = scmp.eq.s32.totalorder %s34, 0
      %p87 = por %p85, %p86
      %s88 = ssub.s32 %s28, %s35
      %p89 = scmp.eq.s32.totalorder %s88, 0
      %s91 = sadd.s32 %s90, 1
      %s92 = scalar_select %p89, %s90, %s91
      %p95 = pneg %p89
      %p96 = scmp.eq.s32.totalorder %s28, 1
      %p97 = por %p95, %p96
      %p98 = scmp.ne.s32.totalorder %s90, %s93
      %p99 = scmp.eq.s32.totalorder %s28, 0
      %p100 = por %p98, %p99
      %p101 = scmp.ne.s32.totalorder %s90, %s93
      %p102 = scmp.eq.s32.totalorder %s33, 1
      %p103 = por %p101, %p102
      %p104 = scmp.ne.s32.totalorder %s93, %s94
      %p105 = scmp.eq.s32.totalorder %s33, 0
      %p106 = por %p104, %p105
      %p107 = scmp.ne.s32.totalorder %s93, %s94
      %p108 = scmp.eq.s32.totalorder %s34, 1
      %p109 = por %p107, %p108
      %p111 = scmp.ne.s32.totalorder %s94, %s110
      %p112 = scmp.eq.s32.totalorder %s34, 0
      %p113 = por %p111, %p112
      %s115 = sadd.s32 %s114, 1
      %p118 = scmp.eq.s32.totalorder %s28, 1
      %p119 = scmp.ne.s32.totalorder %s114, %s116
      %p120 = scmp.eq.s32.totalorder %s28, 0
      %p121 = por %p119, %p120
      %p122 = scmp.ne.s32.totalorder %s114, %s116
      %p123 = scmp.eq.s32.totalorder %s33, 1
      %p124 = por %p122, %p123
      %p125 = scmp.ne.s32.totalorder %s116, %s117
      %p126 = scmp.eq.s32.totalorder %s33, 0
      %p127 = por %p125, %p126
      %p128 = scmp.ne.s32.totalorder %s116, %s117
      %p129 = scmp.eq.s32.totalorder %s34, 1
      %p130 = por %p128, %p129
      %p132 = scmp.ne.s32.totalorder %s117, %s131
      %p133 = scmp.eq.s32.totalorder %s34, 0
      %p134 = por %p132, %p133
      %s136 = sadd.s32 %s135, 1
      %p139 = scmp.eq.s32.totalorder %s28, 1
      %p140 = scmp.ne.s32.totalorder %s135, %s137
      %p141 = scmp.eq.s32.totalorder %s28, 0
      %p142 = por %p140, %p141
      %p143 = scmp.ne.s32.totalorder %s135, %s137
      %p144 = scmp.eq.s32.totalorder %s33, 1
      %p145 = por %p143, %p144
      %p146 = scmp.ne.s32.totalorder %s137, %s138
      %p147 = scmp.eq.s32.totalorder %s33, 0
      %p148 = por %p146, %p147
      %p149 = scmp.ne.s32.totalorder %s137, %s138
      %p150 = scmp.eq.s32.totalorder %s34, 1
      %p151 = por %p149, %p150
      %p153 = scmp.ne.s32.totalorder %s138, %s152
      %p154 = scmp.eq.s32.totalorder %s34, 0
      %p155 = por %p153, %p154
      %s157 = sadd.s32 %s156, 1
      %p160 = scmp.eq.s32.totalorder %s28, 1
      %p161 = scmp.ne.s32.totalorder %s156, %s158
      %p162 = scmp.eq.s32.totalorder %s28, 0
      %p163 = por %p161, %p162
      %p164 = scmp.ne.s32.totalorder %s156, %s158
      %p165 = scmp.eq.s32.totalorder %s33, 1
      %p166 = por %p164, %p165
      %p167 = scmp.ne.s32.totalorder %s158, %s159
      %p168 = scmp.eq.s32.totalorder %s33, 0
      %p169 = por %p167, %p168
      %p170 = scmp.ne.s32.totalorder %s158, %s159
      %p171 = scmp.eq.s32.totalorder %s34, 1
      %p172 = por %p170, %p171
      %p174 = scmp.ne.s32.totalorder %s159, %s173
      %p175 = scmp.eq.s32.totalorder %s34, 0
      %p176 = por %p174, %p175
      %s178 = sadd.s32 %s177, 1
      %p181 = scmp.eq.s32.totalorder %s28, 1
      %p182 = scmp.ne.s32.totalorder %s177, %s179
      %p183 = scmp.eq.s32.totalorder %s28, 0
      %p184 = por %p182, %p183
      %p185 = scmp.ne.s32.totalorder %s177, %s179
      %p186 = scmp.eq.s32.totalorder %s33, 1
      %p187 = por %p185, %p186
      %p188 = scmp.ne.s32.totalorder %s179, %s180
      %p189 = scmp.eq.s32.totalorder %s33, 0
      %p190 = por %p188, %p189
      %p191 = scmp.ne.s32.totalorder %s179, %s180
      %p192 = scmp.eq.s32.totalorder %s34, 1
      %p193 = por %p191, %p192
      %p195 = scmp.ne.s32.totalorder %s180, %s194
      %p196 = scmp.eq.s32.totalorder %s34, 0
      %p197 = por %p195, %p196
      %s199 = sadd.s32 %s198, 1
      %p202 = scmp.eq.s32.totalorder %s28, 1
      %p203 = scmp.ne.s32.totalorder %s198, %s200
      %p204 = scmp.eq.s32.totalorder %s28, 0
      %p205 = por %p203, %p204
      %p206 = scmp.ne.s32.totalorder %s198, %s200
      %p207 = scmp.eq.s32.totalorder %s33, 1
      %p208 = por %p206, %p207
      %p209 = scmp.ne.s32.totalorder %s200, %s201
      %p210 = scmp.eq.s32.totalorder %s33, 0
      %p211 = por %p209, %p210
      %p212 = scmp.ne.s32.totalorder %s200, %s201
      %p213 = scmp.eq.s32.totalorder %s34, 1
      %p214 = por %p212, %p213
      %p216 = scmp.ne.s32.totalorder %s201, %s215
      %p217 = scmp.eq.s32.totalorder %s34, 0
      %p218 = por %p216, %p217
      %s220 = sadd.s32 %s219, 1
      %p223 = scmp.eq.s32.totalorder %s28, 1
      %p224 = scmp.ne.s32.totalorder %s219, %s221
      %p225 = scmp.eq.s32.totalorder %s28, 0
      %p226 = por %p224, %p225
      %p227 = scmp.ne.s32.totalorder %s219, %s221
      %p228 = scmp.eq.s32.totalorder %s33, 1
      %p229 = por %p227, %p228
      %p230 = scmp.ne.s32.totalorder %s221, %s222
      %p231 = scmp.eq.s32.totalorder %s33, 0
      %p232 = por %p230, %p231
      %p233 = scmp.ne.s32.totalorder %s221, %s222
      %p234 = scmp.eq.s32.totalorder %s34, 1
      %p235 = por %p233, %p234
      %p237 = scmp.ne.s32.totalorder %s222, %s236
      %p238 = scmp.eq.s32.totalorder %s34, 0
      %p239 = por %p237, %p238
      %s241 = sadd.s32 %s240, 1
      %p244 = scmp.eq.s32.totalorder %s28, 1
      %p245 = scmp.ne.s32.totalorder %s240, %s242
      %p246 = scmp.eq.s32.totalorder %s28, 0
      %p247 = por %p245, %p246
      %p248 = scmp.ne.s32.totalorder %s240, %s242
      %p249 = scmp.eq.s32.totalorder %s33, 1
      %p250 = por %p248, %p249
      %p251 = scmp.ne.s32.totalorder %s242, %s243
      %p252 = scmp.eq.s32.totalorder %s33, 0
      %p253 = por %p251, %p252
      %p254 = scmp.ne.s32.totalorder %s242, %s243
      %p255 = scmp.eq.s32.totalorder %s34, 1
      %p256 = por %p254, %p255
      %p258 = scmp.ne.s32.totalorder %s243, %s257
      %p259 = scmp.eq.s32.totalorder %s34, 0
      %p260 = por %p258, %p259
      %s262 = sadd.s32 %s261, 1
      %p265 = scmp.eq.s32.totalorder %s28, 1
      %p266 = scmp.ne.s32.totalorder %s261, %s263
      %p267 = scmp.eq.s32.totalorder %s28, 0
      %p268 = por %p266, %p267
      %p269 = scmp.ne.s32.totalorder %s261, %s263
      %p270 = scmp.eq.s32.totalorder %s33, 1
      %p271 = por %p269, %p270
      %p272 = scmp.ne.s32.totalorder %s263, %s264
      %p273 = scmp.eq.s32.totalorder %s33, 0
      %p274 = por %p272, %p273
      %p275 = scmp.ne.s32.totalorder %s263, %s264
      %p276 = scmp.eq.s32.totalorder %s34, 1
      %p277 = por %p275, %p276
      %p279 = scmp.ne.s32.totalorder %s264, %s278
      %p280 = scmp.eq.s32.totalorder %s34, 0
      %p281 = por %p279, %p280
      %s282 = ssub.s32 %s28, %s35
      %p283 = scmp.eq.s32.totalorder %s282, 0
      %s285 = sadd.s32 %s284, 1
      %s286 = scalar_select %p283, %s284, %s285
      %p289 = pneg %p283
      %p290 = scmp.eq.s32.totalorder %s28, 1
      %p291 = por %p289, %p290
      %p292 = scmp.ne.s32.totalorder %s284, %s287
      %p293 = scmp.eq.s32.totalorder %s28, 0
      %p294 = por %p292, %p293
      %p295 = scmp.ne.s32.totalorder %s284, %s287
      %p296 = scmp.eq.s32.totalorder %s33, 1
      %p297 = por %p295, %p296
      %p298 = scmp.ne.s32.totalorder %s287, %s288
      %p299 = scmp.eq.s32.totalorder %s33, 0
      %p300 = por %p298, %p299
      %p301 = scmp.ne.s32.totalorder %s287, %s288
      %p302 = scmp.eq.s32.totalorder %s34, 1
      %p303 = por %p301, %p302
      %p305 = scmp.ne.s32.totalorder %s288, %s304
      %p306 = scmp.eq.s32.totalorder %s34, 0
      %p307 = por %p305, %p306
      %p308 = scmp.le.s32.totalorder 1, %s28
      %p309 = scmp.lt.s32.totalorder %s28, 3
      %p310 = pnand %p308, %p309
      %p311 = pneg %p310
      // Predicated region
      $region9: #{tpu_custom_call.1} parent=5 // pred_check
        _
      $region10: #{tpu_custom_call.1} parent=5 // pred_check_branch
        %313 = sbr.rel (%p310) target = $region12
      $region11: #{tpu_custom_call.1} parent=5 // pred_region
        %s314 = ssub.s32 %s28, 1
        // Predicated region
        $region13: #{tpu_custom_call.1} parent=11 // pred_check
          %p315 = pneg %p127
        $region14: #{tpu_custom_call.1} parent=11 // pred_check_branch
          %317 = sbr.rel (%p315) target = $region16
        $region15: #{tpu_custom_call.1} parent=11 // pred_region
          %s319 = ssub.s32 512, 512
          %320 = vsyncadd [#allocation9], %s319
          %s321 = sshll.u32 [#allocation8], 4
          %s322 = int_to_ptr.vmem [resolvable:$true] %s321
          %327 = dma.hbm_to_vmem [thread:$0]  %s3, 512, %s322, [#allocation9], 128, 128, 8
        $region16: #{tpu_custom_call.1} parent=11 // pred_fallthru
          _
        // Predicated region
        $region17: #{tpu_custom_call.1} parent=11 // pred_check
          %p328 = pneg %p148
        $region18: #{tpu_custom_call.1} parent=11 // pred_check_branch
          %330 = sbr.rel (%p328) target = $region20
        $region19: #{tpu_custom_call.1} parent=11 // pred_region
          _
        $region20: #{tpu_custom_call.1} parent=11 // pred_fallthru
          _
        // Predicated region
        $region21: #{tpu_custom_call.1} parent=11 // pred_check
          %p331 = pneg %p169
        $region22: #{tpu_custom_call.1} parent=11 // pred_check_branch
          %333 = sbr.rel (%p331) target = $region24
        $region23: #{tpu_custom_call.1} parent=11 // pred_region
          %s335 = ssub.s32 512, 512
          %336 = vsyncadd [#allocation9], %s335
          %s337 = sshll.u32 [#allocation10], 4
          %s338 = int_to_ptr.vmem [resolvable:$true] %s337
          %343 = dma.hbm_to_vmem [thread:$0]  %s5, 512, %s338, [#allocation9], 128, 128, 8
        $region24: #{tpu_custom_call.1} parent=11 // pred_fallthru
          _
        // Predicated region
        $region25: #{tpu_custom_call.1} parent=11 // pred_check
          %p344 = pneg %p190
        $region26: #{tpu_custom_call.1} parent=11 // pred_check_branch
          %346 = sbr.rel (%p344) target = $region28
        $region27: #{tpu_custom_call.1} parent=11 // pred_region
          _
        $region28: #{tpu_custom_call.1} parent=11 // pred_fallthru
          _
        // Predicated region
        $region29: #{tpu_custom_call.1} parent=11 // pred_check
          %p347 = pneg %p211
        $region30: #{tpu_custom_call.1} parent=11 // pred_check_branch
          %349 = sbr.rel (%p347) target = $region32
        $region31: #{tpu_custom_call.1} parent=11 // pred_region
          %s351 = ssub.s32 512, 512
          %352 = vsyncadd [#allocation12], %s351
          %s353 = sshll.u32 [#allocation11], 4
          %s354 = int_to_ptr.vmem [resolvable:$true] %s353
          %359 = dma.hbm_to_vmem [thread:$0]  %s7, 512, %s354, [#allocation12], 128, 128, 8
        $region32: #{tpu_custom_call.1} parent=11 // pred_fallthru
          _
        // Predicated region
        $region33: #{tpu_custom_call.1} parent=11 // pred_check
          %p360 = pneg %p232
        $region34: #{tpu_custom_call.1} parent=11 // pred_check_branch
          %362 = sbr.rel (%p360) target = $region36
        $region35: #{tpu_custom_call.1} parent=11 // pred_region
          _
        $region36: #{tpu_custom_call.1} parent=11 // pred_fallthru
          _
        // Predicated region
        $region37: #{tpu_custom_call.1} parent=11 // pred_check
          %p363 = pneg %p253
        $region38: #{tpu_custom_call.1} parent=11 // pred_check_branch
          %365 = sbr.rel (%p363) target = $region40
        $region39: #{tpu_custom_call.1} parent=11 // pred_region
          %s367 = ssub.s32 512, 512
          %368 = vsyncadd [#allocation12], %s367
          %s369 = sshll.u32 [#allocation13], 4
          %s370 = int_to_ptr.vmem [resolvable:$true] %s369
          %375 = dma.hbm_to_vmem [thread:$0]  %s9, 512, %s370, [#allocation12], 128, 128, 8
        $region40: #{tpu_custom_call.1} parent=11 // pred_fallthru
          _
        // Predicated region
        $region41: #{tpu_custom_call.1} parent=11 // pred_check
          %p376 = pneg %p274
        $region42: #{tpu_custom_call.1} parent=11 // pred_check_branch
          %378 = sbr.rel (%p376) target = $region44
        $region43: #{tpu_custom_call.1} parent=11 // pred_region
          _
        $region44: #{tpu_custom_call.1} parent=11 // pred_fallthru
          _
      $region12: #{tpu_custom_call.1} parent=5 // pred_fallthru
        _
      %p379 = scmp.lt.s32.totalorder %s28, 2
      // Predicated region
      $region45: #{tpu_custom_call.1} parent=5 // pred_check
        %p380 = pneg %p379
      $region46: #{tpu_custom_call.1} parent=5 // pred_check_branch
        %382 = sbr.rel (%p380) target = $region48
      $region47: #{tpu_custom_call.1} parent=5 // pred_region
        // Predicated region
        $region49: #{tpu_custom_call.1} parent=47 // pred_check
          %p383 = pneg %p48
        $region50: #{tpu_custom_call.1} parent=47 // pred_check_branch
          %385 = sbr.rel (%p383) target = $region52
        $region51: #{tpu_custom_call.1} parent=47 // pred_region
          %s386 = sand.u32 %s38, 1
          %s387 = scalar_lea.sflag [#allocation3], %s386
          %s388 = sand.u32 %s38, 1
          %s389 = smul.addr %s388, 8
          %s390 = scalar_lea.vmem [#allocation2], %s389
          %s392 = ssub.s32 128, 128
          %393 = vsyncadd %s387, %s392
          %s394 = smul.addr %s28, 128
          %s395 = scalar_lea.hbm %s0, %s394
          %s397 = sshll.u32 %s390, 4
          %s398 = int_to_ptr.vmem [resolvable:$true] %s397
          %400 = dma.hbm_to_vmem [thread:$0]  %s395, 128, %s398, %s387
        $region52: #{tpu_custom_call.1} parent=47 // pred_fallthru
          _
        // Predicated region
        $region53: #{tpu_custom_call.1} parent=47 // pred_check
          %p401 = pneg %p74
        $region54: #{tpu_custom_call.1} parent=47 // pred_check_branch
          %403 = sbr.rel (%p401) target = $region56
        $region55: #{tpu_custom_call.1} parent=47 // pred_region
          %s404 = sand.u32 %s28, 1
          %s405 = scalar_lea.sflag [#allocation6], %s404
          %s406 = sand.u32 %s64, 1
          %s407 = smul.addr %s406, 8
          %s408 = scalar_lea.vmem [#allocation5], %s407
          %s410 = ssub.s32 128, 128
          %411 = vsyncadd %s405, %s410
          %s412 = smul.addr %s28, 128
          %s413 = scalar_lea.hbm %s1, %s412
          %s415 = sshll.u32 %s408, 4
          %s416 = int_to_ptr.vmem [resolvable:$true] %s415
          %418 = dma.hbm_to_vmem [thread:$0]  %s413, 128, %s416, %s405
        $region56: #{tpu_custom_call.1} parent=47 // pred_fallthru
          _
        // Predicated region
        $region57: #{tpu_custom_call.1} parent=47 // pred_check
          %p419 = pneg %p100
        $region58: #{tpu_custom_call.1} parent=47 // pred_check_branch
          %421 = sbr.rel (%p419) target = $region60
        $region59: #{tpu_custom_call.1} parent=47 // pred_region
          %s422 = sand.u32 %s28, 1
          %s423 = scalar_lea.sflag [#allocation6], %s422
          %s424 = sand.u32 %s90, 1
          %s425 = smul.addr %s424, 8
          %s426 = scalar_lea.vmem [#allocation7], %s425
          %s428 = ssub.s32 128, 128
          %429 = vsyncadd %s423, %s428
          %s430 = smul.addr %s28, 128
          %s431 = scalar_lea.hbm %s2, %s430
          %s433 = sshll.u32 %s426, 4
          %s434 = int_to_ptr.vmem [resolvable:$true] %s433
          %436 = dma.hbm_to_vmem [thread:$0]  %s431, 128, %s434, %s423
        $region60: #{tpu_custom_call.1} parent=47 // pred_fallthru
          _
      $region48: #{tpu_custom_call.1} parent=5 // pred_fallthru
        _
      %p437 = scmp.le.s32.totalorder 1, %s28
      %p438 = scmp.lt.s32.totalorder %s28, 3
      %p439 = pnand %p437, %p438
      %p440 = pneg %p439
      // Predicated region
      $region61: #{tpu_custom_call.1} parent=5 // pred_check
        _
      $region62: #{tpu_custom_call.1} parent=5 // pred_check_branch
        %442 = sbr.rel (%p439) target = $region64
      $region63: #{tpu_custom_call.1} parent=5 // pred_region
        %s443 = ssub.s32 %s28, 1
        %s444 = sand.u32 %s41, 1
        %s445 = scalar_lea.sflag [#allocation3], %s444
        %s446 = sand.u32 %s41, 1
        %s447 = smul.addr %s446, 8
        %s448 = scalar_lea.vmem [#allocation2], %s447
        // Predicated region
        $region65: #{tpu_custom_call.1} parent=63 // pred_check
          %p449 = pneg %p54
        $region66: #{tpu_custom_call.1} parent=63 // pred_check_branch
          %451 = sbr.rel (%p449) target = $region68
        $region67: #{tpu_custom_call.1} parent=63 // pred_region
          %452 = dma.done %s445, 128
        $region68: #{tpu_custom_call.1} parent=63 // pred_fallthru
          _
        %s453 = sand.u32 %s33, 1
        %s454 = scalar_lea.sflag [#allocation6], %s453
        %s455 = sand.u32 %s67, 1
        %s456 = smul.addr %s455, 8
        %s457 = scalar_lea.vmem [#allocation5], %s456
        // Predicated region
        $region69: #{tpu_custom_call.1} parent=63 // pred_check
          %p458 = pneg %p80
        $region70: #{tpu_custom_call.1} parent=63 // pred_check_branch
          %460 = sbr.rel (%p458) target = $region72
        $region71: #{tpu_custom_call.1} parent=63 // pred_region
          %461 = dma.done %s454, 128
        $region72: #{tpu_custom_call.1} parent=63 // pred_fallthru
          _
        %s462 = sand.u32 %s33, 1
        %s463 = scalar_lea.sflag [#allocation6], %s462
        %s464 = sand.u32 %s93, 1
        %s465 = smul.addr %s464, 8
        %s466 = scalar_lea.vmem [#allocation7], %s465
        // Predicated region
        $region73: #{tpu_custom_call.1} parent=63 // pred_check
          %p467 = pneg %p106
        $region74: #{tpu_custom_call.1} parent=63 // pred_check_branch
          %469 = sbr.rel (%p467) target = $region76
        $region75: #{tpu_custom_call.1} parent=63 // pred_region
          %470 = dma.done %s463, 128
        $region76: #{tpu_custom_call.1} parent=63 // pred_fallthru
          _
        // Predicated region
        $region77: #{tpu_custom_call.1} parent=63 // pred_check
          %p471 = pneg %p127
        $region78: #{tpu_custom_call.1} parent=63 // pred_check_branch
          %473 = sbr.rel (%p471) target = $region80
        $region79: #{tpu_custom_call.1} parent=63 // pred_region
          %474 = dma.done [#allocation9], 512
        $region80: #{tpu_custom_call.1} parent=63 // pred_fallthru
          _
        // Predicated region
        $region81: #{tpu_custom_call.1} parent=63 // pred_check
          %p475 = pneg %p169
        $region82: #{tpu_custom_call.1} parent=63 // pred_check_branch
          %477 = sbr.rel (%p475) target = $region84
        $region83: #{tpu_custom_call.1} parent=63 // pred_region
          %478 = dma.done [#allocation9], 512
        $region84: #{tpu_custom_call.1} parent=63 // pred_fallthru
          _
        // Predicated region
        $region85: #{tpu_custom_call.1} parent=63 // pred_check
          %p479 = pneg %p211
        $region86: #{tpu_custom_call.1} parent=63 // pred_check_branch
          %481 = sbr.rel (%p479) target = $region88
        $region87: #{tpu_custom_call.1} parent=63 // pred_region
          %482 = dma.done [#allocation12], 512
        $region88: #{tpu_custom_call.1} parent=63 // pred_fallthru
          _
        // Predicated region
        $region89: #{tpu_custom_call.1} parent=63 // pred_check
          %p483 = pneg %p253
        $region90: #{tpu_custom_call.1} parent=63 // pred_check_branch
          %485 = sbr.rel (%p483) target = $region92
        $region91: #{tpu_custom_call.1} parent=63 // pred_region
          %486 = dma.done [#allocation12], 512
        $region92: #{tpu_custom_call.1} parent=63 // pred_fallthru
          _
        %s487 = sand.u32 %s41, 1
        %s488 = scalar_lea.sflag [#allocation3], %s487
        %s489 = sand.u32 %s41, 1
        %s490 = smul.addr %s489, 8
        %s491 = scalar_lea.vmem [#allocation2], %s490
        %p492 = pneg %p54
        %p493 = pneg %p51
        %s494 = sand.u32 %s33, 1
        %s495 = scalar_lea.sflag [#allocation6], %s494
        %s496 = sand.u32 %s67, 1
        %s497 = smul.addr %s496, 8
        %s498 = scalar_lea.vmem [#allocation5], %s497
        %p499 = pneg %p80
        %p500 = pneg %p77
        %s501 = sand.u32 %s33, 1
        %s502 = scalar_lea.sflag [#allocation6], %s501
        %s503 = sand.u32 %s93, 1
        %s504 = smul.addr %s503, 8
        %s505 = scalar_lea.vmem [#allocation7], %s504
        %p506 = pneg %p106
        %p507 = pneg %p103
        %p508 = pneg %p127
        %p509 = pneg %p124
        %p510 = pneg %p148
        %p511 = pneg %p145
        %p512 = pneg %p169
        %p513 = pneg %p166
        %p514 = pneg %p190
        %p515 = pneg %p187
        %p516 = pneg %p211
        %p517 = pneg %p208
        %p518 = pneg %p232
        %p519 = pneg %p229
        %p520 = pneg %p253
        %p521 = pneg %p250
        %p522 = pneg %p274
        %p523 = pneg %p271
        %p524 = pneg %p300
        %p525 = pneg %p297
        %s526 = sand.u32 %s287, 1
        %s527 = scalar_lea.sflag [#allocation4], %s526
        %s528 = sand.u32 %s287, 1
        %s529 = smul.addr %s528, 8
        %s530 = scalar_lea.vmem [#allocation14], %s529
        %v531 = vld [vmem:[%s448] sm:$0xff]
        %v532 = vld [vmem:[%s457] sm:$0xff]
        %v533 = vld [vmem:[%s466] sm:$0xff]
        %v534 = vld [vmem:[#allocation8] sm:$0xff]
        %v535 = vld [vmem:[#allocation8 + $0x8] sm:$0xff]
        %v536 = vld [vmem:[#allocation8 + $0x10] sm:$0xff]
        %v537 = vld [vmem:[#allocation8 + $0x18] sm:$0xff]
        %v538 = vld [vmem:[%s4] sm:$0x1]
        %v540 = vlaneseq
        %v541 = vshrl.u32 %v540, 7
        %v542 = vsub.s32 0, %v541
        %v543 = vrot.slane %v538, %v542
        %vm545 = vcmask 261120
        %v547 = vsel %vm545, %v531, 0
        %549 = vmatprep.subr.mxu0 0.0
        %550 = vmatpush1.msra.mxu0 0.0
        %551 = vmatprep.subr.mxu0 0.0
        %552 = vmatpush1.msra.mxu0 0.0
        %553 = vmatprep.subr.mxu0 0.0
        %554 = vmatpush1.msra.mxu0 0.0
        %555 = vmatprep.subr.mxu0 0.0
        %556 = vmatpush1.msra.mxu0 0.0
        %557 = vmatprep.subr.mxu0 0.0
        %558 = vmatpush1.msra.mxu0 0.0
        %559 = vmatprep.subr.mxu0 0.0
        %560 = vmatpush1.msra.mxu0 0.0
        %561 = vmatprep.subr.mxu0 0.0
        %562 = vmatpush1.msra.mxu0 0.0
        %563 = vmatprep.subr.mxu0 0.0
        %564 = vmatpush1.msra.mxu0 0.0
        %565 = vmatprep.subr.mxu0 0.0
        %566 = vmatpush1.msra.mxu0 0.0
        %567 = vmatprep.subr.mxu0 0.0
        %568 = vmatpush1.msra.mxu0 0.0
        %569 = vmatprep.subr.mxu0 0.0
        %570 = vmatpush1.msra.mxu0 0.0
        %571 = vmatprep.subr.mxu0 0.0
        %572 = vmatpush1.msra.mxu0 0.0
        %573 = vmatprep.subr.mxu0 0.0
        %574 = vmatpush1.msra.mxu0 %v537
        %575 = vmatprep.subr.mxu0 0.0
        %576 = vmatpush1.msra.mxu0 %v536
        %577 = vmatprep.subr.mxu0 0.0
        %578 = vmatpush1.msra.mxu0 %v535
        %579 = vmatprep.subr.mxu0 0.0
        %580 = vmatpush1.msra.mxu0 %v534
        %581 = vmatprep.subr.mxu0 0.0
        %582 = vmatpush2.msra.mxu0 0.0
        %583 = vmatprep.subr.mxu0 0.0
        %584 = vmatpush2.msra.mxu0 0.0
        %585 = vmatprep.subr.mxu0 0.0
        %586 = vmatpush2.msra.mxu0 0.0
        %587 = vmatprep.subr.mxu0 0.0
        %588 = vmatpush2.msra.mxu0 0.0
        %589 = vmatprep.subr.mxu0 0.0
        %590 = vmatpush2.msra.mxu0 0.0
        %591 = vmatprep.subr.mxu0 0.0
        %592 = vmatpush2.msra.mxu0 0.0
        %593 = vmatprep.subr.mxu0 0.0
        %594 = vmatpush2.msra.mxu0 0.0
        %595 = vmatprep.subr.mxu0 0.0
        %596 = vmatpush2.msra.mxu0 0.0
        %597 = vmatprep.subr.mxu0 0.0
        %598 = vmatpush2.msra.mxu0 0.0
        %599 = vmatprep.subr.mxu0 0.0
        %600 = vmatpush2.msra.mxu0 0.0
        %601 = vmatprep.subr.mxu0 0.0
        %602 = vmatpush2.msra.mxu0 0.0
        %603 = vmatprep.subr.mxu0 0.0
        %604 = vmatpush2.msra.mxu0 0.0
        %605 = vmatprep.subr.mxu0 0.0
        %606 = vmatpush2.msra.mxu0 0.0
        %607 = vmatprep.subr.mxu0 0.0
        %608 = vmatpush2.msra.mxu0 0.0
        %609 = vmatprep.subr.mxu0 0.0
        %610 = vmatpush2.msra.mxu0 0.0
        %611 = vmatprep.subr.mxu0 0.0
        %612 = vmatpush2.msra.mxu0 0.0
        %613 = vmatprep.mubr.f32.mxu0 0.0
        %614 = vmatmul.mubr.f32.gmra.mxu0 %v547
        %v615 = vpop.f32.mrf.mxu0
        %v616 = vadd.f32 %v543, %v615
        %v617 = vpop.f32.mrf.mxu0
        %618 = vdwg.mxu0
        %v619 = vmul.f32 %v616, 0.35355338
        %v620 = vld [vmem:[#allocation10] sm:$0xff]
        %v621 = vld [vmem:[#allocation10 + $0x8] sm:$0xff]
        %v622 = vld [vmem:[#allocation10 + $0x10] sm:$0xff]
        %v623 = vld [vmem:[#allocation10 + $0x18] sm:$0xff]
        %v624 = vld [vmem:[%s6] sm:$0x1]
        %v626 = vlaneseq
        %v627 = vshrl.u32 %v626, 7
        %v628 = vsub.s32 0, %v627
        %v629 = vrot.slane %v624, %v628
        %v632 = vsel %vm545, %v532, 0
        %634 = vmatprep.subr.mxu0 0.0
        %635 = vmatpush1.msra.mxu0 0.0
        %636 = vmatprep.subr.mxu0 0.0
        %637 = vmatpush1.msra.mxu0 0.0
        %638 = vmatprep.subr.mxu0 0.0
        %639 = vmatpush1.msra.mxu0 0.0
        %640 = vmatprep.subr.mxu0 0.0
        %641 = vmatpush1.msra.mxu0 0.0
        %642 = vmatprep.subr.mxu0 0.0
        %643 = vmatpush1.msra.mxu0 0.0
        %644 = vmatprep.subr.mxu0 0.0
        %645 = vmatpush1.msra.mxu0 0.0
        %646 = vmatprep.subr.mxu0 0.0
        %647 = vmatpush1.msra.mxu0 0.0
        %648 = vmatprep.subr.mxu0 0.0
        %649 = vmatpush1.msra.mxu0 0.0
        %650 = vmatprep.subr.mxu0 0.0
        %651 = vmatpush1.msra.mxu0 0.0
        %652 = vmatprep.subr.mxu0 0.0
        %653 = vmatpush1.msra.mxu0 0.0
        %654 = vmatprep.subr.mxu0 0.0
        %655 = vmatpush1.msra.mxu0 0.0
        %656 = vmatprep.subr.mxu0 0.0
        %657 = vmatpush1.msra.mxu0 0.0
        %658 = vmatprep.subr.mxu0 0.0
        %659 = vmatpush1.msra.mxu0 %v623
        %660 = vmatprep.subr.mxu0 0.0
        %661 = vmatpush1.msra.mxu0 %v622
        %662 = vmatprep.subr.mxu0 0.0
        %663 = vmatpush1.msra.mxu0 %v621
        %664 = vmatprep.subr.mxu0 0.0
        %665 = vmatpush1.msra.mxu0 %v620
        %666 = vmatprep.subr.mxu0 0.0
        %667 = vmatpush2.msra.mxu0 0.0
        %668 = vmatprep.subr.mxu0 0.0
        %669 = vmatpush2.msra.mxu0 0.0
        %670 = vmatprep.subr.mxu0 0.0
        %671 = vmatpush2.msra.mxu0 0.0
        %672 = vmatprep.subr.mxu0 0.0
        %673 = vmatpush2.msra.mxu0 0.0
        %674 = vmatprep.subr.mxu0 0.0
        %675 = vmatpush2.msra.mxu0 0.0
        %676 = vmatprep.subr.mxu0 0.0
        %677 = vmatpush2.msra.mxu0 0.0
        %678 = vmatprep.subr.mxu0 0.0
        %679 = vmatpush2.msra.mxu0 0.0
        %680 = vmatprep.subr.mxu0 0.0
        %681 = vmatpush2.msra.mxu0 0.0
        %682 = vmatprep.subr.mxu0 0.0
        %683 = vmatpush2.msra.mxu0 0.0
        %684 = vmatprep.subr.mxu0 0.0
        %685 = vmatpush2.msra.mxu0 0.0
        %686 = vmatprep.subr.mxu0 0.0
        %687 = vmatpush2.msra.mxu0 0.0
        %688 = vmatprep.subr.mxu0 0.0
        %689 = vmatpush2.msra.mxu0 0.0
        %690 = vmatprep.subr.mxu0 0.0
        %691 = vmatpush2.msra.mxu0 0.0
        %692 = vmatprep.subr.mxu0 0.0
        %693 = vmatpush2.msra.mxu0 0.0
        %694 = vmatprep.subr.mxu0 0.0
        %695 = vmatpush2.msra.mxu0 0.0
        %696 = vmatprep.subr.mxu0 0.0
        %697 = vmatpush2.msra.mxu0 0.0
        %698 = vmatprep.mubr.f32.mxu0 0.0
        %699 = vmatmul.mubr.f32.gmra.mxu0 %v632
        %v700 = vpop.f32.mrf.mxu0
        %v701 = vadd.f32 %v629, %v700
        %v702 = vpop.f32.mrf.mxu0
        %703 = vdwg.mxu0
        %v704 = vld [vmem:[#allocation11] sm:$0xff]
        %v705 = vld [vmem:[#allocation11 + $0x8] sm:$0xff]
        %v706 = vld [vmem:[#allocation11 + $0x10] sm:$0xff]
        %v707 = vld [vmem:[#allocation11 + $0x18] sm:$0xff]
        %v708 = vld [vmem:[%s8] sm:$0x1]
        %v710 = vlaneseq
        %v711 = vshrl.u32 %v710, 7
        %v712 = vsub.s32 0, %v711
        %v713 = vrot.slane %v708, %v712
        %v716 = vsel %vm545, %v533, 0
        %718 = vmatprep.subr.mxu0 0.0
        %719 = vmatpush1.msra.mxu0 0.0
        %720 = vmatprep.subr.mxu0 0.0
        %721 = vmatpush1.msra.mxu0 0.0
        %722 = vmatprep.subr.mxu0 0.0
        %723 = vmatpush1.msra.mxu0 0.0
        %724 = vmatprep.subr.mxu0 0.0
        %725 = vmatpush1.msra.mxu0 0.0
        %726 = vmatprep.subr.mxu0 0.0
        %727 = vmatpush1.msra.mxu0 0.0
        %728 = vmatprep.subr.mxu0 0.0
        %729 = vmatpush1.msra.mxu0 0.0
        %730 = vmatprep.subr.mxu0 0.0
        %731 = vmatpush1.msra.mxu0 0.0
        %732 = vmatprep.subr.mxu0 0.0
        %733 = vmatpush1.msra.mxu0 0.0
        %734 = vmatprep.subr.mxu0 0.0
        %735 = vmatpush1.msra.mxu0 0.0
        %736 = vmatprep.subr.mxu0 0.0
        %737 = vmatpush1.msra.mxu0 0.0
        %738 = vmatprep.subr.mxu0 0.0
        %739 = vmatpush1.msra.mxu0 0.0
        %740 = vmatprep.subr.mxu0 0.0
        %741 = vmatpush1.msra.mxu0 0.0
        %742 = vmatprep.subr.mxu0 0.0
        %743 = vmatpush1.msra.mxu0 %v707
        %744 = vmatprep.subr.mxu0 0.0
        %745 = vmatpush1.msra.mxu0 %v706
        %746 = vmatprep.subr.mxu0 0.0
        %747 = vmatpush1.msra.mxu0 %v705
        %748 = vmatprep.subr.mxu0 0.0
        %749 = vmatpush1.msra.mxu0 %v704
        %750 = vmatprep.subr.mxu0 0.0
        %751 = vmatpush2.msra.mxu0 0.0
        %752 = vmatprep.subr.mxu0 0.0
        %753 = vmatpush2.msra.mxu0 0.0
        %754 = vmatprep.subr.mxu0 0.0
        %755 = vmatpush2.msra.mxu0 0.0
        %756 = vmatprep.subr.mxu0 0.0
        %757 = vmatpush2.msra.mxu0 0.0
        %758 = vmatprep.subr.mxu0 0.0
        %759 = vmatpush2.msra.mxu0 0.0
        %760 = vmatprep.subr.mxu0 0.0
        %761 = vmatpush2.msra.mxu0 0.0
        %762 = vmatprep.subr.mxu0 0.0
        %763 = vmatpush2.msra.mxu0 0.0
        %764 = vmatprep.subr.mxu0 0.0
        %765 = vmatpush2.msra.mxu0 0.0
        %766 = vmatprep.subr.mxu0 0.0
        %767 = vmatpush2.msra.mxu0 0.0
        %768 = vmatprep.subr.mxu0 0.0
        %769 = vmatpush2.msra.mxu0 0.0
        %770 = vmatprep.subr.mxu0 0.0
        %771 = vmatpush2.msra.mxu0 0.0
        %772 = vmatprep.subr.mxu0 0.0
        %773 = vmatpush2.msra.mxu0 0.0
        %774 = vmatprep.subr.mxu0 0.0
        %775 = vmatpush2.msra.mxu0 0.0
        %776 = vmatprep.subr.mxu0 0.0
        %777 = vmatpush2.msra.mxu0 0.0
        %778 = vmatprep.subr.mxu0 0.0
        %779 = vmatpush2.msra.mxu0 0.0
        %780 = vmatprep.subr.mxu0 0.0
        %781 = vmatpush2.msra.mxu0 0.0
        %782 = vmatprep.mubr.f32.mxu0 0.0
        %783 = vmatmul.mubr.f32.gmra.mxu0 %v716
        %v784 = vpop.f32.mrf.mxu0
        %v785 = vadd.f32 %v713, %v784
        %v786 = vpop.f32.mrf.mxu0
        %787 = vdwg.mxu0
        %v788 = vld [vmem:[#allocation13] sm:$0xff]
        %vm789 = vcmask 64512
        %v791 = vsel %vm789, %v619, 0
        %v794 = vsel %vm789, %v701, 0
        %796 = vmatprep.subr.mxu0 0.0
        %797 = vmatpush1.xpose.msra.mxu0 0.0
        %798 = vmatprep.subr.mxu0 0.0
        %799 = vmatpush1.xpose.msra.mxu0 0.0
        %800 = vmatprep.subr.mxu0 0.0
        %801 = vmatpush1.xpose.msra.mxu0 0.0
        %802 = vmatprep.subr.mxu0 0.0
        %803 = vmatpush1.xpose.msra.mxu0 0.0
        %804 = vmatprep.subr.mxu0 0.0
        %805 = vmatpush1.xpose.msra.mxu0 0.0
        %806 = vmatprep.subr.mxu0 0.0
        %807 = vmatpush1.xpose.msra.mxu0 0.0
        %808 = vmatprep.subr.mxu0 0.0
        %809 = vmatpush1.xpose.msra.mxu0 0.0
        %810 = vmatprep.subr.mxu0 0.0
        %811 = vmatpush1.xpose.msra.mxu0 0.0
        %812 = vmatprep.subr.mxu0 0.0
        %813 = vmatpush1.xpose.msra.mxu0 0.0
        %814 = vmatprep.subr.mxu0 0.0
        %815 = vmatpush1.xpose.msra.mxu0 0.0
        %816 = vmatprep.subr.mxu0 0.0
        %817 = vmatpush1.xpose.msra.mxu0 0.0
        %818 = vmatprep.subr.mxu0 0.0
        %819 = vmatpush1.xpose.msra.mxu0 0.0
        %820 = vmatprep.subr.mxu0 0.0
        %821 = vmatpush1.xpose.msra.mxu0 0.0
        %822 = vmatprep.subr.mxu0 0.0
        %823 = vmatpush1.xpose.msra.mxu0 0.0
        %824 = vmatprep.subr.mxu0 0.0
        %825 = vmatpush1.xpose.msra.mxu0 0.0
        %826 = vmatprep.subr.mxu0 0.0
        %827 = vmatpush1.xpose.msra.mxu0 %v794
        %828 = vmatprep.subr.mxu0 0.0
        %829 = vmatpush2.xpose.msra.mxu0 0.0
        %830 = vmatprep.subr.mxu0 0.0
        %831 = vmatpush2.xpose.msra.mxu0 0.0
        %832 = vmatprep.subr.mxu0 0.0
        %833 = vmatpush2.xpose.msra.mxu0 0.0
        %834 = vmatprep.subr.mxu0 0.0
        %835 = vmatpush2.xpose.msra.mxu0 0.0
        %836 = vmatprep.subr.mxu0 0.0
        %837 = vmatpush2.xpose.msra.mxu0 0.0
        %838 = vmatprep.subr.mxu0 0.0
        %839 = vmatpush2.xpose.msra.mxu0 0.0
        %840 = vmatprep.subr.mxu0 0.0
        %841 = vmatpush2.xpose.msra.mxu0 0.0
        %842 = vmatprep.subr.mxu0 0.0
        %843 = vmatpush2.xpose.msra.mxu0 0.0
        %844 = vmatprep.subr.mxu0 0.0
        %845 = vmatpush2.xpose.msra.mxu0 0.0
        %846 = vmatprep.subr.mxu0 0.0
        %847 = vmatpush2.xpose.msra.mxu0 0.0
        %848 = vmatprep.subr.mxu0 0.0
        %849 = vmatpush2.xpose.msra.mxu0 0.0
        %850 = vmatprep.subr.mxu0 0.0
        %851 = vmatpush2.xpose.msra.mxu0 0.0
        %852 = vmatprep.subr.mxu0 0.0
        %853 = vmatpush2.xpose.msra.mxu0 0.0
        %854 = vmatprep.subr.mxu0 0.0
        %855 = vmatpush2.xpose.msra.mxu0 0.0
        %856 = vmatprep.subr.mxu0 0.0
        %857 = vmatpush2.xpose.msra.mxu0 0.0
        %858 = vmatprep.subr.mxu0 0.0
        %859 = vmatpush2.xpose.msra.mxu0 0.0
        %860 = vmatprep.mubr.f32.mxu0 0.0
        %861 = vmatmul.mubr.f32.gmra.mxu0 %v791
        %v862 = vpop.f32.mrf.mxu0
        %v863 = vadd.f32 0.0, %v862
        %v864 = vpop.f32.mrf.mxu0
        %865 = vdwg.mxu0
        %v866 = vsel %vm789, %v863, -inf
        %867 = vmax.xlane.f32.xlu0 %v866
        %v868 = vpop.xlane.xlu0 %867
        %v869 = vsub.f32 %v863, %v868
        %v870 = vmul.f32 %v869, 1.442695
        %v871 = vpow.pop %v870
        %v872 = vsel %vm789, %v871, 0.0
        %873 = vadd.xlane.f32.xlu0 %v872
        %v874 = vpop.xlane.xlu0 %873
        %v876 = vsel %vm789, %v871, 0
        %878 = vmatprep.subr.mxu0 0.0
        %879 = vmatpush1.msra.mxu0 0.0
        %880 = vmatprep.subr.mxu0 0.0
        %881 = vmatpush1.msra.mxu0 0.0
        %882 = vmatprep.subr.mxu0 0.0
        %883 = vmatpush1.msra.mxu0 0.0
        %884 = vmatprep.subr.mxu0 0.0
        %885 = vmatpush1.msra.mxu0 0.0
        %886 = vmatprep.subr.mxu0 0.0
        %887 = vmatpush1.msra.mxu0 0.0
        %888 = vmatprep.subr.mxu0 0.0
        %889 = vmatpush1.msra.mxu0 0.0
        %890 = vmatprep.subr.mxu0 0.0
        %891 = vmatpush1.msra.mxu0 0.0
        %892 = vmatprep.subr.mxu0 0.0
        %893 = vmatpush1.msra.mxu0 0.0
        %894 = vmatprep.subr.mxu0 0.0
        %895 = vmatpush1.msra.mxu0 0.0
        %896 = vmatprep.subr.mxu0 0.0
        %897 = vmatpush1.msra.mxu0 0.0
        %898 = vmatprep.subr.mxu0 0.0
        %899 = vmatpush1.msra.mxu0 0.0
        %900 = vmatprep.subr.mxu0 0.0
        %901 = vmatpush1.msra.mxu0 0.0
        %902 = vmatprep.subr.mxu0 0.0
        %903 = vmatpush1.msra.mxu0 0.0
        %904 = vmatprep.subr.mxu0 0.0
        %905 = vmatpush1.msra.mxu0 0.0
        %906 = vmatprep.subr.mxu0 0.0
        %907 = vmatpush1.msra.mxu0 0.0
        %908 = vmatprep.subr.mxu0 0.0
        %909 = vmatpush1.msra.mxu0 %v785
        %910 = vmatprep.subr.mxu0 0.0
        %911 = vmatpush2.msra.mxu0 0.0
        %912 = vmatprep.subr.mxu0 0.0
        %913 = vmatpush2.msra.mxu0 0.0
        %914 = vmatprep.subr.mxu0 0.0
        %915 = vmatpush2.msra.mxu0 0.0
        %916 = vmatprep.subr.mxu0 0.0
        %917 = vmatpush2.msra.mxu0 0.0
        %918 = vmatprep.subr.mxu0 0.0
        %919 = vmatpush2.msra.mxu0 0.0
        %920 = vmatprep.subr.mxu0 0.0
        %921 = vmatpush2.msra.mxu0 0.0
        %922 = vmatprep.subr.mxu0 0.0
        %923 = vmatpush2.msra.mxu0 0.0
        %924 = vmatprep.subr.mxu0 0.0
        %925 = vmatpush2.msra.mxu0 0.0
        %926 = vmatprep.subr.mxu0 0.0
        %927 = vmatpush2.msra.mxu0 0.0
        %928 = vmatprep.subr.mxu0 0.0
        %929 = vmatpush2.msra.mxu0 0.0
        %930 = vmatprep.subr.mxu0 0.0
        %931 = vmatpush2.msra.mxu0 0.0
        %932 = vmatprep.subr.mxu0 0.0
        %933 = vmatpush2.msra.mxu0 0.0
        %934 = vmatprep.subr.mxu0 0.0
        %935 = vmatpush2.msra.mxu0 0.0
        %936 = vmatprep.subr.mxu0 0.0
        %937 = vmatpush2.msra.mxu0 0.0
        %938 = vmatprep.subr.mxu0 0.0
        %939 = vmatpush2.msra.mxu0 0.0
        %940 = vmatprep.subr.mxu0 0.0
        %941 = vmatpush2.msra.mxu0 0.0
        %942 = vmatprep.mubr.f32.mxu0 0.0
        %943 = vmatmul.mubr.f32.gmra.mxu0 %v876
        %v944 = vpop.f32.mrf.mxu0
        %v945 = vadd.f32 0.0, %v944
        %v946 = vpop.f32.mrf.mxu0
        %947 = vdwg.mxu0
        %v948 = vrcp.pop %v874
        %v949 = vmul.f32 %v945, %v948
        %v950 = vld [vmem:[#allocation13 + $0x8] sm:$0xff]
        %951 = vrot.lane.b32.xlu0 %v619, 120
        %v952 = vpop.permute.xlu0 %951
        %953 = vrot.lane.b32.xlu0 %v701, 120
        %v954 = vpop.permute.xlu0 %953
        %v955 = vsel %vm789, %v952, 0
        %v957 = vsel %vm789, %v954, 0
        %959 = vmatprep.subr.mxu0 0.0
        %960 = vmatpush1.xpose.msra.mxu0 0.0
        %961 = vmatprep.subr.mxu0 0.0
        %962 = vmatpush1.xpose.msra.mxu0 0.0
        %963 = vmatprep.subr.mxu0 0.0
        %964 = vmatpush1.xpose.msra.mxu0 0.0
        %965 = vmatprep.subr.mxu0 0.0
        %966 = vmatpush1.xpose.msra.mxu0 0.0
        %967 = vmatprep.subr.mxu0 0.0
        %968 = vmatpush1.xpose.msra.mxu0 0.0
        %969 = vmatprep.subr.mxu0 0.0
        %970 = vmatpush1.xpose.msra.mxu0 0.0
        %971 = vmatprep.subr.mxu0 0.0
        %972 = vmatpush1.xpose.msra.mxu0 0.0
        %973 = vmatprep.subr.mxu0 0.0
        %974 = vmatpush1.xpose.msra.mxu0 0.0
        %975 = vmatprep.subr.mxu0 0.0
        %976 = vmatpush1.xpose.msra.mxu0 0.0
        %977 = vmatprep.subr.mxu0 0.0
        %978 = vmatpush1.xpose.msra.mxu0 0.0
        %979 = vmatprep.subr.mxu0 0.0
        %980 = vmatpush1.xpose.msra.mxu0 0.0
        %981 = vmatprep.subr.mxu0 0.0
        %982 = vmatpush1.xpose.msra.mxu0 0.0
        %983 = vmatprep.subr.mxu0 0.0
        %984 = vmatpush1.xpose.msra.mxu0 0.0
        %985 = vmatprep.subr.mxu0 0.0
        %986 = vmatpush1.xpose.msra.mxu0 0.0
        %987 = vmatprep.subr.mxu0 0.0
        %988 = vmatpush1.xpose.msra.mxu0 0.0
        %989 = vmatprep.subr.mxu0 0.0
        %990 = vmatpush1.xpose.msra.mxu0 %v957
        %991 = vmatprep.subr.mxu0 0.0
        %992 = vmatpush2.xpose.msra.mxu0 0.0
        %993 = vmatprep.subr.mxu0 0.0
        %994 = vmatpush2.xpose.msra.mxu0 0.0
        %995 = vmatprep.subr.mxu0 0.0
        %996 = vmatpush2.xpose.msra.mxu0 0.0
        %997 = vmatprep.subr.mxu0 0.0
        %998 = vmatpush2.xpose.msra.mxu0 0.0
        %999 = vmatprep.subr.mxu0 0.0
        %1000 = vmatpush2.xpose.msra.mxu0 0.0
        %1001 = vmatprep.subr.mxu0 0.0
        %1002 = vmatpush2.xpose.msra.mxu0 0.0
        %1003 = vmatprep.subr.mxu0 0.0
        %1004 = vmatpush2.xpose.msra.mxu0 0.0
        %1005 = vmatprep.subr.mxu0 0.0
        %1006 = vmatpush2.xpose.msra.mxu0 0.0
        %1007 = vmatprep.subr.mxu0 0.0
        %1008 = vmatpush2.xpose.msra.mxu0 0.0
        %1009 = vmatprep.subr.mxu0 0.0
        %1010 = vmatpush2.xpose.msra.mxu0 0.0
        %1011 = vmatprep.subr.mxu0 0.0
        %1012 = vmatpush2.xpose.msra.mxu0 0.0
        %1013 = vmatprep.subr.mxu0 0.0
        %1014 = vmatpush2.xpose.msra.mxu0 0.0
        %1015 = vmatprep.subr.mxu0 0.0
        %1016 = vmatpush2.xpose.msra.mxu0 0.0
        %1017 = vmatprep.subr.mxu0 0.0
        %1018 = vmatpush2.xpose.msra.mxu0 0.0
        %1019 = vmatprep.subr.mxu0 0.0
        %1020 = vmatpush2.xpose.msra.mxu0 0.0
        %1021 = vmatprep.subr.mxu0 0.0
        %1022 = vmatpush2.xpose.msra.mxu0 0.0
        %1023 = vmatprep.mubr.f32.mxu0 0.0
        %1024 = vmatmul.mubr.f32.gmra.mxu0 %v955
        %v1025 = vpop.f32.mrf.mxu0
        %v1026 = vadd.f32 0.0, %v1025
        %v1027 = vpop.f32.mrf.mxu0
        %1028 = vdwg.mxu0
        %v1029 = vsel %vm789, %v1026, -inf
        %1030 = vmax.xlane.f32.xlu0 %v1029
        %v1031 = vpop.xlane.xlu0 %1030
        %v1032 = vsub.f32 %v1026, %v1031
        %v1033 = vmul.f32 %v1032, 1.442695
        %v1034 = vpow.pop %v1033
        %v1035 = vsel %vm789, %v1034, 0.0
        %1036 = vadd.xlane.f32.xlu0 %v1035
        %v1037 = vpop.xlane.xlu0 %1036
        %1039 = vrot.lane.b32.xlu0 %v785, 120
        %v1040 = vpop.permute.xlu0 %1039
        %v1043 = vsel %vm789, %v1034, 0
        %1045 = vmatprep.subr.mxu0 0.0
        %1046 = vmatpush1.msra.mxu0 0.0
        %1047 = vmatprep.subr.mxu0 0.0
        %1048 = vmatpush1.msra.mxu0 0.0
        %1049 = vmatprep.subr.mxu0 0.0
        %1050 = vmatpush1.msra.mxu0 0.0
        %1051 = vmatprep.subr.mxu0 0.0
        %1052 = vmatpush1.msra.mxu0 0.0
        %1053 = vmatprep.subr.mxu0 0.0
        %1054 = vmatpush1.msra.mxu0 0.0
        %1055 = vmatprep.subr.mxu0 0.0
        %1056 = vmatpush1.msra.mxu0 0.0
        %1057 = vmatprep.subr.mxu0 0.0
        %1058 = vmatpush1.msra.mxu0 0.0
        %1059 = vmatprep.subr.mxu0 0.0
        %1060 = vmatpush1.msra.mxu0 0.0
        %1061 = vmatprep.subr.mxu0 0.0
        %1062 = vmatpush1.msra.mxu0 0.0
        %1063 = vmatprep.subr.mxu0 0.0
        %1064 = vmatpush1.msra.mxu0 0.0
        %1065 = vmatprep.subr.mxu0 0.0
        %1066 = vmatpush1.msra.mxu0 0.0
        %1067 = vmatprep.subr.mxu0 0.0
        %1068 = vmatpush1.msra.mxu0 0.0
        %1069 = vmatprep.subr.mxu0 0.0
        %1070 = vmatpush1.msra.mxu0 0.0
        %1071 = vmatprep.subr.mxu0 0.0
        %1072 = vmatpush1.msra.mxu0 0.0
        %1073 = vmatprep.subr.mxu0 0.0
        %1074 = vmatpush1.msra.mxu0 0.0
        %1075 = vmatprep.subr.mxu0 0.0
        %1076 = vmatpush1.msra.mxu0 %v1040
        %1077 = vmatprep.subr.mxu0 0.0
        %1078 = vmatpush2.msra.mxu0 0.0
        %1079 = vmatprep.subr.mxu0 0.0
        %1080 = vmatpush2.msra.mxu0 0.0
        %1081 = vmatprep.subr.mxu0 0.0
        %1082 = vmatpush2.msra.mxu0 0.0
        %1083 = vmatprep.subr.mxu0 0.0
        %1084 = vmatpush2.msra.mxu0 0.0
        %1085 = vmatprep.subr.mxu0 0.0
        %1086 = vmatpush2.msra.mxu0 0.0
        %1087 = vmatprep.subr.mxu0 0.0
        %1088 = vmatpush2.msra.mxu0 0.0
        %1089 = vmatprep.subr.mxu0 0.0
        %1090 = vmatpush2.msra.mxu0 0.0
        %1091 = vmatprep.subr.mxu0 0.0
        %1092 = vmatpush2.msra.mxu0 0.0
        %1093 = vmatprep.subr.mxu0 0.0
        %1094 = vmatpush2.msra.mxu0 0.0
        %1095 = vmatprep.subr.mxu0 0.0
        %1096 = vmatpush2.msra.mxu0 0.0
        %1097 = vmatprep.subr.mxu0 0.0
        %1098 = vmatpush2.msra.mxu0 0.0
        %1099 = vmatprep.subr.mxu0 0.0
        %1100 = vmatpush2.msra.mxu0 0.0
        %1101 = vmatprep.subr.mxu0 0.0
        %1102 = vmatpush2.msra.mxu0 0.0
        %1103 = vmatprep.subr.mxu0 0.0
        %1104 = vmatpush2.msra.mxu0 0.0
        %1105 = vmatprep.subr.mxu0 0.0
        %1106 = vmatpush2.msra.mxu0 0.0
        %1107 = vmatprep.subr.mxu0 0.0
        %1108 = vmatpush2.msra.mxu0 0.0
        %1109 = vmatprep.mubr.f32.mxu0 0.0
        %1110 = vmatmul.mubr.f32.gmra.mxu0 %v1043
        %v1111 = vpop.f32.mrf.mxu0
        %v1112 = vadd.f32 0.0, %v1111
        %v1113 = vpop.f32.mrf.mxu0
        %1114 = vdwg.mxu0
        %v1115 = vrcp.pop %v1037
        %v1116 = vmul.f32 %v1112, %v1115
        %v1118 = vsel %vm789, %v1116, 0
        %1120 = vmatprep.subr.mxu0 0.0
        %1121 = vmatpush1.msra.mxu0 0.0
        %1122 = vmatprep.subr.mxu0 0.0
        %1123 = vmatpush1.msra.mxu0 0.0
        %1124 = vmatprep.subr.mxu0 0.0
        %1125 = vmatpush1.msra.mxu0 0.0
        %1126 = vmatprep.subr.mxu0 0.0
        %1127 = vmatpush1.msra.mxu0 0.0
        %1128 = vmatprep.subr.mxu0 0.0
        %1129 = vmatpush1.msra.mxu0 0.0
        %1130 = vmatprep.subr.mxu0 0.0
        %1131 = vmatpush1.msra.mxu0 0.0
        %1132 = vmatprep.subr.mxu0 0.0
        %1133 = vmatpush1.msra.mxu0 0.0
        %1134 = vmatprep.subr.mxu0 0.0
        %1135 = vmatpush1.msra.mxu0 0.0
        %1136 = vmatprep.subr.mxu0 0.0
        %1137 = vmatpush1.msra.mxu0 0.0
        %1138 = vmatprep.subr.mxu0 0.0
        %1139 = vmatpush1.msra.mxu0 0.0
        %1140 = vmatprep.subr.mxu0 0.0
        %1141 = vmatpush1.msra.mxu0 0.0
        %1142 = vmatprep.subr.mxu0 0.0
        %1143 = vmatpush1.msra.mxu0 0.0
        %1144 = vmatprep.subr.mxu0 0.0
        %1145 = vmatpush1.msra.mxu0 0.0
        %1146 = vmatprep.subr.mxu0 0.0
        %1147 = vmatpush1.msra.mxu0 0.0
        %1148 = vmatprep.subr.mxu0 0.0
        %1149 = vmatpush1.msra.mxu0 0.0
        %1150 = vmatprep.subr.mxu0 0.0
        %1151 = vmatpush1.msra.mxu0 %v950
        %1152 = vmatprep.subr.mxu0 0.0
        %1153 = vmatpush2.msra.mxu0 0.0
        %1154 = vmatprep.subr.mxu0 0.0
        %1155 = vmatpush2.msra.mxu0 0.0
        %1156 = vmatprep.subr.mxu0 0.0
        %1157 = vmatpush2.msra.mxu0 0.0
        %1158 = vmatprep.subr.mxu0 0.0
        %1159 = vmatpush2.msra.mxu0 0.0
        %1160 = vmatprep.subr.mxu0 0.0
        %1161 = vmatpush2.msra.mxu0 0.0
        %1162 = vmatprep.subr.mxu0 0.0
        %1163 = vmatpush2.msra.mxu0 0.0
        %1164 = vmatprep.subr.mxu0 0.0
        %1165 = vmatpush2.msra.mxu0 0.0
        %1166 = vmatprep.subr.mxu0 0.0
        %1167 = vmatpush2.msra.mxu0 0.0
        %1168 = vmatprep.subr.mxu0 0.0
        %1169 = vmatpush2.msra.mxu0 0.0
        %1170 = vmatprep.subr.mxu0 0.0
        %1171 = vmatpush2.msra.mxu0 0.0
        %1172 = vmatprep.subr.mxu0 0.0
        %1173 = vmatpush2.msra.mxu0 0.0
        %1174 = vmatprep.subr.mxu0 0.0
        %1175 = vmatpush2.msra.mxu0 0.0
        %1176 = vmatprep.subr.mxu0 0.0
        %1177 = vmatpush2.msra.mxu0 0.0
        %1178 = vmatprep.subr.mxu0 0.0
        %1179 = vmatpush2.msra.mxu0 0.0
        %1180 = vmatprep.subr.mxu0 0.0
        %1181 = vmatpush2.msra.mxu0 0.0
        %1182 = vmatprep.subr.mxu0 0.0
        %1183 = vmatpush2.msra.mxu0 0.0
        %1184 = vmatprep.mubr.f32.mxu0 0.0
        %1185 = vmatmul.mubr.f32.gmra.mxu0 %v1118
        %v1186 = vpop.f32.mrf.mxu0
        %v1187 = vadd.f32 0.0, %v1186
        %v1188 = vpop.f32.mrf.mxu0
        %1189 = vdwg.mxu0
        %v1191 = vsel %vm789, %v949, 0
        %1193 = vmatprep.subr.mxu0 0.0
        %1194 = vmatpush1.msra.mxu0 0.0
        %1195 = vmatprep.subr.mxu0 0.0
        %1196 = vmatpush1.msra.mxu0 0.0
        %1197 = vmatprep.subr.mxu0 0.0
        %1198 = vmatpush1.msra.mxu0 0.0
        %1199 = vmatprep.subr.mxu0 0.0
        %1200 = vmatpush1.msra.mxu0 0.0
        %1201 = vmatprep.subr.mxu0 0.0
        %1202 = vmatpush1.msra.mxu0 0.0
        %1203 = vmatprep.subr.mxu0 0.0
        %1204 = vmatpush1.msra.mxu0 0.0
        %1205 = vmatprep.subr.mxu0 0.0
        %1206 = vmatpush1.msra.mxu0 0.0
        %1207 = vmatprep.subr.mxu0 0.0
        %1208 = vmatpush1.msra.mxu0 0.0
        %1209 = vmatprep.subr.mxu0 0.0
        %1210 = vmatpush1.msra.mxu0 0.0
        %1211 = vmatprep.subr.mxu0 0.0
        %1212 = vmatpush1.msra.mxu0 0.0
        %1213 = vmatprep.subr.mxu0 0.0
        %1214 = vmatpush1.msra.mxu0 0.0
        %1215 = vmatprep.subr.mxu0 0.0
        %1216 = vmatpush1.msra.mxu0 0.0
        %1217 = vmatprep.subr.mxu0 0.0
        %1218 = vmatpush1.msra.mxu0 0.0
        %1219 = vmatprep.subr.mxu0 0.0
        %1220 = vmatpush1.msra.mxu0 0.0
        %1221 = vmatprep.subr.mxu0 0.0
        %1222 = vmatpush1.msra.mxu0 0.0
        %1223 = vmatprep.subr.mxu0 0.0
        %1224 = vmatpush1.msra.mxu0 %v788
        %1225 = vmatprep.subr.mxu0 0.0
        %1226 = vmatpush2.msra.mxu0 0.0
        %1227 = vmatprep.subr.mxu0 0.0
        %1228 = vmatpush2.msra.mxu0 0.0
        %1229 = vmatprep.subr.mxu0 0.0
        %1230 = vmatpush2.msra.mxu0 0.0
        %1231 = vmatprep.subr.mxu0 0.0
        %1232 = vmatpush2.msra.mxu0 0.0
        %1233 = vmatprep.subr.mxu0 0.0
        %1234 = vmatpush2.msra.mxu0 0.0
        %1235 = vmatprep.subr.mxu0 0.0
        %1236 = vmatpush2.msra.mxu0 0.0
        %1237 = vmatprep.subr.mxu0 0.0
        %1238 = vmatpush2.msra.mxu0 0.0
        %1239 = vmatprep.subr.mxu0 0.0
        %1240 = vmatpush2.msra.mxu0 0.0
        %1241 = vmatprep.subr.mxu0 0.0
        %1242 = vmatpush2.msra.mxu0 0.0
        %1243 = vmatprep.subr.mxu0 0.0
        %1244 = vmatpush2.msra.mxu0 0.0
        %1245 = vmatprep.subr.mxu0 0.0
        %1246 = vmatpush2.msra.mxu0 0.0
        %1247 = vmatprep.subr.mxu0 0.0
        %1248 = vmatpush2.msra.mxu0 0.0
        %1249 = vmatprep.subr.mxu0 0.0
        %1250 = vmatpush2.msra.mxu0 0.0
        %1251 = vmatprep.subr.mxu0 0.0
        %1252 = vmatpush2.msra.mxu0 0.0
        %1253 = vmatprep.subr.mxu0 0.0
        %1254 = vmatpush2.msra.mxu0 0.0
        %1255 = vmatprep.subr.mxu0 0.0
        %1256 = vmatpush2.msra.mxu0 0.0
        %1257 = vmatprep.mubr.f32.mxu0 0.0
        %1258 = vmatmul.mubr.f32.gmra.mxu0 %v1191
        %v1259 = vpop.f32.mrf.mxu0
        %v1260 = vadd.f32 %v1187, %v1259
        %v1261 = vpop.f32.mrf.mxu0
        %1262 = vdwg.mxu0
        %v1263 = vld [vmem:[#allocation13 + $0x10] sm:$0xff]
        %1264 = vrot.lane.b32.xlu0 %v619, 112
        %v1265 = vpop.permute.xlu0 %1264
        %1266 = vrot.lane.b32.xlu0 %v701, 112
        %v1267 = vpop.permute.xlu0 %1266
        %v1268 = vsel %vm789, %v1265, 0
        %v1270 = vsel %vm789, %v1267, 0
        %1272 = vmatprep.subr.mxu0 0.0
        %1273 = vmatpush1.xpose.msra.mxu0 0.0
        %1274 = vmatprep.subr.mxu0 0.0
        %1275 = vmatpush1.xpose.msra.mxu0 0.0
        %1276 = vmatprep.subr.mxu0 0.0
        %1277 = vmatpush1.xpose.msra.mxu0 0.0
        %1278 = vmatprep.subr.mxu0 0.0
        %1279 = vmatpush1.xpose.msra.mxu0 0.0
        %1280 = vmatprep.subr.mxu0 0.0
        %1281 = vmatpush1.xpose.msra.mxu0 0.0
        %1282 = vmatprep.subr.mxu0 0.0
        %1283 = vmatpush1.xpose.msra.mxu0 0.0
        %1284 = vmatprep.subr.mxu0 0.0
        %1285 = vmatpush1.xpose.msra.mxu0 0.0
        %1286 = vmatprep.subr.mxu0 0.0
        %1287 = vmatpush1.xpose.msra.mxu0 0.0
        %1288 = vmatprep.subr.mxu0 0.0
        %1289 = vmatpush1.xpose.msra.mxu0 0.0
        %1290 = vmatprep.subr.mxu0 0.0
        %1291 = vmatpush1.xpose.msra.mxu0 0.0
        %1292 = vmatprep.subr.mxu0 0.0
        %1293 = vmatpush1.xpose.msra.mxu0 0.0
        %1294 = vmatprep.subr.mxu0 0.0
        %1295 = vmatpush1.xpose.msra.mxu0 0.0
        %1296 = vmatprep.subr.mxu0 0.0
        %1297 = vmatpush1.xpose.msra.mxu0 0.0
        %1298 = vmatprep.subr.mxu0 0.0
        %1299 = vmatpush1.xpose.msra.mxu0 0.0
        %1300 = vmatprep.subr.mxu0 0.0
        %1301 = vmatpush1.xpose.msra.mxu0 0.0
        %1302 = vmatprep.subr.mxu0 0.0
        %1303 = vmatpush1.xpose.msra.mxu0 %v1270
        %1304 = vmatprep.subr.mxu0 0.0
        %1305 = vmatpush2.xpose.msra.mxu0 0.0
        %1306 = vmatprep.subr.mxu0 0.0
        %1307 = vmatpush2.xpose.msra.mxu0 0.0
        %1308 = vmatprep.subr.mxu0 0.0
        %1309 = vmatpush2.xpose.msra.mxu0 0.0
        %1310 = vmatprep.subr.mxu0 0.0
        %1311 = vmatpush2.xpose.msra.mxu0 0.0
        %1312 = vmatprep.subr.mxu0 0.0
        %1313 = vmatpush2.xpose.msra.mxu0 0.0
        %1314 = vmatprep.subr.mxu0 0.0
        %1315 = vmatpush2.xpose.msra.mxu0 0.0
        %1316 = vmatprep.subr.mxu0 0.0
        %1317 = vmatpush2.xpose.msra.mxu0 0.0
        %1318 = vmatprep.subr.mxu0 0.0
        %1319 = vmatpush2.xpose.msra.mxu0 0.0
        %1320 = vmatprep.subr.mxu0 0.0
        %1321 = vmatpush2.xpose.msra.mxu0 0.0
        %1322 = vmatprep.subr.mxu0 0.0
        %1323 = vmatpush2.xpose.msra.mxu0 0.0
        %1324 = vmatprep.subr.mxu0 0.0
        %1325 = vmatpush2.xpose.msra.mxu0 0.0
        %1326 = vmatprep.subr.mxu0 0.0
        %1327 = vmatpush2.xpose.msra.mxu0 0.0
        %1328 = vmatprep.subr.mxu0 0.0
        %1329 = vmatpush2.xpose.msra.mxu0 0.0
        %1330 = vmatprep.subr.mxu0 0.0
        %1331 = vmatpush2.xpose.msra.mxu0 0.0
        %1332 = vmatprep.subr.mxu0 0.0
        %1333 = vmatpush2.xpose.msra.mxu0 0.0
        %1334 = vmatprep.subr.mxu0 0.0
        %1335 = vmatpush2.xpose.msra.mxu0 0.0
        %1336 = vmatprep.mubr.f32.mxu0 0.0
        %1337 = vmatmul.mubr.f32.gmra.mxu0 %v1268
        %v1338 = vpop.f32.mrf.mxu0
        %v1339 = vadd.f32 0.0, %v1338
        %v1340 = vpop.f32.mrf.mxu0
        %1341 = vdwg.mxu0
        %v1342 = vsel %vm789, %v1339, -inf
        %1343 = vmax.xlane.f32.xlu0 %v1342
        %v1344 = vpop.xlane.xlu0 %1343
        %v1345 = vsub.f32 %v1339, %v1344
        %v1346 = vmul.f32 %v1345, 1.442695
        %v1347 = vpow.pop %v1346
        %v1348 = vsel %vm789, %v1347, 0.0
        %1349 = vadd.xlane.f32.xlu0 %v1348
        %v1350 = vpop.xlane.xlu0 %1349
        %1351 = vrot.lane.b32.xlu0 %v785, 112
        %v1352 = vpop.permute.xlu0 %1351
        %v1355 = vsel %vm789, %v1347, 0
        %1357 = vmatprep.subr.mxu0 0.0
        %1358 = vmatpush1.msra.mxu0 0.0
        %1359 = vmatprep.subr.mxu0 0.0
        %1360 = vmatpush1.msra.mxu0 0.0
        %1361 = vmatprep.subr.mxu0 0.0
        %1362 = vmatpush1.msra.mxu0 0.0
        %1363 = vmatprep.subr.mxu0 0.0
        %1364 = vmatpush1.msra.mxu0 0.0
        %1365 = vmatprep.subr.mxu0 0.0
        %1366 = vmatpush1.msra.mxu0 0.0
        %1367 = vmatprep.subr.mxu0 0.0
        %1368 = vmatpush1.msra.mxu0 0.0
        %1369 = vmatprep.subr.mxu0 0.0
        %1370 = vmatpush1.msra.mxu0 0.0
        %1371 = vmatprep.subr.mxu0 0.0
        %1372 = vmatpush1.msra.mxu0 0.0
        %1373 = vmatprep.subr.mxu0 0.0
        %1374 = vmatpush1.msra.mxu0 0.0
        %1375 = vmatprep.subr.mxu0 0.0
        %1376 = vmatpush1.msra.mxu0 0.0
        %1377 = vmatprep.subr.mxu0 0.0
        %1378 = vmatpush1.msra.mxu0 0.0
        %1379 = vmatprep.subr.mxu0 0.0
        %1380 = vmatpush1.msra.mxu0 0.0
        %1381 = vmatprep.subr.mxu0 0.0
        %1382 = vmatpush1.msra.mxu0 0.0
        %1383 = vmatprep.subr.mxu0 0.0
        %1384 = vmatpush1.msra.mxu0 0.0
        %1385 = vmatprep.subr.mxu0 0.0
        %1386 = vmatpush1.msra.mxu0 0.0
        %1387 = vmatprep.subr.mxu0 0.0
        %1388 = vmatpush1.msra.mxu0 %v1352
        %1389 = vmatprep.subr.mxu0 0.0
        %1390 = vmatpush2.msra.mxu0 0.0
        %1391 = vmatprep.subr.mxu0 0.0
        %1392 = vmatpush2.msra.mxu0 0.0
        %1393 = vmatprep.subr.mxu0 0.0
        %1394 = vmatpush2.msra.mxu0 0.0
        %1395 = vmatprep.subr.mxu0 0.0
        %1396 = vmatpush2.msra.mxu0 0.0
        %1397 = vmatprep.subr.mxu0 0.0
        %1398 = vmatpush2.msra.mxu0 0.0
        %1399 = vmatprep.subr.mxu0 0.0
        %1400 = vmatpush2.msra.mxu0 0.0
        %1401 = vmatprep.subr.mxu0 0.0
        %1402 = vmatpush2.msra.mxu0 0.0
        %1403 = vmatprep.subr.mxu0 0.0
        %1404 = vmatpush2.msra.mxu0 0.0
        %1405 = vmatprep.subr.mxu0 0.0
        %1406 = vmatpush2.msra.mxu0 0.0
        %1407 = vmatprep.subr.mxu0 0.0
        %1408 = vmatpush2.msra.mxu0 0.0
        %1409 = vmatprep.subr.mxu0 0.0
        %1410 = vmatpush2.msra.mxu0 0.0
        %1411 = vmatprep.subr.mxu0 0.0
        %1412 = vmatpush2.msra.mxu0 0.0
        %1413 = vmatprep.subr.mxu0 0.0
        %1414 = vmatpush2.msra.mxu0 0.0
        %1415 = vmatprep.subr.mxu0 0.0
        %1416 = vmatpush2.msra.mxu0 0.0
        %1417 = vmatprep.subr.mxu0 0.0
        %1418 = vmatpush2.msra.mxu0 0.0
        %1419 = vmatprep.subr.mxu0 0.0
        %1420 = vmatpush2.msra.mxu0 0.0
        %1421 = vmatprep.mubr.f32.mxu0 0.0
        %1422 = vmatmul.mubr.f32.gmra.mxu0 %v1355
        %v1423 = vpop.f32.mrf.mxu0
        %v1424 = vadd.f32 0.0, %v1423
        %v1425 = vpop.f32.mrf.mxu0
        %1426 = vdwg.mxu0
        %v1427 = vrcp.pop %v1350
        %v1428 = vmul.f32 %v1424, %v1427
        %v1430 = vsel %vm789, %v1428, 0
        %1432 = vmatprep.subr.mxu0 0.0
        %1433 = vmatpush1.msra.mxu0 0.0
        %1434 = vmatprep.subr.mxu0 0.0
        %1435 = vmatpush1.msra.mxu0 0.0
        %1436 = vmatprep.subr.mxu0 0.0
        %1437 = vmatpush1.msra.mxu0 0.0
        %1438 = vmatprep.subr.mxu0 0.0
        %1439 = vmatpush1.msra.mxu0 0.0
        %1440 = vmatprep.subr.mxu0 0.0
        %1441 = vmatpush1.msra.mxu0 0.0
        %1442 = vmatprep.subr.mxu0 0.0
        %1443 = vmatpush1.msra.mxu0 0.0
        %1444 = vmatprep.subr.mxu0 0.0
        %1445 = vmatpush1.msra.mxu0 0.0
        %1446 = vmatprep.subr.mxu0 0.0
        %1447 = vmatpush1.msra.mxu0 0.0
        %1448 = vmatprep.subr.mxu0 0.0
        %1449 = vmatpush1.msra.mxu0 0.0
        %1450 = vmatprep.subr.mxu0 0.0
        %1451 = vmatpush1.msra.mxu0 0.0
        %1452 = vmatprep.subr.mxu0 0.0
        %1453 = vmatpush1.msra.mxu0 0.0
        %1454 = vmatprep.subr.mxu0 0.0
        %1455 = vmatpush1.msra.mxu0 0.0
        %1456 = vmatprep.subr.mxu0 0.0
        %1457 = vmatpush1.msra.mxu0 0.0
        %1458 = vmatprep.subr.mxu0 0.0
        %1459 = vmatpush1.msra.mxu0 0.0
        %1460 = vmatprep.subr.mxu0 0.0
        %1461 = vmatpush1.msra.mxu0 0.0
        %1462 = vmatprep.subr.mxu0 0.0
        %1463 = vmatpush1.msra.mxu0 %v1263
        %1464 = vmatprep.subr.mxu0 0.0
        %1465 = vmatpush2.msra.mxu0 0.0
        %1466 = vmatprep.subr.mxu0 0.0
        %1467 = vmatpush2.msra.mxu0 0.0
        %1468 = vmatprep.subr.mxu0 0.0
        %1469 = vmatpush2.msra.mxu0 0.0
        %1470 = vmatprep.subr.mxu0 0.0
        %1471 = vmatpush2.msra.mxu0 0.0
        %1472 = vmatprep.subr.mxu0 0.0
        %1473 = vmatpush2.msra.mxu0 0.0
        %1474 = vmatprep.subr.mxu0 0.0
        %1475 = vmatpush2.msra.mxu0 0.0
        %1476 = vmatprep.subr.mxu0 0.0
        %1477 = vmatpush2.msra.mxu0 0.0
        %1478 = vmatprep.subr.mxu0 0.0
        %1479 = vmatpush2.msra.mxu0 0.0
        %1480 = vmatprep.subr.mxu0 0.0
        %1481 = vmatpush2.msra.mxu0 0.0
        %1482 = vmatprep.subr.mxu0 0.0
        %1483 = vmatpush2.msra.mxu0 0.0
        %1484 = vmatprep.subr.mxu0 0.0
        %1485 = vmatpush2.msra.mxu0 0.0
        %1486 = vmatprep.subr.mxu0 0.0
        %1487 = vmatpush2.msra.mxu0 0.0
        %1488 = vmatprep.subr.mxu0 0.0
        %1489 = vmatpush2.msra.mxu0 0.0
        %1490 = vmatprep.subr.mxu0 0.0
        %1491 = vmatpush2.msra.mxu0 0.0
        %1492 = vmatprep.subr.mxu0 0.0
        %1493 = vmatpush2.msra.mxu0 0.0
        %1494 = vmatprep.subr.mxu0 0.0
        %1495 = vmatpush2.msra.mxu0 0.0
        %1496 = vmatprep.mubr.f32.mxu0 0.0
        %1497 = vmatmul.mubr.f32.gmra.mxu0 %v1430
        %v1498 = vpop.f32.mrf.mxu0
        %v1499 = vadd.f32 0.0, %v1498
        %v1500 = vpop.f32.mrf.mxu0
        %1501 = vdwg.mxu0
        %v1502 = vadd.f32 %v1260, %v1499
        %v1503 = vld [vmem:[#allocation13 + $0x18] sm:$0xff]
        %1504 = vrot.lane.b32.xlu0 %v619, 104
        %v1505 = vpop.permute.xlu0 %1504
        %1506 = vrot.lane.b32.xlu0 %v701, 104
        %v1507 = vpop.permute.xlu0 %1506
        %v1508 = vsel %vm789, %v1505, 0
        %v1510 = vsel %vm789, %v1507, 0
        %1512 = vmatprep.subr.mxu0 0.0
        %1513 = vmatpush1.xpose.msra.mxu0 0.0
        %1514 = vmatprep.subr.mxu0 0.0
        %1515 = vmatpush1.xpose.msra.mxu0 0.0
        %1516 = vmatprep.subr.mxu0 0.0
        %1517 = vmatpush1.xpose.msra.mxu0 0.0
        %1518 = vmatprep.subr.mxu0 0.0
        %1519 = vmatpush1.xpose.msra.mxu0 0.0
        %1520 = vmatprep.subr.mxu0 0.0
        %1521 = vmatpush1.xpose.msra.mxu0 0.0
        %1522 = vmatprep.subr.mxu0 0.0
        %1523 = vmatpush1.xpose.msra.mxu0 0.0
        %1524 = vmatprep.subr.mxu0 0.0
        %1525 = vmatpush1.xpose.msra.mxu0 0.0
        %1526 = vmatprep.subr.mxu0 0.0
        %1527 = vmatpush1.xpose.msra.mxu0 0.0
        %1528 = vmatprep.subr.mxu0 0.0
        %1529 = vmatpush1.xpose.msra.mxu0 0.0
        %1530 = vmatprep.subr.mxu0 0.0
        %1531 = vmatpush1.xpose.msra.mxu0 0.0
        %1532 = vmatprep.subr.mxu0 0.0
        %1533 = vmatpush1.xpose.msra.mxu0 0.0
        %1534 = vmatprep.subr.mxu0 0.0
        %1535 = vmatpush1.xpose.msra.mxu0 0.0
        %1536 = vmatprep.subr.mxu0 0.0
        %1537 = vmatpush1.xpose.msra.mxu0 0.0
        %1538 = vmatprep.subr.mxu0 0.0
        %1539 = vmatpush1.xpose.msra.mxu0 0.0
        %1540 = vmatprep.subr.mxu0 0.0
        %1541 = vmatpush1.xpose.msra.mxu0 0.0
        %1542 = vmatprep.subr.mxu0 0.0
        %1543 = vmatpush1.xpose.msra.mxu0 %v1510
        %1544 = vmatprep.subr.mxu0 0.0
        %1545 = vmatpush2.xpose.msra.mxu0 0.0
        %1546 = vmatprep.subr.mxu0 0.0
        %1547 = vmatpush2.xpose.msra.mxu0 0.0
        %1548 = vmatprep.subr.mxu0 0.0
        %1549 = vmatpush2.xpose.msra.mxu0 0.0
        %1550 = vmatprep.subr.mxu0 0.0
        %1551 = vmatpush2.xpose.msra.mxu0 0.0
        %1552 = vmatprep.subr.mxu0 0.0
        %1553 = vmatpush2.xpose.msra.mxu0 0.0
        %1554 = vmatprep.subr.mxu0 0.0
        %1555 = vmatpush2.xpose.msra.mxu0 0.0
        %1556 = vmatprep.subr.mxu0 0.0
        %1557 = vmatpush2.xpose.msra.mxu0 0.0
        %1558 = vmatprep.subr.mxu0 0.0
        %1559 = vmatpush2.xpose.msra.mxu0 0.0
        %1560 = vmatprep.subr.mxu0 0.0
        %1561 = vmatpush2.xpose.msra.mxu0 0.0
        %1562 = vmatprep.subr.mxu0 0.0
        %1563 = vmatpush2.xpose.msra.mxu0 0.0
        %1564 = vmatprep.subr.mxu0 0.0
        %1565 = vmatpush2.xpose.msra.mxu0 0.0
        %1566 = vmatprep.subr.mxu0 0.0
        %1567 = vmatpush2.xpose.msra.mxu0 0.0
        %1568 = vmatprep.subr.mxu0 0.0
        %1569 = vmatpush2.xpose.msra.mxu0 0.0
        %1570 = vmatprep.subr.mxu0 0.0
        %1571 = vmatpush2.xpose.msra.mxu0 0.0
        %1572 = vmatprep.subr.mxu0 0.0
        %1573 = vmatpush2.xpose.msra.mxu0 0.0
        %1574 = vmatprep.subr.mxu0 0.0
        %1575 = vmatpush2.xpose.msra.mxu0 0.0
        %1576 = vmatprep.mubr.f32.mxu0 0.0
        %1577 = vmatmul.mubr.f32.gmra.mxu0 %v1508
        %v1578 = vpop.f32.mrf.mxu0
        %v1579 = vadd.f32 0.0, %v1578
        %v1580 = vpop.f32.mrf.mxu0
        %1581 = vdwg.mxu0
        %v1582 = vsel %vm789, %v1579, -inf
        %1583 = vmax.xlane.f32.xlu0 %v1582
        %v1584 = vpop.xlane.xlu0 %1583
        %v1585 = vsub.f32 %v1579, %v1584
        %v1586 = vmul.f32 %v1585, 1.442695
        %v1587 = vpow.pop %v1586
        %v1588 = vsel %vm789, %v1587, 0.0
        %1589 = vadd.xlane.f32.xlu0 %v1588
        %v1590 = vpop.xlane.xlu0 %1589
        %1591 = vrot.lane.b32.xlu0 %v785, 104
        %v1592 = vpop.permute.xlu0 %1591
        %v1595 = vsel %vm789, %v1587, 0
        %1597 = vmatprep.subr.mxu0 0.0
        %1598 = vmatpush1.msra.mxu0 0.0
        %1599 = vmatprep.subr.mxu0 0.0
        %1600 = vmatpush1.msra.mxu0 0.0
        %1601 = vmatprep.subr.mxu0 0.0
        %1602 = vmatpush1.msra.mxu0 0.0
        %1603 = vmatprep.subr.mxu0 0.0
        %1604 = vmatpush1.msra.mxu0 0.0
        %1605 = vmatprep.subr.mxu0 0.0
        %1606 = vmatpush1.msra.mxu0 0.0
        %1607 = vmatprep.subr.mxu0 0.0
        %1608 = vmatpush1.msra.mxu0 0.0
        %1609 = vmatprep.subr.mxu0 0.0
        %1610 = vmatpush1.msra.mxu0 0.0
        %1611 = vmatprep.subr.mxu0 0.0
        %1612 = vmatpush1.msra.mxu0 0.0
        %1613 = vmatprep.subr.mxu0 0.0
        %1614 = vmatpush1.msra.mxu0 0.0
        %1615 = vmatprep.subr.mxu0 0.0
        %1616 = vmatpush1.msra.mxu0 0.0
        %1617 = vmatprep.subr.mxu0 0.0
        %1618 = vmatpush1.msra.mxu0 0.0
        %1619 = vmatprep.subr.mxu0 0.0
        %1620 = vmatpush1.msra.mxu0 0.0
        %1621 = vmatprep.subr.mxu0 0.0
        %1622 = vmatpush1.msra.mxu0 0.0
        %1623 = vmatprep.subr.mxu0 0.0
        %1624 = vmatpush1.msra.mxu0 0.0
        %1625 = vmatprep.subr.mxu0 0.0
        %1626 = vmatpush1.msra.mxu0 0.0
        %1627 = vmatprep.subr.mxu0 0.0
        %1628 = vmatpush1.msra.mxu0 %v1592
        %1629 = vmatprep.subr.mxu0 0.0
        %1630 = vmatpush2.msra.mxu0 0.0
        %1631 = vmatprep.subr.mxu0 0.0
        %1632 = vmatpush2.msra.mxu0 0.0
        %1633 = vmatprep.subr.mxu0 0.0
        %1634 = vmatpush2.msra.mxu0 0.0
        %1635 = vmatprep.subr.mxu0 0.0
        %1636 = vmatpush2.msra.mxu0 0.0
        %1637 = vmatprep.subr.mxu0 0.0
        %1638 = vmatpush2.msra.mxu0 0.0
        %1639 = vmatprep.subr.mxu0 0.0
        %1640 = vmatpush2.msra.mxu0 0.0
        %1641 = vmatprep.subr.mxu0 0.0
        %1642 = vmatpush2.msra.mxu0 0.0
        %1643 = vmatprep.subr.mxu0 0.0
        %1644 = vmatpush2.msra.mxu0 0.0
        %1645 = vmatprep.subr.mxu0 0.0
        %1646 = vmatpush2.msra.mxu0 0.0
        %1647 = vmatprep.subr.mxu0 0.0
        %1648 = vmatpush2.msra.mxu0 0.0
        %1649 = vmatprep.subr.mxu0 0.0
        %1650 = vmatpush2.msra.mxu0 0.0
        %1651 = vmatprep.subr.mxu0 0.0
        %1652 = vmatpush2.msra.mxu0 0.0
        %1653 = vmatprep.subr.mxu0 0.0
        %1654 = vmatpush2.msra.mxu0 0.0
        %1655 = vmatprep.subr.mxu0 0.0
        %1656 = vmatpush2.msra.mxu0 0.0
        %1657 = vmatprep.subr.mxu0 0.0
        %1658 = vmatpush2.msra.mxu0 0.0
        %1659 = vmatprep.subr.mxu0 0.0
        %1660 = vmatpush2.msra.mxu0 0.0
        %1661 = vmatprep.mubr.f32.mxu0 0.0
        %1662 = vmatmul.mubr.f32.gmra.mxu0 %v1595
        %v1663 = vpop.f32.mrf.mxu0
        %v1664 = vadd.f32 0.0, %v1663
        %v1665 = vpop.f32.mrf.mxu0
        %1666 = vdwg.mxu0
        %v1667 = vrcp.pop %v1590
        %v1668 = vmul.f32 %v1664, %v1667
        %v1670 = vsel %vm789, %v1668, 0
        %1672 = vmatprep.subr.mxu0 0.0
        %1673 = vmatpush1.msra.mxu0 0.0
        %1674 = vmatprep.subr.mxu0 0.0
        %1675 = vmatpush1.msra.mxu0 0.0
        %1676 = vmatprep.subr.mxu0 0.0
        %1677 = vmatpush1.msra.mxu0 0.0
        %1678 = vmatprep.subr.mxu0 0.0
        %1679 = vmatpush1.msra.mxu0 0.0
        %1680 = vmatprep.subr.mxu0 0.0
        %1681 = vmatpush1.msra.mxu0 0.0
        %1682 = vmatprep.subr.mxu0 0.0
        %1683 = vmatpush1.msra.mxu0 0.0
        %1684 = vmatprep.subr.mxu0 0.0
        %1685 = vmatpush1.msra.mxu0 0.0
        %1686 = vmatprep.subr.mxu0 0.0
        %1687 = vmatpush1.msra.mxu0 0.0
        %1688 = vmatprep.subr.mxu0 0.0
        %1689 = vmatpush1.msra.mxu0 0.0
        %1690 = vmatprep.subr.mxu0 0.0
        %1691 = vmatpush1.msra.mxu0 0.0
        %1692 = vmatprep.subr.mxu0 0.0
        %1693 = vmatpush1.msra.mxu0 0.0
        %1694 = vmatprep.subr.mxu0 0.0
        %1695 = vmatpush1.msra.mxu0 0.0
        %1696 = vmatprep.subr.mxu0 0.0
        %1697 = vmatpush1.msra.mxu0 0.0
        %1698 = vmatprep.subr.mxu0 0.0
        %1699 = vmatpush1.msra.mxu0 0.0
        %1700 = vmatprep.subr.mxu0 0.0
        %1701 = vmatpush1.msra.mxu0 0.0
        %1702 = vmatprep.subr.mxu0 0.0
        %1703 = vmatpush1.msra.mxu0 %v1503
        %1704 = vmatprep.subr.mxu0 0.0
        %1705 = vmatpush2.msra.mxu0 0.0
        %1706 = vmatprep.subr.mxu0 0.0
        %1707 = vmatpush2.msra.mxu0 0.0
        %1708 = vmatprep.subr.mxu0 0.0
        %1709 = vmatpush2.msra.mxu0 0.0
        %1710 = vmatprep.subr.mxu0 0.0
        %1711 = vmatpush2.msra.mxu0 0.0
        %1712 = vmatprep.subr.mxu0 0.0
        %1713 = vmatpush2.msra.mxu0 0.0
        %1714 = vmatprep.subr.mxu0 0.0
        %1715 = vmatpush2.msra.mxu0 0.0
        %1716 = vmatprep.subr.mxu0 0.0
        %1717 = vmatpush2.msra.mxu0 0.0
        %1718 = vmatprep.subr.mxu0 0.0
        %1719 = vmatpush2.msra.mxu0 0.0
        %1720 = vmatprep.subr.mxu0 0.0
        %1721 = vmatpush2.msra.mxu0 0.0
        %1722 = vmatprep.subr.mxu0 0.0
        %1723 = vmatpush2.msra.mxu0 0.0
        %1724 = vmatprep.subr.mxu0 0.0
        %1725 = vmatpush2.msra.mxu0 0.0
        %1726 = vmatprep.subr.mxu0 0.0
        %1727 = vmatpush2.msra.mxu0 0.0
        %1728 = vmatprep.subr.mxu0 0.0
        %1729 = vmatpush2.msra.mxu0 0.0
        %1730 = vmatprep.subr.mxu0 0.0
        %1731 = vmatpush2.msra.mxu0 0.0
        %1732 = vmatprep.subr.mxu0 0.0
        %1733 = vmatpush2.msra.mxu0 0.0
        %1734 = vmatprep.subr.mxu0 0.0
        %1735 = vmatpush2.msra.mxu0 0.0
        %1736 = vmatprep.mubr.f32.mxu0 0.0
        %1737 = vmatmul.mubr.f32.gmra.mxu0 %v1670
        %v1738 = vpop.f32.mrf.mxu0
        %v1739 = vadd.f32 0.0, %v1738
        %v1740 = vpop.f32.mrf.mxu0
        %1741 = vdwg.mxu0
        %v1742 = vadd.f32 %v1502, %v1739
        %v1743 = vld [vmem:[%s10] sm:$0x1]
        %v1745 = vlaneseq
        %v1746 = vshrl.u32 %v1745, 7
        %v1747 = vsub.s32 0, %v1746
        %v1748 = vrot.slane %v1743, %v1747
        %v1750 = vadd.f32 %v1742, %v1748
        %1751 = vst.msk [vmem:[%s530] sm:$0xff] %vm545, %v1750
        %s1752 = sand.u32 %s287, 1
        %s1753 = scalar_lea.sflag [#allocation4], %s1752
        %s1754 = sand.u32 %s287, 1
        %s1755 = smul.addr %s1754, 8
        %s1756 = scalar_lea.vmem [#allocation14], %s1755
        // Predicated region
        $region93: #{tpu_custom_call.1} parent=63 // pred_check
          %p1757 = pneg %p297
        $region94: #{tpu_custom_call.1} parent=63 // pred_check_branch
          %1759 = sbr.rel (%p1757) target = $region96
        $region95: #{tpu_custom_call.1} parent=63 // pred_region
          %s1761 = ssub.s32 128, 128
          %1762 = vsyncadd %s1753, %s1761
          %s1763 = smul.addr %s33, 128
          %s1764 = scalar_lea.hbm %s11, %s1763
          %s1766 = sshll.u32 %s1756, 4
          %s1767 = int_to_ptr.vmem [resolvable:$true] %s1766
          %1769 = dma.vmem_to_hbm [thread:$0]  %s1767, 128, %s1764, %s1753
        $region96: #{tpu_custom_call.1} parent=63 // pred_fallthru
          _
      $region64: #{tpu_custom_call.1} parent=5 // pred_fallthru
        _
      %p1770 = scmp.le.s32.totalorder 2, %s28
      // Predicated region
      $region97: #{tpu_custom_call.1} parent=5 // pred_check
        %p1771 = pneg %p1770
      $region98: #{tpu_custom_call.1} parent=5 // pred_check_branch
        %1773 = sbr.rel (%p1771) target = $region100
      $region99: #{tpu_custom_call.1} parent=5 // pred_region
        %s1774 = ssub.s32 %s28, 2
        // Predicated region
        $region101: #{tpu_custom_call.1} parent=99 // pred_check
          %p1775 = pneg %p303
        $region102: #{tpu_custom_call.1} parent=99 // pred_check_branch
          %1777 = sbr.rel (%p1775) target = $region104
        $region103: #{tpu_custom_call.1} parent=99 // pred_region
          %s1778 = sand.u32 %s288, 1
          %s1779 = scalar_lea.sflag [#allocation4], %s1778
          %s1780 = sand.u32 %s288, 1
          %s1781 = smul.addr %s1780, 8
          %s1782 = scalar_lea.vmem [#allocation14], %s1781
          %1783 = dma.done %s1779, 128
        $region104: #{tpu_custom_call.1} parent=99 // pred_fallthru
          _
      $region100: #{tpu_custom_call.1} parent=5 // pred_fallthru
        _
    $region6: #{tpu_custom_call.1} parent=1 // loop_footer
      %s32 = sadd.s32 1, %s28
    $region7: #{tpu_custom_call.1} parent=1 // loop_footer_branch
      %27 = sbr.rel target = $region3
    $region8: #{tpu_custom_call.1} parent=1 // loop_exit
      _
    %1784 = vsyncpa [#allocation3], 1
    %s1785 = scalar_lea.sflag [#allocation3], 1
    %1786 = vsyncpa %s1785, 1
    %1787 = vsyncpa [#allocation6], 1
    %s1788 = scalar_lea.sflag [#allocation6], 1
    %1789 = vsyncpa %s1788, 1
    %1790 = vsyncpa [#allocation9], 1
    %1791 = vsyncpa [#allocation12], 1
    %1792 = vsyncpa [#allocation4], 1
    %s1793 = scalar_lea.sflag [#allocation4], 1
    %1794 = vsyncpa %s1793, 1

</llo_original>
